<compile_context>
chip_gen: v5e
topology: v5e:2x2
jax: 0.10.0
libtpu: 0.0.40
codegen_flags: <defaults>
</compile_context>

<pallas_src>
import jax
import jax.numpy as jnp
from jax import lax
from jax.experimental import pallas as pl
from jax.experimental.pallas import tpu as pltpu


_SQRT_2_OVER_PI = 0.7978845608028654


def _gelu(x):
    # tanh-approximate GELU (== jax.nn.gelu(approximate=True)).
    # TODO(synk): PyTorch nn.GELU() defaults to the exact erf form; the tanh
    # approximation (diff <~1e-3) is used for robust Mosaic lowering.
    return 0.5 * x * (1.0 + jnp.tanh(_SQRT_2_OVER_PI * (x + 0.044715 * (x * x * x))))


def _make_kernel(scale, eps):
    inv_scale = 1.0 / float(scale)
    eps = float(eps)

    def kernel(hV_ref, hE_ref, ma_ref, mv_ref,
               g1v_ref, b1v_ref, g1e_ref, b1e_ref,
               w1v_ref, w1e_ref, b1_ref,
               w2_ref, b2_ref, w3_ref, b3_ref,
               g2_ref, b2ln_ref,
               wi_ref, bi_ref, wo_ref, bo_ref,
               out_ref):
        hV = hV_ref[...]                                  # (tm, H)
        tm, H = hV.shape
        K = ma_ref.shape[1]
        HE = hE_ref.shape[1] // K
        inv_d = 1.0 / float(H + HE)

        ma = ma_ref[...]                                  # (tm, K)
        g1v = g1v_ref[...]; b1v = b1v_ref[...]            # (1, H)
        g1e = g1e_ref[...]; b1e = b1e_ref[...]            # (1, HE)
        w1v = w1v_ref[...]; w1e = w1e_ref[...]            # (H, H), (HE, H)
        b1 = b1_ref[...]
        w2 = w2_ref[...]; b2 = b2_ref[...]
        w3 = w3_ref[...]; b3 = b3_ref[...]

        # node-half LayerNorm statistics are reused for every neighbor k
        s_v = jnp.sum(hV, axis=-1, keepdims=True)         # (tm, 1)
        sq_v = jnp.sum(hV * hV, axis=-1, keepdims=True)   # (tm, 1)

        acc = jnp.zeros((tm, H), jnp.float32)
        for k in range(K):                                # K is small & static
            hEk = hE_ref[:, k * HE:(k + 1) * HE]          # (tm, HE) lane tile
            s_e = jnp.sum(hEk, axis=-1, keepdims=True)
            sq_e = jnp.sum(hEk * hEk, axis=-1, keepdims=True)
            mean = (s_v + s_e) * inv_d
            var = jnp.maximum((sq_v + sq_e) * inv_d - mean * mean, 0.0)
            inv = lax.rsqrt(var + eps)
            # LayerNorm1 of concat([h_V, h_E_k]) applied half-by-half
            xv = (hV - mean) * inv * g1v + b1v            # (tm, H)
            xe = (hEk - mean) * inv * g1e + b1e           # (tm, HE)
            # W1 on the (virtual) concat == split matmul; no concatenate
            m = (jnp.dot(xv, w1v, preferred_element_type=jnp.float32)
                 + jnp.dot(xe, w1e, preferred_element_type=jnp.float32) + b1)
            m = _gelu(m)
            m = _gelu(jnp.dot(m, w2, preferred_element_type=jnp.float32) + b2)
            m = jnp.dot(m, w3, preferred_element_type=jnp.float32) + b3
            acc = acc + ma[:, k:k + 1] * m                # mask_attend gate

        # TODO(synk): nn.Dropout is treated as identity (inference mode).
        h_v2 = hV + acc * inv_scale                       # residual

        # LayerNorm2 + position-wise FFN + residual + node mask
        mean2 = jnp.mean(h_v2, axis=-1, keepdims=True)
        cen = h_v2 - mean2
        var2 = jnp.mean(cen * cen, axis=-1, keepdims=True)
        d = cen * lax.rsqrt(var2 + eps) * g2_ref[...] + b2ln_ref[...]
        ffh = _gelu(jnp.dot(d, wi_ref[...], preferred_element_type=jnp.float32)
                    + bi_ref[...])
        ffh = jnp.dot(ffh, wo_ref[...], preferred_element_type=jnp.float32) + bo_ref[...]
        out_ref[...] = (h_v2 + ffh) * mv_ref[...]

    return kernel


def mpnn_layer_forward(h_V, h_E, params, mask_V=None, mask_attend=None, *,
                       scale=30.0, eps=1e-5, tm_cap=512):
    """h_V: (B, L, H); h_E: (B, L, K, Hin); mask_V: (B, L); mask_attend: (B, L, K)."""
    B, L, H = h_V.shape
    _, _, K, HE = h_E.shape
    N = B * L

    f32 = lambda a: jnp.asarray(a, jnp.float32)

    hV2d = f32(h_V).reshape(N, H)
    hE2d = f32(h_E).reshape(N, K * HE)                    # lane-dense slab, reshape only
    ma = (jnp.ones((N, K), jnp.float32) if mask_attend is None
          else f32(mask_attend).reshape(N, K))
    mv = (jnp.ones((N, 1), jnp.float32) if mask_V is None
          else f32(mask_V).reshape(N, 1))

    # Large row tiles: per-grid-step overhead dominates at small tiles, so take
    # the biggest tile that fits scoped VMEM; small inputs -> single grid step.
    n8 = -(-N // 8) * 8
    tm = min(tm_cap, n8)
    n_pad = -(-N // tm) * tm
    if n_pad != N:
        padr = (0, n_pad - N)
        hV2d = jnp.pad(hV2d, (padr, (0, 0)))
        hE2d = jnp.pad(hE2d, (padr, (0, 0)))
        ma = jnp.pad(ma, (padr, (0, 0)))
        mv = jnp.pad(mv, (padr, (0, 0)))

    w1 = f32(params["w1"])
    g1 = f32(params["ln1_g"]); b1n = f32(params["ln1_b"])
    p_list = [
        g1[:H].reshape(1, H), b1n[:H].reshape(1, H),       # LN1 node half
        g1[H:].reshape(1, HE), b1n[H:].reshape(1, HE),     # LN1 edge half
        w1[:, :H].T, w1[:, H:].T, f32(params["b1"]).reshape(1, H),
        f32(params["w2"]).T, f32(params["b2"]).reshape(1, H),
        f32(params["w3"]).T, f32(params["b3"]).reshape(1, H),
        f32(params["ln2_g"]).reshape(1, H), f32(params["ln2_b"]).reshape(1, H),
        f32(params["win"]).T, f32(params["bin"]).reshape(1, -1),
        f32(params["wout"]).T, f32(params["bout"]).reshape(1, H),
    ]

    in_specs = [
        pl.BlockSpec((tm, H), lambda i: (i, 0)),           # h_V
        pl.BlockSpec((tm, K * HE), lambda i: (i, 0)),      # h_E (flattened)
        pl.BlockSpec((tm, K), lambda i: (i, 0)),           # mask_attend
        pl.BlockSpec((tm, 1), lambda i: (i, 0)),           # mask_V
    ] + [pl.BlockSpec(p.shape, lambda i: (0, 0)) for p in p_list]  # resident params

    out = pl.pallas_call(
        _make_kernel(scale, eps),
        out_shape=jax.ShapeDtypeStruct((n_pad, H), jnp.float32),
        grid=(n_pad // tm,),
        in_specs=in_specs,
        out_specs=pl.BlockSpec((tm, H), lambda i: (i, 0)),
        compiler_params=pltpu.CompilerParams(
            dimension_semantics=("parallel",),
            vmem_limit_bytes=32 * 1024 * 1024),
    )(hV2d, hE2d, ma, mv, *p_list)

    return out[:N].reshape(B, L, H).astype(h_V.dtype)


def mpnn_ref(h_V, h_E, mask_V, mask_attend, p, scale, eps=1e-5):
    """Pure-JAX reference of MPNNLayer.forward (eval mode)."""
    def ln(x, g, b):
        mu = jnp.mean(x, -1, keepdims=True)
        var = jnp.mean((x - mu) ** 2, -1, keepdims=True)
        return (x - mu) * lax.rsqrt(var + eps) * g + b

    H = h_V.shape[-1]
    hVe = jnp.broadcast_to(h_V[..., None, :], h_E.shape[:-1] + (H,))
    h_EV = jnp.concatenate([hVe, h_E], -1)
    x = ln(h_EV, p["ln1_g"], p["ln1_b"])
    m = _gelu(x @ p["w1"].T + p["b1"])
    m = _gelu(m @ p["w2"].T + p["b2"])
    m = m @ p["w3"].T + p["b3"]
    if mask_attend is not None:
        m = mask_attend[..., None] * m
    h_v2 = h_V + jnp.sum(m, -2) / scale
    d = ln(h_v2, p["ln2_g"], p["ln2_b"])
    ffn = _gelu(d @ p["win"].T + p["bin"]) @ p["wout"].T + p["bout"]
    out = h_v2 + ffn
    if mask_V is not None:
        out = mask_V[..., None] * out
    return out


if __name__ == "__main__":
    key = jax.random.PRNGKey(0)
    B, L, K = 2, 16, 8
    H, HE = 128, 128          # num_hidden, num_in
    scale = 30.0

    ks = jax.random.split(key, 13)

    def lin(k, out_f, in_f):
        kw, kb = jax.random.split(k)
        w = jax.random.normal(kw, (out_f, in_f), jnp.float32) / jnp.sqrt(float(in_f))
        b = 0.02 * jax.random.normal(kb, (out_f,), jnp.float32)
        return w, b

    w1, b1 = lin(ks[0], H, H + HE)
    w2, b2 = lin(ks[1], H, H)
    w3, b3 = lin(ks[2], H, H)
    win, bin_ = lin(ks[3], 4 * H, H)
    wout, bout = lin(ks[4], H, 4 * H)
    params = dict(
        ln1_g=1.0 + 0.05 * jax.random.normal(ks[5], (H + HE,), jnp.float32),
        ln1_b=0.05 * jax.random.normal(ks[6], (H + HE,), jnp.float32),
        ln2_g=1.0 + 0.05 * jax.random.normal(ks[7], (H,), jnp.float32),
        ln2_b=0.05 * jax.random.normal(ks[8], (H,), jnp.float32),
        w1=w1, b1=b1, w2=w2, b2=b2, w3=w3, b3=b3,
        win=win, bin=bin_, wout=wout, bout=bout,
    )

    h_V = jax.random.normal(ks[9], (B, L, H), jnp.float32)
    h_E = jax.random.normal(ks[10], (B, L, K, HE), jnp.float32)
    mask_V = (jax.random.uniform(ks[11], (B, L)) > 0.15).astype(jnp.float32)
    mask_attend = (jax.random.uniform(ks[12], (B, L, K)) > 0.25).astype(jnp.float32)

    out = mpnn_layer_forward(h_V, h_E, params, mask_V=mask_V,
                             mask_attend=mask_attend, scale=scale)
    out = jax.block_until_ready(out)

    with jax.default_matmul_precision("highest"):
        ref = jax.block_until_ready(
            mpnn_ref(h_V, h_E, mask_V, mask_attend, params, scale))

    assert out.shape == (B, L, H)
    assert out.dtype == jnp.float32
    err = float(jnp.max(jnp.abs(out - ref)))
    assert jnp.allclose(out, ref, atol=2e-3, rtol=2e-3), f"max abs err {err}"

    print("KERNEL_OK")
</pallas_src>

<mosaic_0001>
module attributes {stable_mosaic.version = 11 : i64} {
  func.func @kernel(%arg0: i32, %arg1: memref<32x128xf32, #tpu.memory_space<vmem>>, %arg2: memref<32x1024xf32, #tpu.memory_space<vmem>>, %arg3: memref<32x8xf32, #tpu.memory_space<vmem>>, %arg4: memref<32x1xf32, #tpu.memory_space<vmem>>, %arg5: memref<1x128xf32, #tpu.memory_space<vmem>>, %arg6: memref<1x128xf32, #tpu.memory_space<vmem>>, %arg7: memref<1x128xf32, #tpu.memory_space<vmem>>, %arg8: memref<1x128xf32, #tpu.memory_space<vmem>>, %arg9: memref<128x128xf32, #tpu.memory_space<vmem>>, %arg10: memref<128x128xf32, #tpu.memory_space<vmem>>, %arg11: memref<1x128xf32, #tpu.memory_space<vmem>>, %arg12: memref<128x128xf32, #tpu.memory_space<vmem>>, %arg13: memref<1x128xf32, #tpu.memory_space<vmem>>, %arg14: memref<128x128xf32, #tpu.memory_space<vmem>>, %arg15: memref<1x128xf32, #tpu.memory_space<vmem>>, %arg16: memref<1x128xf32, #tpu.memory_space<vmem>>, %arg17: memref<1x128xf32, #tpu.memory_space<vmem>>, %arg18: memref<128x512xf32, #tpu.memory_space<vmem>>, %arg19: memref<1x512xf32, #tpu.memory_space<vmem>>, %arg20: memref<512x128xf32, #tpu.memory_space<vmem>>, %arg21: memref<1x128xf32, #tpu.memory_space<vmem>>, %arg22: memref<32x128xf32, #tpu.memory_space<vmem>>) attributes {dimension_semantics = [#tpu.dimension_semantics<parallel>], iteration_bounds = array<i64: 1>, scalar_prefetch = 0 : i64, scratch_operands = 0 : i64, tpu.core_type = #tpu.core_type<tc>, window_params = [{transform_indices = @transform_0, window_bounds = array<i64: 32, 128>}, {transform_indices = @transform_1, window_bounds = array<i64: 32, 1024>}, {transform_indices = @transform_2, window_bounds = array<i64: 32, 8>}, {transform_indices = @transform_3, window_bounds = array<i64: 32, 1>}, {pipeline_mode = #tpu.pipeline_mode<synchronous>, transform_indices = @transform_4, window_bounds = array<i64: 1, 128>}, {pipeline_mode = #tpu.pipeline_mode<synchronous>, transform_indices = @transform_5, window_bounds = array<i64: 1, 128>}, {pipeline_mode = #tpu.pipeline_mode<synchronous>, transform_indices = @transform_6, window_bounds = array<i64: 1, 128>}, {pipeline_mode = #tpu.pipeline_mode<synchronous>, transform_indices = @transform_7, window_bounds = array<i64: 1, 128>}, {pipeline_mode = #tpu.pipeline_mode<synchronous>, transform_indices = @transform_8, window_bounds = array<i64: 128, 128>}, {pipeline_mode = #tpu.pipeline_mode<synchronous>, transform_indices = @transform_9, window_bounds = array<i64: 128, 128>}, {pipeline_mode = #tpu.pipeline_mode<synchronous>, transform_indices = @transform_10, window_bounds = array<i64: 1, 128>}, {pipeline_mode = #tpu.pipeline_mode<synchronous>, transform_indices = @transform_11, window_bounds = array<i64: 128, 128>}, {pipeline_mode = #tpu.pipeline_mode<synchronous>, transform_indices = @transform_12, window_bounds = array<i64: 1, 128>}, {pipeline_mode = #tpu.pipeline_mode<synchronous>, transform_indices = @transform_13, window_bounds = array<i64: 128, 128>}, {pipeline_mode = #tpu.pipeline_mode<synchronous>, transform_indices = @transform_14, window_bounds = array<i64: 1, 128>}, {pipeline_mode = #tpu.pipeline_mode<synchronous>, transform_indices = @transform_15, window_bounds = array<i64: 1, 128>}, {pipeline_mode = #tpu.pipeline_mode<synchronous>, transform_indices = @transform_16, window_bounds = array<i64: 1, 128>}, {pipeline_mode = #tpu.pipeline_mode<synchronous>, transform_indices = @transform_17, window_bounds = array<i64: 128, 512>}, {pipeline_mode = #tpu.pipeline_mode<synchronous>, transform_indices = @transform_18, window_bounds = array<i64: 1, 512>}, {pipeline_mode = #tpu.pipeline_mode<synchronous>, transform_indices = @transform_19, window_bounds = array<i64: 512, 128>}, {pipeline_mode = #tpu.pipeline_mode<synchronous>, transform_indices = @transform_20, window_bounds = array<i64: 1, 128>}, {transform_indices = @transform_21, window_bounds = array<i64: 32, 128>}]} {
    %c0 = arith.constant 0 : index
    %c0_0 = arith.constant 0 : index
    %0 = vector.load %arg1[%c0, %c0_0] : memref<32x128xf32, #tpu.memory_space<vmem>>, vector<32x128xf32>
    %c0_1 = arith.constant 0 : index
    %c0_2 = arith.constant 0 : index
    %1 = vector.load %arg3[%c0_1, %c0_2] : memref<32x8xf32, #tpu.memory_space<vmem>>, vector<32x8xf32>
    %c0_3 = arith.constant 0 : index
    %c0_4 = arith.constant 0 : index
    %2 = vector.load %arg5[%c0_3, %c0_4] : memref<1x128xf32, #tpu.memory_space<vmem>>, vector<1x128xf32>
    %c0_5 = arith.constant 0 : index
    %c0_6 = arith.constant 0 : index
    %3 = vector.load %arg6[%c0_5, %c0_6] : memref<1x128xf32, #tpu.memory_space<vmem>>, vector<1x128xf32>
    %c0_7 = arith.constant 0 : index
    %c0_8 = arith.constant 0 : index
    %4 = vector.load %arg7[%c0_7, %c0_8] : memref<1x128xf32, #tpu.memory_space<vmem>>, vector<1x128xf32>
    %c0_9 = arith.constant 0 : index
    %c0_10 = arith.constant 0 : index
    %5 = vector.load %arg8[%c0_9, %c0_10] : memref<1x128xf32, #tpu.memory_space<vmem>>, vector<1x128xf32>
    %c0_11 = arith.constant 0 : index
    %c0_12 = arith.constant 0 : index
    %6 = vector.load %arg9[%c0_11, %c0_12] : memref<128x128xf32, #tpu.memory_space<vmem>>, vector<128x128xf32>
    %c0_13 = arith.constant 0 : index
    %c0_14 = arith.constant 0 : index
    %7 = vector.load %arg10[%c0_13, %c0_14] : memref<128x128xf32, #tpu.memory_space<vmem>>, vector<128x128xf32>
    %c0_15 = arith.constant 0 : index
    %c0_16 = arith.constant 0 : index
    %8 = vector.load %arg11[%c0_15, %c0_16] : memref<1x128xf32, #tpu.memory_space<vmem>>, vector<1x128xf32>
    %c0_17 = arith.constant 0 : index
    %c0_18 = arith.constant 0 : index
    %9 = vector.load %arg12[%c0_17, %c0_18] : memref<128x128xf32, #tpu.memory_space<vmem>>, vector<128x128xf32>
    %c0_19 = arith.constant 0 : index
    %c0_20 = arith.constant 0 : index
    %10 = vector.load %arg13[%c0_19, %c0_20] : memref<1x128xf32, #tpu.memory_space<vmem>>, vector<1x128xf32>
    %c0_21 = arith.constant 0 : index
    %c0_22 = arith.constant 0 : index
    %11 = vector.load %arg14[%c0_21, %c0_22] : memref<128x128xf32, #tpu.memory_space<vmem>>, vector<128x128xf32>
    %c0_23 = arith.constant 0 : index
    %c0_24 = arith.constant 0 : index
    %12 = vector.load %arg15[%c0_23, %c0_24] : memref<1x128xf32, #tpu.memory_space<vmem>>, vector<1x128xf32>
    %cst = arith.constant dense<0.000000e+00> : vector<32xf32>
    %13 = vector.multi_reduction <add>, %0, %cst [1] : vector<32x128xf32> to vector<32xf32>
    %14 = vector.shape_cast %13 : vector<32xf32> to vector<32x1xf32>
    %15 = arith.mulf %0, %0 : vector<32x128xf32>
    %cst_25 = arith.constant dense<0.000000e+00> : vector<32xf32>
    %16 = vector.multi_reduction <add>, %15, %cst_25 [1] : vector<32x128xf32> to vector<32xf32>
    %17 = vector.shape_cast %16 : vector<32xf32> to vector<32x1xf32>
    %cst_26 = arith.constant 0.000000e+00 : f32
    %18 = vector.broadcast %cst_26 : f32 to vector<32x128xf32>
    %c0_27 = arith.constant 0 : index
    %c0_28 = arith.constant 0 : index
    %19 = vector.load %arg2[%c0_27, %c0_28] : memref<32x1024xf32, #tpu.memory_space<vmem>>, vector<32x128xf32>
    %cst_29 = arith.constant dense<0.000000e+00> : vector<32xf32>
    %20 = vector.multi_reduction <add>, %19, %cst_29 [1] : vector<32x128xf32> to vector<32xf32>
    %21 = vector.shape_cast %20 : vector<32xf32> to vector<32x1xf32>
    %22 = arith.mulf %19, %19 : vector<32x128xf32>
    %cst_30 = arith.constant dense<0.000000e+00> : vector<32xf32>
    %23 = vector.multi_reduction <add>, %22, %cst_30 [1] : vector<32x128xf32> to vector<32xf32>
    %24 = vector.shape_cast %23 : vector<32xf32> to vector<32x1xf32>
    %25 = arith.addf %14, %21 : vector<32x1xf32>
    %cst_31 = arith.constant 3.906250e-03 : f32
    %26 = vector.broadcast %cst_31 : f32 to vector<32x1xf32>
    %27 = arith.mulf %25, %26 : vector<32x1xf32>
    %28 = arith.addf %17, %24 : vector<32x1xf32>
    %cst_32 = arith.constant 3.906250e-03 : f32
    %29 = vector.broadcast %cst_32 : f32 to vector<32x1xf32>
    %30 = arith.mulf %28, %29 : vector<32x1xf32>
    %31 = arith.mulf %27, %27 : vector<32x1xf32>
    %32 = arith.subf %30, %31 : vector<32x1xf32>
    %cst_33 = arith.constant 0.000000e+00 : f32
    %33 = vector.broadcast %cst_33 : f32 to vector<32x1xf32>
    %34 = arith.maximumf %32, %33 : vector<32x1xf32>
    %cst_34 = arith.constant 9.99999974E-6 : f32
    %35 = vector.broadcast %cst_34 : f32 to vector<32x1xf32>
    %36 = arith.addf %34, %35 : vector<32x1xf32>
    %37 = math.rsqrt %36 : vector<32x1xf32>
    %38 = vector.broadcast %27 : vector<32x1xf32> to vector<32x128xf32>
    %39 = arith.subf %0, %38 : vector<32x128xf32>
    %40 = vector.broadcast %37 : vector<32x1xf32> to vector<32x128xf32>
    %41 = arith.mulf %39, %40 : vector<32x128xf32>
    %42 = vector.broadcast %2 : vector<1x128xf32> to vector<32x128xf32>
    %43 = arith.mulf %41, %42 : vector<32x128xf32>
    %44 = vector.broadcast %3 : vector<1x128xf32> to vector<32x128xf32>
    %45 = arith.addf %43, %44 : vector<32x128xf32>
    %46 = vector.broadcast %27 : vector<32x1xf32> to vector<32x128xf32>
    %47 = arith.subf %19, %46 : vector<32x128xf32>
    %48 = vector.broadcast %37 : vector<32x1xf32> to vector<32x128xf32>
    %49 = arith.mulf %47, %48 : vector<32x128xf32>
    %50 = vector.broadcast %4 : vector<1x128xf32> to vector<32x128xf32>
    %51 = arith.mulf %49, %50 : vector<32x128xf32>
    %52 = vector.broadcast %5 : vector<1x128xf32> to vector<32x128xf32>
    %53 = arith.addf %51, %52 : vector<32x128xf32>
    %cst_35 = arith.constant dense<0.000000e+00> : vector<32x128xf32>
    %54 = tpu.matmul %45, %6, %cst_35 {dimension_numbers = #tpu.dot_dimension_numbers<[1], [0], [0], [1], [0, 0, 1, 1], [], []>} : vector<32x128xf32>, vector<128x128xf32>, vector<32x128xf32> -> vector<32x128xf32>
    %cst_36 = arith.constant dense<0.000000e+00> : vector<32x128xf32>
    %55 = tpu.matmul %53, %7, %cst_36 {dimension_numbers = #tpu.dot_dimension_numbers<[1], [0], [0], [1], [0, 0, 1, 1], [], []>} : vector<32x128xf32>, vector<128x128xf32>, vector<32x128xf32> -> vector<32x128xf32>
    %56 = arith.addf %54, %55 : vector<32x128xf32>
    %57 = vector.broadcast %8 : vector<1x128xf32> to vector<32x128xf32>
    %58 = arith.addf %56, %57 : vector<32x128xf32>
    %cst_37 = arith.constant 5.000000e-01 : f32
    %59 = vector.broadcast %cst_37 : f32 to vector<32x128xf32>
    %60 = arith.mulf %59, %58 : vector<32x128xf32>
    %61 = arith.mulf %58, %58 : vector<32x128xf32>
    %62 = arith.mulf %61, %58 : vector<32x128xf32>
    %cst_38 = arith.constant 4.471500e-02 : f32
    %63 = vector.broadcast %cst_38 : f32 to vector<32x128xf32>
    %64 = arith.mulf %63, %62 : vector<32x128xf32>
    %65 = arith.addf %58, %64 : vector<32x128xf32>
    %cst_39 = arith.constant 0.797884583 : f32
    %66 = vector.broadcast %cst_39 : f32 to vector<32x128xf32>
    %67 = arith.mulf %66, %65 : vector<32x128xf32>
    %68 = math.tanh %67 : vector<32x128xf32>
    %cst_40 = arith.constant 1.000000e+00 : f32
    %69 = vector.broadcast %cst_40 : f32 to vector<32x128xf32>
    %70 = arith.addf %69, %68 : vector<32x128xf32>
    %71 = arith.mulf %60, %70 : vector<32x128xf32>
    %cst_41 = arith.constant dense<0.000000e+00> : vector<32x128xf32>
    %72 = tpu.matmul %71, %9, %cst_41 {dimension_numbers = #tpu.dot_dimension_numbers<[1], [0], [0], [1], [0, 0, 1, 1], [], []>} : vector<32x128xf32>, vector<128x128xf32>, vector<32x128xf32> -> vector<32x128xf32>
    %73 = vector.broadcast %10 : vector<1x128xf32> to vector<32x128xf32>
    %74 = arith.addf %72, %73 : vector<32x128xf32>
    %cst_42 = arith.constant 5.000000e-01 : f32
    %75 = vector.broadcast %cst_42 : f32 to vector<32x128xf32>
    %76 = arith.mulf %75, %74 : vector<32x128xf32>
    %77 = arith.mulf %74, %74 : vector<32x128xf32>
    %78 = arith.mulf %77, %74 : vector<32x128xf32>
    %cst_43 = arith.constant 4.471500e-02 : f32
    %79 = vector.broadcast %cst_43 : f32 to vector<32x128xf32>
    %80 = arith.mulf %79, %78 : vector<32x128xf32>
    %81 = arith.addf %74, %80 : vector<32x128xf32>
    %cst_44 = arith.constant 0.797884583 : f32
    %82 = vector.broadcast %cst_44 : f32 to vector<32x128xf32>
    %83 = arith.mulf %82, %81 : vector<32x128xf32>
    %84 = math.tanh %83 : vector<32x128xf32>
    %cst_45 = arith.constant 1.000000e+00 : f32
    %85 = vector.broadcast %cst_45 : f32 to vector<32x128xf32>
    %86 = arith.addf %85, %84 : vector<32x128xf32>
    %87 = arith.mulf %76, %86 : vector<32x128xf32>
    %cst_46 = arith.constant dense<0.000000e+00> : vector<32x128xf32>
    %88 = tpu.matmul %87, %11, %cst_46 {dimension_numbers = #tpu.dot_dimension_numbers<[1], [0], [0], [1], [0, 0, 1, 1], [], []>} : vector<32x128xf32>, vector<128x128xf32>, vector<32x128xf32> -> vector<32x128xf32>
    %89 = vector.broadcast %12 : vector<1x128xf32> to vector<32x128xf32>
    %90 = arith.addf %88, %89 : vector<32x128xf32>
    %91 = vector.extract_strided_slice %1 {offsets = [0, 0], sizes = [32, 1], strides = [1, 1]} : vector<32x8xf32> to vector<32x1xf32>
    %92 = vector.broadcast %91 : vector<32x1xf32> to vector<32x128xf32>
    %93 = arith.mulf %92, %90 : vector<32x128xf32>
    %94 = arith.addf %18, %93 : vector<32x128xf32>
    %c0_47 = arith.constant 0 : index
    %c128 = arith.constant 128 : index
    %95 = vector.load %arg2[%c0_47, %c128] : memref<32x1024xf32, #tpu.memory_space<vmem>>, vector<32x128xf32>
    %cst_48 = arith.constant dense<0.000000e+00> : vector<32xf32>
    %96 = vector.multi_reduction <add>, %95, %cst_48 [1] : vector<32x128xf32> to vector<32xf32>
    %97 = vector.shape_cast %96 : vector<32xf32> to vector<32x1xf32>
    %98 = arith.mulf %95, %95 : vector<32x128xf32>
    %cst_49 = arith.constant dense<0.000000e+00> : vector<32xf32>
    %99 = vector.multi_reduction <add>, %98, %cst_49 [1] : vector<32x128xf32> to vector<32xf32>
    %100 = vector.shape_cast %99 : vector<32xf32> to vector<32x1xf32>
    %101 = arith.addf %14, %97 : vector<32x1xf32>
    %cst_50 = arith.constant 3.906250e-03 : f32
    %102 = vector.broadcast %cst_50 : f32 to vector<32x1xf32>
    %103 = arith.mulf %101, %102 : vector<32x1xf32>
    %104 = arith.addf %17, %100 : vector<32x1xf32>
    %cst_51 = arith.constant 3.906250e-03 : f32
    %105 = vector.broadcast %cst_51 : f32 to vector<32x1xf32>
    %106 = arith.mulf %104, %105 : vector<32x1xf32>
    %107 = arith.mulf %103, %103 : vector<32x1xf32>
    %108 = arith.subf %106, %107 : vector<32x1xf32>
    %cst_52 = arith.constant 0.000000e+00 : f32
    %109 = vector.broadcast %cst_52 : f32 to vector<32x1xf32>
    %110 = arith.maximumf %108, %109 : vector<32x1xf32>
    %cst_53 = arith.constant 9.99999974E-6 : f32
    %111 = vector.broadcast %cst_53 : f32 to vector<32x1xf32>
    %112 = arith.addf %110, %111 : vector<32x1xf32>
    %113 = math.rsqrt %112 : vector<32x1xf32>
    %114 = vector.broadcast %103 : vector<32x1xf32> to vector<32x128xf32>
    %115 = arith.subf %0, %114 : vector<32x128xf32>
    %116 = vector.broadcast %113 : vector<32x1xf32> to vector<32x128xf32>
    %117 = arith.mulf %115, %116 : vector<32x128xf32>
    %118 = vector.broadcast %2 : vector<1x128xf32> to vector<32x128xf32>
    %119 = arith.mulf %117, %118 : vector<32x128xf32>
    %120 = vector.broadcast %3 : vector<1x128xf32> to vector<32x128xf32>
    %121 = arith.addf %119, %120 : vector<32x128xf32>
    %122 = vector.broadcast %103 : vector<32x1xf32> to vector<32x128xf32>
    %123 = arith.subf %95, %122 : vector<32x128xf32>
    %124 = vector.broadcast %113 : vector<32x1xf32> to vector<32x128xf32>
    %125 = arith.mulf %123, %124 : vector<32x128xf32>
    %126 = vector.broadcast %4 : vector<1x128xf32> to vector<32x128xf32>
    %127 = arith.mulf %125, %126 : vector<32x128xf32>
    %128 = vector.broadcast %5 : vector<1x128xf32> to vector<32x128xf32>
    %129 = arith.addf %127, %128 : vector<32x128xf32>
    %cst_54 = arith.constant dense<0.000000e+00> : vector<32x128xf32>
    %130 = tpu.matmul %121, %6, %cst_54 {dimension_numbers = #tpu.dot_dimension_numbers<[1], [0], [0], [1], [0, 0, 1, 1], [], []>} : vector<32x128xf32>, vector<128x128xf32>, vector<32x128xf32> -> vector<32x128xf32>
    %cst_55 = arith.constant dense<0.000000e+00> : vector<32x128xf32>
    %131 = tpu.matmul %129, %7, %cst_55 {dimension_numbers = #tpu.dot_dimension_numbers<[1], [0], [0], [1], [0, 0, 1, 1], [], []>} : vector<32x128xf32>, vector<128x128xf32>, vector<32x128xf32> -> vector<32x128xf32>
    %132 = arith.addf %130, %131 : vector<32x128xf32>
    %133 = vector.broadcast %8 : vector<1x128xf32> to vector<32x128xf32>
    %134 = arith.addf %132, %133 : vector<32x128xf32>
    %cst_56 = arith.constant 5.000000e-01 : f32
    %135 = vector.broadcast %cst_56 : f32 to vector<32x128xf32>
    %136 = arith.mulf %135, %134 : vector<32x128xf32>
    %137 = arith.mulf %134, %134 : vector<32x128xf32>
    %138 = arith.mulf %137, %134 : vector<32x128xf32>
    %cst_57 = arith.constant 4.471500e-02 : f32
    %139 = vector.broadcast %cst_57 : f32 to vector<32x128xf32>
    %140 = arith.mulf %139, %138 : vector<32x128xf32>
    %141 = arith.addf %134, %140 : vector<32x128xf32>
    %cst_58 = arith.constant 0.797884583 : f32
    %142 = vector.broadcast %cst_58 : f32 to vector<32x128xf32>
    %143 = arith.mulf %142, %141 : vector<32x128xf32>
    %144 = math.tanh %143 : vector<32x128xf32>
    %cst_59 = arith.constant 1.000000e+00 : f32
    %145 = vector.broadcast %cst_59 : f32 to vector<32x128xf32>
    %146 = arith.addf %145, %144 : vector<32x128xf32>
    %147 = arith.mulf %136, %146 : vector<32x128xf32>
    %cst_60 = arith.constant dense<0.000000e+00> : vector<32x128xf32>
    %148 = tpu.matmul %147, %9, %cst_60 {dimension_numbers = #tpu.dot_dimension_numbers<[1], [0], [0], [1], [0, 0, 1, 1], [], []>} : vector<32x128xf32>, vector<128x128xf32>, vector<32x128xf32> -> vector<32x128xf32>
    %149 = vector.broadcast %10 : vector<1x128xf32> to vector<32x128xf32>
    %150 = arith.addf %148, %149 : vector<32x128xf32>
    %cst_61 = arith.constant 5.000000e-01 : f32
    %151 = vector.broadcast %cst_61 : f32 to vector<32x128xf32>
    %152 = arith.mulf %151, %150 : vector<32x128xf32>
    %153 = arith.mulf %150, %150 : vector<32x128xf32>
    %154 = arith.mulf %153, %150 : vector<32x128xf32>
    %cst_62 = arith.constant 4.471500e-02 : f32
    %155 = vector.broadcast %cst_62 : f32 to vector<32x128xf32>
    %156 = arith.mulf %155, %154 : vector<32x128xf32>
    %157 = arith.addf %150, %156 : vector<32x128xf32>
    %cst_63 = arith.constant 0.797884583 : f32
    %158 = vector.broadcast %cst_63 : f32 to vector<32x128xf32>
    %159 = arith.mulf %158, %157 : vector<32x128xf32>
    %160 = math.tanh %159 : vector<32x128xf32>
    %cst_64 = arith.constant 1.000000e+00 : f32
    %161 = vector.broadcast %cst_64 : f32 to vector<32x128xf32>
    %162 = arith.addf %161, %160 : vector<32x128xf32>
    %163 = arith.mulf %152, %162 : vector<32x128xf32>
    %cst_65 = arith.constant dense<0.000000e+00> : vector<32x128xf32>
    %164 = tpu.matmul %163, %11, %cst_65 {dimension_numbers = #tpu.dot_dimension_numbers<[1], [0], [0], [1], [0, 0, 1, 1], [], []>} : vector<32x128xf32>, vector<128x128xf32>, vector<32x128xf32> -> vector<32x128xf32>
    %165 = vector.broadcast %12 : vector<1x128xf32> to vector<32x128xf32>
    %166 = arith.addf %164, %165 : vector<32x128xf32>
    %167 = vector.extract_strided_slice %1 {offsets = [0, 1], sizes = [32, 1], strides = [1, 1]} : vector<32x8xf32> to vector<32x1xf32>
    %168 = vector.broadcast %167 : vector<32x1xf32> to vector<32x128xf32>
    %169 = arith.mulf %168, %166 : vector<32x128xf32>
    %170 = arith.addf %94, %169 : vector<32x128xf32>
    %c0_66 = arith.constant 0 : index
    %c256 = arith.constant 256 : index
    %171 = vector.load %arg2[%c0_66, %c256] : memref<32x1024xf32, #tpu.memory_space<vmem>>, vector<32x128xf32>
    %cst_67 = arith.constant dense<0.000000e+00> : vector<32xf32>
    %172 = vector.multi_reduction <add>, %171, %cst_67 [1] : vector<32x128xf32> to vector<32xf32>
    %173 = vector.shape_cast %172 : vector<32xf32> to vector<32x1xf32>
    %174 = arith.mulf %171, %171 : vector<32x128xf32>
    %cst_68 = arith.constant dense<0.000000e+00> : vector<32xf32>
    %175 = vector.multi_reduction <add>, %174, %cst_68 [1] : vector<32x128xf32> to vector<32xf32>
    %176 = vector.shape_cast %175 : vector<32xf32> to vector<32x1xf32>
    %177 = arith.addf %14, %173 : vector<32x1xf32>
    %cst_69 = arith.constant 3.906250e-03 : f32
    %178 = vector.broadcast %cst_69 : f32 to vector<32x1xf32>
    %179 = arith.mulf %177, %178 : vector<32x1xf32>
    %180 = arith.addf %17, %176 : vector<32x1xf32>
    %cst_70 = arith.constant 3.906250e-03 : f32
    %181 = vector.broadcast %cst_70 : f32 to vector<32x1xf32>
    %182 = arith.mulf %180, %181 : vector<32x1xf32>
    %183 = arith.mulf %179, %179 : vector<32x1xf32>
    %184 = arith.subf %182, %183 : vector<32x1xf32>
    %cst_71 = arith.constant 0.000000e+00 : f32
    %185 = vector.broadcast %cst_71 : f32 to vector<32x1xf32>
    %186 = arith.maximumf %184, %185 : vector<32x1xf32>
    %cst_72 = arith.constant 9.99999974E-6 : f32
    %187 = vector.broadcast %cst_72 : f32 to vector<32x1xf32>
    %188 = arith.addf %186, %187 : vector<32x1xf32>
    %189 = math.rsqrt %188 : vector<32x1xf32>
    %190 = vector.broadcast %179 : vector<32x1xf32> to vector<32x128xf32>
    %191 = arith.subf %0, %190 : vector<32x128xf32>
    %192 = vector.broadcast %189 : vector<32x1xf32> to vector<32x128xf32>
    %193 = arith.mulf %191, %192 : vector<32x128xf32>
    %194 = vector.broadcast %2 : vector<1x128xf32> to vector<32x128xf32>
    %195 = arith.mulf %193, %194 : vector<32x128xf32>
    %196 = vector.broadcast %3 : vector<1x128xf32> to vector<32x128xf32>
    %197 = arith.addf %195, %196 : vector<32x128xf32>
    %198 = vector.broadcast %179 : vector<32x1xf32> to vector<32x128xf32>
    %199 = arith.subf %171, %198 : vector<32x128xf32>
    %200 = vector.broadcast %189 : vector<32x1xf32> to vector<32x128xf32>
    %201 = arith.mulf %199, %200 : vector<32x128xf32>
    %202 = vector.broadcast %4 : vector<1x128xf32> to vector<32x128xf32>
    %203 = arith.mulf %201, %202 : vector<32x128xf32>
    %204 = vector.broadcast %5 : vector<1x128xf32> to vector<32x128xf32>
    %205 = arith.addf %203, %204 : vector<32x128xf32>
    %cst_73 = arith.constant dense<0.000000e+00> : vector<32x128xf32>
    %206 = tpu.matmul %197, %6, %cst_73 {dimension_numbers = #tpu.dot_dimension_numbers<[1], [0], [0], [1], [0, 0, 1, 1], [], []>} : vector<32x128xf32>, vector<128x128xf32>, vector<32x128xf32> -> vector<32x128xf32>
    %cst_74 = arith.constant dense<0.000000e+00> : vector<32x128xf32>
    %207 = tpu.matmul %205, %7, %cst_74 {dimension_numbers = #tpu.dot_dimension_numbers<[1], [0], [0], [1], [0, 0, 1, 1], [], []>} : vector<32x128xf32>, vector<128x128xf32>, vector<32x128xf32> -> vector<32x128xf32>
    %208 = arith.addf %206, %207 : vector<32x128xf32>
    %209 = vector.broadcast %8 : vector<1x128xf32> to vector<32x128xf32>
    %210 = arith.addf %208, %209 : vector<32x128xf32>
    %cst_75 = arith.constant 5.000000e-01 : f32
    %211 = vector.broadcast %cst_75 : f32 to vector<32x128xf32>
    %212 = arith.mulf %211, %210 : vector<32x128xf32>
    %213 = arith.mulf %210, %210 : vector<32x128xf32>
    %214 = arith.mulf %213, %210 : vector<32x128xf32>
    %cst_76 = arith.constant 4.471500e-02 : f32
    %215 = vector.broadcast %cst_76 : f32 to vector<32x128xf32>
    %216 = arith.mulf %215, %214 : vector<32x128xf32>
    %217 = arith.addf %210, %216 : vector<32x128xf32>
    %cst_77 = arith.constant 0.797884583 : f32
    %218 = vector.broadcast %cst_77 : f32 to vector<32x128xf32>
    %219 = arith.mulf %218, %217 : vector<32x128xf32>
    %220 = math.tanh %219 : vector<32x128xf32>
    %cst_78 = arith.constant 1.000000e+00 : f32
    %221 = vector.broadcast %cst_78 : f32 to vector<32x128xf32>
    %222 = arith.addf %221, %220 : vector<32x128xf32>
    %223 = arith.mulf %212, %222 : vector<32x128xf32>
    %cst_79 = arith.constant dense<0.000000e+00> : vector<32x128xf32>
    %224 = tpu.matmul %223, %9, %cst_79 {dimension_numbers = #tpu.dot_dimension_numbers<[1], [0], [0], [1], [0, 0, 1, 1], [], []>} : vector<32x128xf32>, vector<128x128xf32>, vector<32x128xf32> -> vector<32x128xf32>
    %225 = vector.broadcast %10 : vector<1x128xf32> to vector<32x128xf32>
    %226 = arith.addf %224, %225 : vector<32x128xf32>
    %cst_80 = arith.constant 5.000000e-01 : f32
    %227 = vector.broadcast %cst_80 : f32 to vector<32x128xf32>
    %228 = arith.mulf %227, %226 : vector<32x128xf32>
    %229 = arith.mulf %226, %226 : vector<32x128xf32>
    %230 = arith.mulf %229, %226 : vector<32x128xf32>
    %cst_81 = arith.constant 4.471500e-02 : f32
    %231 = vector.broadcast %cst_81 : f32 to vector<32x128xf32>
    %232 = arith.mulf %231, %230 : vector<32x128xf32>
    %233 = arith.addf %226, %232 : vector<32x128xf32>
    %cst_82 = arith.constant 0.797884583 : f32
    %234 = vector.broadcast %cst_82 : f32 to vector<32x128xf32>
    %235 = arith.mulf %234, %233 : vector<32x128xf32>
    %236 = math.tanh %235 : vector<32x128xf32>
    %cst_83 = arith.constant 1.000000e+00 : f32
    %237 = vector.broadcast %cst_83 : f32 to vector<32x128xf32>
    %238 = arith.addf %237, %236 : vector<32x128xf32>
    %239 = arith.mulf %228, %238 : vector<32x128xf32>
    %cst_84 = arith.constant dense<0.000000e+00> : vector<32x128xf32>
    %240 = tpu.matmul %239, %11, %cst_84 {dimension_numbers = #tpu.dot_dimension_numbers<[1], [0], [0], [1], [0, 0, 1, 1], [], []>} : vector<32x128xf32>, vector<128x128xf32>, vector<32x128xf32> -> vector<32x128xf32>
    %241 = vector.broadcast %12 : vector<1x128xf32> to vector<32x128xf32>
    %242 = arith.addf %240, %241 : vector<32x128xf32>
    %243 = vector.extract_strided_slice %1 {offsets = [0, 2], sizes = [32, 1], strides = [1, 1]} : vector<32x8xf32> to vector<32x1xf32>
    %244 = vector.broadcast %243 : vector<32x1xf32> to vector<32x128xf32>
    %245 = arith.mulf %244, %242 : vector<32x128xf32>
    %246 = arith.addf %170, %245 : vector<32x128xf32>
    %c0_85 = arith.constant 0 : index
    %c384 = arith.constant 384 : index
    %247 = vector.load %arg2[%c0_85, %c384] : memref<32x1024xf32, #tpu.memory_space<vmem>>, vector<32x128xf32>
    %cst_86 = arith.constant dense<0.000000e+00> : vector<32xf32>
    %248 = vector.multi_reduction <add>, %247, %cst_86 [1] : vector<32x128xf32> to vector<32xf32>
    %249 = vector.shape_cast %248 : vector<32xf32> to vector<32x1xf32>
    %250 = arith.mulf %247, %247 : vector<32x128xf32>
    %cst_87 = arith.constant dense<0.000000e+00> : vector<32xf32>
    %251 = vector.multi_reduction <add>, %250, %cst_87 [1] : vector<32x128xf32> to vector<32xf32>
    %252 = vector.shape_cast %251 : vector<32xf32> to vector<32x1xf32>
    %253 = arith.addf %14, %249 : vector<32x1xf32>
    %cst_88 = arith.constant 3.906250e-03 : f32
    %254 = vector.broadcast %cst_88 : f32 to vector<32x1xf32>
    %255 = arith.mulf %253, %254 : vector<32x1xf32>
    %256 = arith.addf %17, %252 : vector<32x1xf32>
    %cst_89 = arith.constant 3.906250e-03 : f32
    %257 = vector.broadcast %cst_89 : f32 to vector<32x1xf32>
    %258 = arith.mulf %256, %257 : vector<32x1xf32>
    %259 = arith.mulf %255, %255 : vector<32x1xf32>
    %260 = arith.subf %258, %259 : vector<32x1xf32>
    %cst_90 = arith.constant 0.000000e+00 : f32
    %261 = vector.broadcast %cst_90 : f32 to vector<32x1xf32>
    %262 = arith.maximumf %260, %261 : vector<32x1xf32>
    %cst_91 = arith.constant 9.99999974E-6 : f32
    %263 = vector.broadcast %cst_91 : f32 to vector<32x1xf32>
    %264 = arith.addf %262, %263 : vector<32x1xf32>
    %265 = math.rsqrt %264 : vector<32x1xf32>
    %266 = vector.broadcast %255 : vector<32x1xf32> to vector<32x128xf32>
    %267 = arith.subf %0, %266 : vector<32x128xf32>
    %268 = vector.broadcast %265 : vector<32x1xf32> to vector<32x128xf32>
    %269 = arith.mulf %267, %268 : vector<32x128xf32>
    %270 = vector.broadcast %2 : vector<1x128xf32> to vector<32x128xf32>
    %271 = arith.mulf %269, %270 : vector<32x128xf32>
    %272 = vector.broadcast %3 : vector<1x128xf32> to vector<32x128xf32>
    %273 = arith.addf %271, %272 : vector<32x128xf32>
    %274 = vector.broadcast %255 : vector<32x1xf32> to vector<32x128xf32>
    %275 = arith.subf %247, %274 : vector<32x128xf32>
    %276 = vector.broadcast %265 : vector<32x1xf32> to vector<32x128xf32>
    %277 = arith.mulf %275, %276 : vector<32x128xf32>
    %278 = vector.broadcast %4 : vector<1x128xf32> to vector<32x128xf32>
    %279 = arith.mulf %277, %278 : vector<32x128xf32>
    %280 = vector.broadcast %5 : vector<1x128xf32> to vector<32x128xf32>
    %281 = arith.addf %279, %280 : vector<32x128xf32>
    %cst_92 = arith.constant dense<0.000000e+00> : vector<32x128xf32>
    %282 = tpu.matmul %273, %6, %cst_92 {dimension_numbers = #tpu.dot_dimension_numbers<[1], [0], [0], [1], [0, 0, 1, 1], [], []>} : vector<32x128xf32>, vector<128x128xf32>, vector<32x128xf32> -> vector<32x128xf32>
    %cst_93 = arith.constant dense<0.000000e+00> : vector<32x128xf32>
    %283 = tpu.matmul %281, %7, %cst_93 {dimension_numbers = #tpu.dot_dimension_numbers<[1], [0], [0], [1], [0, 0, 1, 1], [], []>} : vector<32x128xf32>, vector<128x128xf32>, vector<32x128xf32> -> vector<32x128xf32>
    %284 = arith.addf %282, %283 : vector<32x128xf32>
    %285 = vector.broadcast %8 : vector<1x128xf32> to vector<32x128xf32>
    %286 = arith.addf %284, %285 : vector<32x128xf32>
    %cst_94 = arith.constant 5.000000e-01 : f32
    %287 = vector.broadcast %cst_94 : f32 to vector<32x128xf32>
    %288 = arith.mulf %287, %286 : vector<32x128xf32>
    %289 = arith.mulf %286, %286 : vector<32x128xf32>
    %290 = arith.mulf %289, %286 : vector<32x128xf32>
    %cst_95 = arith.constant 4.471500e-02 : f32
    %291 = vector.broadcast %cst_95 : f32 to vector<32x128xf32>
    %292 = arith.mulf %291, %290 : vector<32x128xf32>
    %293 = arith.addf %286, %292 : vector<32x128xf32>
    %cst_96 = arith.constant 0.797884583 : f32
    %294 = vector.broadcast %cst_96 : f32 to vector<32x128xf32>
    %295 = arith.mulf %294, %293 : vector<32x128xf32>
    %296 = math.tanh %295 : vector<32x128xf32>
    %cst_97 = arith.constant 1.000000e+00 : f32
    %297 = vector.broadcast %cst_97 : f32 to vector<32x128xf32>
    %298 = arith.addf %297, %296 : vector<32x128xf32>
    %299 = arith.mulf %288, %298 : vector<32x128xf32>
    %cst_98 = arith.constant dense<0.000000e+00> : vector<32x128xf32>
    %300 = tpu.matmul %299, %9, %cst_98 {dimension_numbers = #tpu.dot_dimension_numbers<[1], [0], [0], [1], [0, 0, 1, 1], [], []>} : vector<32x128xf32>, vector<128x128xf32>, vector<32x128xf32> -> vector<32x128xf32>
    %301 = vector.broadcast %10 : vector<1x128xf32> to vector<32x128xf32>
    %302 = arith.addf %300, %301 : vector<32x128xf32>
    %cst_99 = arith.constant 5.000000e-01 : f32
    %303 = vector.broadcast %cst_99 : f32 to vector<32x128xf32>
    %304 = arith.mulf %303, %302 : vector<32x128xf32>
    %305 = arith.mulf %302, %302 : vector<32x128xf32>
    %306 = arith.mulf %305, %302 : vector<32x128xf32>
    %cst_100 = arith.constant 4.471500e-02 : f32
    %307 = vector.broadcast %cst_100 : f32 to vector<32x128xf32>
    %308 = arith.mulf %307, %306 : vector<32x128xf32>
    %309 = arith.addf %302, %308 : vector<32x128xf32>
    %cst_101 = arith.constant 0.797884583 : f32
    %310 = vector.broadcast %cst_101 : f32 to vector<32x128xf32>
    %311 = arith.mulf %310, %309 : vector<32x128xf32>
    %312 = math.tanh %311 : vector<32x128xf32>
    %cst_102 = arith.constant 1.000000e+00 : f32
    %313 = vector.broadcast %cst_102 : f32 to vector<32x128xf32>
    %314 = arith.addf %313, %312 : vector<32x128xf32>
    %315 = arith.mulf %304, %314 : vector<32x128xf32>
    %cst_103 = arith.constant dense<0.000000e+00> : vector<32x128xf32>
    %316 = tpu.matmul %315, %11, %cst_103 {dimension_numbers = #tpu.dot_dimension_numbers<[1], [0], [0], [1], [0, 0, 1, 1], [], []>} : vector<32x128xf32>, vector<128x128xf32>, vector<32x128xf32> -> vector<32x128xf32>
    %317 = vector.broadcast %12 : vector<1x128xf32> to vector<32x128xf32>
    %318 = arith.addf %316, %317 : vector<32x128xf32>
    %319 = vector.extract_strided_slice %1 {offsets = [0, 3], sizes = [32, 1], strides = [1, 1]} : vector<32x8xf32> to vector<32x1xf32>
    %320 = vector.broadcast %319 : vector<32x1xf32> to vector<32x128xf32>
    %321 = arith.mulf %320, %318 : vector<32x128xf32>
    %322 = arith.addf %246, %321 : vector<32x128xf32>
    %c0_104 = arith.constant 0 : index
    %c512 = arith.constant 512 : index
    %323 = vector.load %arg2[%c0_104, %c512] : memref<32x1024xf32, #tpu.memory_space<vmem>>, vector<32x128xf32>
    %cst_105 = arith.constant dense<0.000000e+00> : vector<32xf32>
    %324 = vector.multi_reduction <add>, %323, %cst_105 [1] : vector<32x128xf32> to vector<32xf32>
    %325 = vector.shape_cast %324 : vector<32xf32> to vector<32x1xf32>
    %326 = arith.mulf %323, %323 : vector<32x128xf32>
    %cst_106 = arith.constant dense<0.000000e+00> : vector<32xf32>
    %327 = vector.multi_reduction <add>, %326, %cst_106 [1] : vector<32x128xf32> to vector<32xf32>
    %328 = vector.shape_cast %327 : vector<32xf32> to vector<32x1xf32>
    %329 = arith.addf %14, %325 : vector<32x1xf32>
    %cst_107 = arith.constant 3.906250e-03 : f32
    %330 = vector.broadcast %cst_107 : f32 to vector<32x1xf32>
    %331 = arith.mulf %329, %330 : vector<32x1xf32>
    %332 = arith.addf %17, %328 : vector<32x1xf32>
    %cst_108 = arith.constant 3.906250e-03 : f32
    %333 = vector.broadcast %cst_108 : f32 to vector<32x1xf32>
    %334 = arith.mulf %332, %333 : vector<32x1xf32>
    %335 = arith.mulf %331, %331 : vector<32x1xf32>
    %336 = arith.subf %334, %335 : vector<32x1xf32>
    %cst_109 = arith.constant 0.000000e+00 : f32
    %337 = vector.broadcast %cst_109 : f32 to vector<32x1xf32>
    %338 = arith.maximumf %336, %337 : vector<32x1xf32>
    %cst_110 = arith.constant 9.99999974E-6 : f32
    %339 = vector.broadcast %cst_110 : f32 to vector<32x1xf32>
    %340 = arith.addf %338, %339 : vector<32x1xf32>
    %341 = math.rsqrt %340 : vector<32x1xf32>
    %342 = vector.broadcast %331 : vector<32x1xf32> to vector<32x128xf32>
    %343 = arith.subf %0, %342 : vector<32x128xf32>
    %344 = vector.broadcast %341 : vector<32x1xf32> to vector<32x128xf32>
    %345 = arith.mulf %343, %344 : vector<32x128xf32>
    %346 = vector.broadcast %2 : vector<1x128xf32> to vector<32x128xf32>
    %347 = arith.mulf %345, %346 : vector<32x128xf32>
    %348 = vector.broadcast %3 : vector<1x128xf32> to vector<32x128xf32>
    %349 = arith.addf %347, %348 : vector<32x128xf32>
    %350 = vector.broadcast %331 : vector<32x1xf32> to vector<32x128xf32>
    %351 = arith.subf %323, %350 : vector<32x128xf32>
    %352 = vector.broadcast %341 : vector<32x1xf32> to vector<32x128xf32>
    %353 = arith.mulf %351, %352 : vector<32x128xf32>
    %354 = vector.broadcast %4 : vector<1x128xf32> to vector<32x128xf32>
    %355 = arith.mulf %353, %354 : vector<32x128xf32>
    %356 = vector.broadcast %5 : vector<1x128xf32> to vector<32x128xf32>
    %357 = arith.addf %355, %356 : vector<32x128xf32>
    %cst_111 = arith.constant dense<0.000000e+00> : vector<32x128xf32>
    %358 = tpu.matmul %349, %6, %cst_111 {dimension_numbers = #tpu.dot_dimension_numbers<[1], [0], [0], [1], [0, 0, 1, 1], [], []>} : vector<32x128xf32>, vector<128x128xf32>, vector<32x128xf32> -> vector<32x128xf32>
    %cst_112 = arith.constant dense<0.000000e+00> : vector<32x128xf32>
    %359 = tpu.matmul %357, %7, %cst_112 {dimension_numbers = #tpu.dot_dimension_numbers<[1], [0], [0], [1], [0, 0, 1, 1], [], []>} : vector<32x128xf32>, vector<128x128xf32>, vector<32x128xf32> -> vector<32x128xf32>
    %360 = arith.addf %358, %359 : vector<32x128xf32>
    %361 = vector.broadcast %8 : vector<1x128xf32> to vector<32x128xf32>
    %362 = arith.addf %360, %361 : vector<32x128xf32>
    %cst_113 = arith.constant 5.000000e-01 : f32
    %363 = vector.broadcast %cst_113 : f32 to vector<32x128xf32>
    %364 = arith.mulf %363, %362 : vector<32x128xf32>
    %365 = arith.mulf %362, %362 : vector<32x128xf32>
    %366 = arith.mulf %365, %362 : vector<32x128xf32>
    %cst_114 = arith.constant 4.471500e-02 : f32
    %367 = vector.broadcast %cst_114 : f32 to vector<32x128xf32>
    %368 = arith.mulf %367, %366 : vector<32x128xf32>
    %369 = arith.addf %362, %368 : vector<32x128xf32>
    %cst_115 = arith.constant 0.797884583 : f32
    %370 = vector.broadcast %cst_115 : f32 to vector<32x128xf32>
    %371 = arith.mulf %370, %369 : vector<32x128xf32>
    %372 = math.tanh %371 : vector<32x128xf32>
    %cst_116 = arith.constant 1.000000e+00 : f32
    %373 = vector.broadcast %cst_116 : f32 to vector<32x128xf32>
    %374 = arith.addf %373, %372 : vector<32x128xf32>
    %375 = arith.mulf %364, %374 : vector<32x128xf32>
    %cst_117 = arith.constant dense<0.000000e+00> : vector<32x128xf32>
    %376 = tpu.matmul %375, %9, %cst_117 {dimension_numbers = #tpu.dot_dimension_numbers<[1], [0], [0], [1], [0, 0, 1, 1], [], []>} : vector<32x128xf32>, vector<128x128xf32>, vector<32x128xf32> -> vector<32x128xf32>
    %377 = vector.broadcast %10 : vector<1x128xf32> to vector<32x128xf32>
    %378 = arith.addf %376, %377 : vector<32x128xf32>
    %cst_118 = arith.constant 5.000000e-01 : f32
    %379 = vector.broadcast %cst_118 : f32 to vector<32x128xf32>
    %380 = arith.mulf %379, %378 : vector<32x128xf32>
    %381 = arith.mulf %378, %378 : vector<32x128xf32>
    %382 = arith.mulf %381, %378 : vector<32x128xf32>
    %cst_119 = arith.constant 4.471500e-02 : f32
    %383 = vector.broadcast %cst_119 : f32 to vector<32x128xf32>
    %384 = arith.mulf %383, %382 : vector<32x128xf32>
    %385 = arith.addf %378, %384 : vector<32x128xf32>
    %cst_120 = arith.constant 0.797884583 : f32
    %386 = vector.broadcast %cst_120 : f32 to vector<32x128xf32>
    %387 = arith.mulf %386, %385 : vector<32x128xf32>
    %388 = math.tanh %387 : vector<32x128xf32>
    %cst_121 = arith.constant 1.000000e+00 : f32
    %389 = vector.broadcast %cst_121 : f32 to vector<32x128xf32>
    %390 = arith.addf %389, %388 : vector<32x128xf32>
    %391 = arith.mulf %380, %390 : vector<32x128xf32>
    %cst_122 = arith.constant dense<0.000000e+00> : vector<32x128xf32>
    %392 = tpu.matmul %391, %11, %cst_122 {dimension_numbers = #tpu.dot_dimension_numbers<[1], [0], [0], [1], [0, 0, 1, 1], [], []>} : vector<32x128xf32>, vector<128x128xf32>, vector<32x128xf32> -> vector<32x128xf32>
    %393 = vector.broadcast %12 : vector<1x128xf32> to vector<32x128xf32>
    %394 = arith.addf %392, %393 : vector<32x128xf32>
    %395 = vector.extract_strided_slice %1 {offsets = [0, 4], sizes = [32, 1], strides = [1, 1]} : vector<32x8xf32> to vector<32x1xf32>
    %396 = vector.broadcast %395 : vector<32x1xf32> to vector<32x128xf32>
    %397 = arith.mulf %396, %394 : vector<32x128xf32>
    %398 = arith.addf %322, %397 : vector<32x128xf32>
    %c0_123 = arith.constant 0 : index
    %c640 = arith.constant 640 : index
    %399 = vector.load %arg2[%c0_123, %c640] : memref<32x1024xf32, #tpu.memory_space<vmem>>, vector<32x128xf32>
    %cst_124 = arith.constant dense<0.000000e+00> : vector<32xf32>
    %400 = vector.multi_reduction <add>, %399, %cst_124 [1] : vector<32x128xf32> to vector<32xf32>
    %401 = vector.shape_cast %400 : vector<32xf32> to vector<32x1xf32>
    %402 = arith.mulf %399, %399 : vector<32x128xf32>
    %cst_125 = arith.constant dense<0.000000e+00> : vector<32xf32>
    %403 = vector.multi_reduction <add>, %402, %cst_125 [1] : vector<32x128xf32> to vector<32xf32>
    %404 = vector.shape_cast %403 : vector<32xf32> to vector<32x1xf32>
    %405 = arith.addf %14, %401 : vector<32x1xf32>
    %cst_126 = arith.constant 3.906250e-03 : f32
    %406 = vector.broadcast %cst_126 : f32 to vector<32x1xf32>
    %407 = arith.mulf %405, %406 : vector<32x1xf32>
    %408 = arith.addf %17, %404 : vector<32x1xf32>
    %cst_127 = arith.constant 3.906250e-03 : f32
    %409 = vector.broadcast %cst_127 : f32 to vector<32x1xf32>
    %410 = arith.mulf %408, %409 : vector<32x1xf32>
    %411 = arith.mulf %407, %407 : vector<32x1xf32>
    %412 = arith.subf %410, %411 : vector<32x1xf32>
    %cst_128 = arith.constant 0.000000e+00 : f32
    %413 = vector.broadcast %cst_128 : f32 to vector<32x1xf32>
    %414 = arith.maximumf %412, %413 : vector<32x1xf32>
    %cst_129 = arith.constant 9.99999974E-6 : f32
    %415 = vector.broadcast %cst_129 : f32 to vector<32x1xf32>
    %416 = arith.addf %414, %415 : vector<32x1xf32>
    %417 = math.rsqrt %416 : vector<32x1xf32>
    %418 = vector.broadcast %407 : vector<32x1xf32> to vector<32x128xf32>
    %419 = arith.subf %0, %418 : vector<32x128xf32>
    %420 = vector.broadcast %417 : vector<32x1xf32> to vector<32x128xf32>
    %421 = arith.mulf %419, %420 : vector<32x128xf32>
    %422 = vector.broadcast %2 : vector<1x128xf32> to vector<32x128xf32>
    %423 = arith.mulf %421, %422 : vector<32x128xf32>
    %424 = vector.broadcast %3 : vector<1x128xf32> to vector<32x128xf32>
    %425 = arith.addf %423, %424 : vector<32x128xf32>
    %426 = vector.broadcast %407 : vector<32x1xf32> to vector<32x128xf32>
    %427 = arith.subf %399, %426 : vector<32x128xf32>
    %428 = vector.broadcast %417 : vector<32x1xf32> to vector<32x128xf32>
    %429 = arith.mulf %427, %428 : vector<32x128xf32>
    %430 = vector.broadcast %4 : vector<1x128xf32> to vector<32x128xf32>
    %431 = arith.mulf %429, %430 : vector<32x128xf32>
    %432 = vector.broadcast %5 : vector<1x128xf32> to vector<32x128xf32>
    %433 = arith.addf %431, %432 : vector<32x128xf32>
    %cst_130 = arith.constant dense<0.000000e+00> : vector<32x128xf32>
    %434 = tpu.matmul %425, %6, %cst_130 {dimension_numbers = #tpu.dot_dimension_numbers<[1], [0], [0], [1], [0, 0, 1, 1], [], []>} : vector<32x128xf32>, vector<128x128xf32>, vector<32x128xf32> -> vector<32x128xf32>
    %cst_131 = arith.constant dense<0.000000e+00> : vector<32x128xf32>
    %435 = tpu.matmul %433, %7, %cst_131 {dimension_numbers = #tpu.dot_dimension_numbers<[1], [0], [0], [1], [0, 0, 1, 1], [], []>} : vector<32x128xf32>, vector<128x128xf32>, vector<32x128xf32> -> vector<32x128xf32>
    %436 = arith.addf %434, %435 : vector<32x128xf32>
    %437 = vector.broadcast %8 : vector<1x128xf32> to vector<32x128xf32>
    %438 = arith.addf %436, %437 : vector<32x128xf32>
    %cst_132 = arith.constant 5.000000e-01 : f32
    %439 = vector.broadcast %cst_132 : f32 to vector<32x128xf32>
    %440 = arith.mulf %439, %438 : vector<32x128xf32>
    %441 = arith.mulf %438, %438 : vector<32x128xf32>
    %442 = arith.mulf %441, %438 : vector<32x128xf32>
    %cst_133 = arith.constant 4.471500e-02 : f32
    %443 = vector.broadcast %cst_133 : f32 to vector<32x128xf32>
    %444 = arith.mulf %443, %442 : vector<32x128xf32>
    %445 = arith.addf %438, %444 : vector<32x128xf32>
    %cst_134 = arith.constant 0.797884583 : f32
    %446 = vector.broadcast %cst_134 : f32 to vector<32x128xf32>
    %447 = arith.mulf %446, %445 : vector<32x128xf32>
    %448 = math.tanh %447 : vector<32x128xf32>
    %cst_135 = arith.constant 1.000000e+00 : f32
    %449 = vector.broadcast %cst_135 : f32 to vector<32x128xf32>
    %450 = arith.addf %449, %448 : vector<32x128xf32>
    %451 = arith.mulf %440, %450 : vector<32x128xf32>
    %cst_136 = arith.constant dense<0.000000e+00> : vector<32x128xf32>
    %452 = tpu.matmul %451, %9, %cst_136 {dimension_numbers = #tpu.dot_dimension_numbers<[1], [0], [0], [1], [0, 0, 1, 1], [], []>} : vector<32x128xf32>, vector<128x128xf32>, vector<32x128xf32> -> vector<32x128xf32>
    %453 = vector.broadcast %10 : vector<1x128xf32> to vector<32x128xf32>
    %454 = arith.addf %452, %453 : vector<32x128xf32>
    %cst_137 = arith.constant 5.000000e-01 : f32
    %455 = vector.broadcast %cst_137 : f32 to vector<32x128xf32>
    %456 = arith.mulf %455, %454 : vector<32x128xf32>
    %457 = arith.mulf %454, %454 : vector<32x128xf32>
    %458 = arith.mulf %457, %454 : vector<32x128xf32>
    %cst_138 = arith.constant 4.471500e-02 : f32
    %459 = vector.broadcast %cst_138 : f32 to vector<32x128xf32>
    %460 = arith.mulf %459, %458 : vector<32x128xf32>
    %461 = arith.addf %454, %460 : vector<32x128xf32>
    %cst_139 = arith.constant 0.797884583 : f32
    %462 = vector.broadcast %cst_139 : f32 to vector<32x128xf32>
    %463 = arith.mulf %462, %461 : vector<32x128xf32>
    %464 = math.tanh %463 : vector<32x128xf32>
    %cst_140 = arith.constant 1.000000e+00 : f32
    %465 = vector.broadcast %cst_140 : f32 to vector<32x128xf32>
    %466 = arith.addf %465, %464 : vector<32x128xf32>
    %467 = arith.mulf %456, %466 : vector<32x128xf32>
    %cst_141 = arith.constant dense<0.000000e+00> : vector<32x128xf32>
    %468 = tpu.matmul %467, %11, %cst_141 {dimension_numbers = #tpu.dot_dimension_numbers<[1], [0], [0], [1], [0, 0, 1, 1], [], []>} : vector<32x128xf32>, vector<128x128xf32>, vector<32x128xf32> -> vector<32x128xf32>
    %469 = vector.broadcast %12 : vector<1x128xf32> to vector<32x128xf32>
    %470 = arith.addf %468, %469 : vector<32x128xf32>
    %471 = vector.extract_strided_slice %1 {offsets = [0, 5], sizes = [32, 1], strides = [1, 1]} : vector<32x8xf32> to vector<32x1xf32>
    %472 = vector.broadcast %471 : vector<32x1xf32> to vector<32x128xf32>
    %473 = arith.mulf %472, %470 : vector<32x128xf32>
    %474 = arith.addf %398, %473 : vector<32x128xf32>
    %c0_142 = arith.constant 0 : index
    %c768 = arith.constant 768 : index
    %475 = vector.load %arg2[%c0_142, %c768] : memref<32x1024xf32, #tpu.memory_space<vmem>>, vector<32x128xf32>
    %cst_143 = arith.constant dense<0.000000e+00> : vector<32xf32>
    %476 = vector.multi_reduction <add>, %475, %cst_143 [1] : vector<32x128xf32> to vector<32xf32>
    %477 = vector.shape_cast %476 : vector<32xf32> to vector<32x1xf32>
    %478 = arith.mulf %475, %475 : vector<32x128xf32>
    %cst_144 = arith.constant dense<0.000000e+00> : vector<32xf32>
    %479 = vector.multi_reduction <add>, %478, %cst_144 [1] : vector<32x128xf32> to vector<32xf32>
    %480 = vector.shape_cast %479 : vector<32xf32> to vector<32x1xf32>
    %481 = arith.addf %14, %477 : vector<32x1xf32>
    %cst_145 = arith.constant 3.906250e-03 : f32
    %482 = vector.broadcast %cst_145 : f32 to vector<32x1xf32>
    %483 = arith.mulf %481, %482 : vector<32x1xf32>
    %484 = arith.addf %17, %480 : vector<32x1xf32>
    %cst_146 = arith.constant 3.906250e-03 : f32
    %485 = vector.broadcast %cst_146 : f32 to vector<32x1xf32>
    %486 = arith.mulf %484, %485 : vector<32x1xf32>
    %487 = arith.mulf %483, %483 : vector<32x1xf32>
    %488 = arith.subf %486, %487 : vector<32x1xf32>
    %cst_147 = arith.constant 0.000000e+00 : f32
    %489 = vector.broadcast %cst_147 : f32 to vector<32x1xf32>
    %490 = arith.maximumf %488, %489 : vector<32x1xf32>
    %cst_148 = arith.constant 9.99999974E-6 : f32
    %491 = vector.broadcast %cst_148 : f32 to vector<32x1xf32>
    %492 = arith.addf %490, %491 : vector<32x1xf32>
    %493 = math.rsqrt %492 : vector<32x1xf32>
    %494 = vector.broadcast %483 : vector<32x1xf32> to vector<32x128xf32>
    %495 = arith.subf %0, %494 : vector<32x128xf32>
    %496 = vector.broadcast %493 : vector<32x1xf32> to vector<32x128xf32>
    %497 = arith.mulf %495, %496 : vector<32x128xf32>
    %498 = vector.broadcast %2 : vector<1x128xf32> to vector<32x128xf32>
    %499 = arith.mulf %497, %498 : vector<32x128xf32>
    %500 = vector.broadcast %3 : vector<1x128xf32> to vector<32x128xf32>
    %501 = arith.addf %499, %500 : vector<32x128xf32>
    %502 = vector.broadcast %483 : vector<32x1xf32> to vector<32x128xf32>
    %503 = arith.subf %475, %502 : vector<32x128xf32>
    %504 = vector.broadcast %493 : vector<32x1xf32> to vector<32x128xf32>
    %505 = arith.mulf %503, %504 : vector<32x128xf32>
    %506 = vector.broadcast %4 : vector<1x128xf32> to vector<32x128xf32>
    %507 = arith.mulf %505, %506 : vector<32x128xf32>
    %508 = vector.broadcast %5 : vector<1x128xf32> to vector<32x128xf32>
    %509 = arith.addf %507, %508 : vector<32x128xf32>
    %cst_149 = arith.constant dense<0.000000e+00> : vector<32x128xf32>
    %510 = tpu.matmul %501, %6, %cst_149 {dimension_numbers = #tpu.dot_dimension_numbers<[1], [0], [0], [1], [0, 0, 1, 1], [], []>} : vector<32x128xf32>, vector<128x128xf32>, vector<32x128xf32> -> vector<32x128xf32>
    %cst_150 = arith.constant dense<0.000000e+00> : vector<32x128xf32>
    %511 = tpu.matmul %509, %7, %cst_150 {dimension_numbers = #tpu.dot_dimension_numbers<[1], [0], [0], [1], [0, 0, 1, 1], [], []>} : vector<32x128xf32>, vector<128x128xf32>, vector<32x128xf32> -> vector<32x128xf32>
    %512 = arith.addf %510, %511 : vector<32x128xf32>
    %513 = vector.broadcast %8 : vector<1x128xf32> to vector<32x128xf32>
    %514 = arith.addf %512, %513 : vector<32x128xf32>
    %cst_151 = arith.constant 5.000000e-01 : f32
    %515 = vector.broadcast %cst_151 : f32 to vector<32x128xf32>
    %516 = arith.mulf %515, %514 : vector<32x128xf32>
    %517 = arith.mulf %514, %514 : vector<32x128xf32>
    %518 = arith.mulf %517, %514 : vector<32x128xf32>
    %cst_152 = arith.constant 4.471500e-02 : f32
    %519 = vector.broadcast %cst_152 : f32 to vector<32x128xf32>
    %520 = arith.mulf %519, %518 : vector<32x128xf32>
    %521 = arith.addf %514, %520 : vector<32x128xf32>
    %cst_153 = arith.constant 0.797884583 : f32
    %522 = vector.broadcast %cst_153 : f32 to vector<32x128xf32>
    %523 = arith.mulf %522, %521 : vector<32x128xf32>
    %524 = math.tanh %523 : vector<32x128xf32>
    %cst_154 = arith.constant 1.000000e+00 : f32
    %525 = vector.broadcast %cst_154 : f32 to vector<32x128xf32>
    %526 = arith.addf %525, %524 : vector<32x128xf32>
    %527 = arith.mulf %516, %526 : vector<32x128xf32>
    %cst_155 = arith.constant dense<0.000000e+00> : vector<32x128xf32>
    %528 = tpu.matmul %527, %9, %cst_155 {dimension_numbers = #tpu.dot_dimension_numbers<[1], [0], [0], [1], [0, 0, 1, 1], [], []>} : vector<32x128xf32>, vector<128x128xf32>, vector<32x128xf32> -> vector<32x128xf32>
    %529 = vector.broadcast %10 : vector<1x128xf32> to vector<32x128xf32>
    %530 = arith.addf %528, %529 : vector<32x128xf32>
    %cst_156 = arith.constant 5.000000e-01 : f32
    %531 = vector.broadcast %cst_156 : f32 to vector<32x128xf32>
    %532 = arith.mulf %531, %530 : vector<32x128xf32>
    %533 = arith.mulf %530, %530 : vector<32x128xf32>
    %534 = arith.mulf %533, %530 : vector<32x128xf32>
    %cst_157 = arith.constant 4.471500e-02 : f32
    %535 = vector.broadcast %cst_157 : f32 to vector<32x128xf32>
    %536 = arith.mulf %535, %534 : vector<32x128xf32>
    %537 = arith.addf %530, %536 : vector<32x128xf32>
    %cst_158 = arith.constant 0.797884583 : f32
    %538 = vector.broadcast %cst_158 : f32 to vector<32x128xf32>
    %539 = arith.mulf %538, %537 : vector<32x128xf32>
    %540 = math.tanh %539 : vector<32x128xf32>
    %cst_159 = arith.constant 1.000000e+00 : f32
    %541 = vector.broadcast %cst_159 : f32 to vector<32x128xf32>
    %542 = arith.addf %541, %540 : vector<32x128xf32>
    %543 = arith.mulf %532, %542 : vector<32x128xf32>
    %cst_160 = arith.constant dense<0.000000e+00> : vector<32x128xf32>
    %544 = tpu.matmul %543, %11, %cst_160 {dimension_numbers = #tpu.dot_dimension_numbers<[1], [0], [0], [1], [0, 0, 1, 1], [], []>} : vector<32x128xf32>, vector<128x128xf32>, vector<32x128xf32> -> vector<32x128xf32>
    %545 = vector.broadcast %12 : vector<1x128xf32> to vector<32x128xf32>
    %546 = arith.addf %544, %545 : vector<32x128xf32>
    %547 = vector.extract_strided_slice %1 {offsets = [0, 6], sizes = [32, 1], strides = [1, 1]} : vector<32x8xf32> to vector<32x1xf32>
    %548 = vector.broadcast %547 : vector<32x1xf32> to vector<32x128xf32>
    %549 = arith.mulf %548, %546 : vector<32x128xf32>
    %550 = arith.addf %474, %549 : vector<32x128xf32>
    %c0_161 = arith.constant 0 : index
    %c896 = arith.constant 896 : index
    %551 = vector.load %arg2[%c0_161, %c896] : memref<32x1024xf32, #tpu.memory_space<vmem>>, vector<32x128xf32>
    %cst_162 = arith.constant dense<0.000000e+00> : vector<32xf32>
    %552 = vector.multi_reduction <add>, %551, %cst_162 [1] : vector<32x128xf32> to vector<32xf32>
    %553 = vector.shape_cast %552 : vector<32xf32> to vector<32x1xf32>
    %554 = arith.mulf %551, %551 : vector<32x128xf32>
    %cst_163 = arith.constant dense<0.000000e+00> : vector<32xf32>
    %555 = vector.multi_reduction <add>, %554, %cst_163 [1] : vector<32x128xf32> to vector<32xf32>
    %556 = vector.shape_cast %555 : vector<32xf32> to vector<32x1xf32>
    %557 = arith.addf %14, %553 : vector<32x1xf32>
    %cst_164 = arith.constant 3.906250e-03 : f32
    %558 = vector.broadcast %cst_164 : f32 to vector<32x1xf32>
    %559 = arith.mulf %557, %558 : vector<32x1xf32>
    %560 = arith.addf %17, %556 : vector<32x1xf32>
    %cst_165 = arith.constant 3.906250e-03 : f32
    %561 = vector.broadcast %cst_165 : f32 to vector<32x1xf32>
    %562 = arith.mulf %560, %561 : vector<32x1xf32>
    %563 = arith.mulf %559, %559 : vector<32x1xf32>
    %564 = arith.subf %562, %563 : vector<32x1xf32>
    %cst_166 = arith.constant 0.000000e+00 : f32
    %565 = vector.broadcast %cst_166 : f32 to vector<32x1xf32>
    %566 = arith.maximumf %564, %565 : vector<32x1xf32>
    %cst_167 = arith.constant 9.99999974E-6 : f32
    %567 = vector.broadcast %cst_167 : f32 to vector<32x1xf32>
    %568 = arith.addf %566, %567 : vector<32x1xf32>
    %569 = math.rsqrt %568 : vector<32x1xf32>
    %570 = vector.broadcast %559 : vector<32x1xf32> to vector<32x128xf32>
    %571 = arith.subf %0, %570 : vector<32x128xf32>
    %572 = vector.broadcast %569 : vector<32x1xf32> to vector<32x128xf32>
    %573 = arith.mulf %571, %572 : vector<32x128xf32>
    %574 = vector.broadcast %2 : vector<1x128xf32> to vector<32x128xf32>
    %575 = arith.mulf %573, %574 : vector<32x128xf32>
    %576 = vector.broadcast %3 : vector<1x128xf32> to vector<32x128xf32>
    %577 = arith.addf %575, %576 : vector<32x128xf32>
    %578 = vector.broadcast %559 : vector<32x1xf32> to vector<32x128xf32>
    %579 = arith.subf %551, %578 : vector<32x128xf32>
    %580 = vector.broadcast %569 : vector<32x1xf32> to vector<32x128xf32>
    %581 = arith.mulf %579, %580 : vector<32x128xf32>
    %582 = vector.broadcast %4 : vector<1x128xf32> to vector<32x128xf32>
    %583 = arith.mulf %581, %582 : vector<32x128xf32>
    %584 = vector.broadcast %5 : vector<1x128xf32> to vector<32x128xf32>
    %585 = arith.addf %583, %584 : vector<32x128xf32>
    %cst_168 = arith.constant dense<0.000000e+00> : vector<32x128xf32>
    %586 = tpu.matmul %577, %6, %cst_168 {dimension_numbers = #tpu.dot_dimension_numbers<[1], [0], [0], [1], [0, 0, 1, 1], [], []>} : vector<32x128xf32>, vector<128x128xf32>, vector<32x128xf32> -> vector<32x128xf32>
    %cst_169 = arith.constant dense<0.000000e+00> : vector<32x128xf32>
    %587 = tpu.matmul %585, %7, %cst_169 {dimension_numbers = #tpu.dot_dimension_numbers<[1], [0], [0], [1], [0, 0, 1, 1], [], []>} : vector<32x128xf32>, vector<128x128xf32>, vector<32x128xf32> -> vector<32x128xf32>
    %588 = arith.addf %586, %587 : vector<32x128xf32>
    %589 = vector.broadcast %8 : vector<1x128xf32> to vector<32x128xf32>
    %590 = arith.addf %588, %589 : vector<32x128xf32>
    %cst_170 = arith.constant 5.000000e-01 : f32
    %591 = vector.broadcast %cst_170 : f32 to vector<32x128xf32>
    %592 = arith.mulf %591, %590 : vector<32x128xf32>
    %593 = arith.mulf %590, %590 : vector<32x128xf32>
    %594 = arith.mulf %593, %590 : vector<32x128xf32>
    %cst_171 = arith.constant 4.471500e-02 : f32
    %595 = vector.broadcast %cst_171 : f32 to vector<32x128xf32>
    %596 = arith.mulf %595, %594 : vector<32x128xf32>
    %597 = arith.addf %590, %596 : vector<32x128xf32>
    %cst_172 = arith.constant 0.797884583 : f32
    %598 = vector.broadcast %cst_172 : f32 to vector<32x128xf32>
    %599 = arith.mulf %598, %597 : vector<32x128xf32>
    %600 = math.tanh %599 : vector<32x128xf32>
    %cst_173 = arith.constant 1.000000e+00 : f32
    %601 = vector.broadcast %cst_173 : f32 to vector<32x128xf32>
    %602 = arith.addf %601, %600 : vector<32x128xf32>
    %603 = arith.mulf %592, %602 : vector<32x128xf32>
    %cst_174 = arith.constant dense<0.000000e+00> : vector<32x128xf32>
    %604 = tpu.matmul %603, %9, %cst_174 {dimension_numbers = #tpu.dot_dimension_numbers<[1], [0], [0], [1], [0, 0, 1, 1], [], []>} : vector<32x128xf32>, vector<128x128xf32>, vector<32x128xf32> -> vector<32x128xf32>
    %605 = vector.broadcast %10 : vector<1x128xf32> to vector<32x128xf32>
    %606 = arith.addf %604, %605 : vector<32x128xf32>
    %cst_175 = arith.constant 5.000000e-01 : f32
    %607 = vector.broadcast %cst_175 : f32 to vector<32x128xf32>
    %608 = arith.mulf %607, %606 : vector<32x128xf32>
    %609 = arith.mulf %606, %606 : vector<32x128xf32>
    %610 = arith.mulf %609, %606 : vector<32x128xf32>
    %cst_176 = arith.constant 4.471500e-02 : f32
    %611 = vector.broadcast %cst_176 : f32 to vector<32x128xf32>
    %612 = arith.mulf %611, %610 : vector<32x128xf32>
    %613 = arith.addf %606, %612 : vector<32x128xf32>
    %cst_177 = arith.constant 0.797884583 : f32
    %614 = vector.broadcast %cst_177 : f32 to vector<32x128xf32>
    %615 = arith.mulf %614, %613 : vector<32x128xf32>
    %616 = math.tanh %615 : vector<32x128xf32>
    %cst_178 = arith.constant 1.000000e+00 : f32
    %617 = vector.broadcast %cst_178 : f32 to vector<32x128xf32>
    %618 = arith.addf %617, %616 : vector<32x128xf32>
    %619 = arith.mulf %608, %618 : vector<32x128xf32>
    %cst_179 = arith.constant dense<0.000000e+00> : vector<32x128xf32>
    %620 = tpu.matmul %619, %11, %cst_179 {dimension_numbers = #tpu.dot_dimension_numbers<[1], [0], [0], [1], [0, 0, 1, 1], [], []>} : vector<32x128xf32>, vector<128x128xf32>, vector<32x128xf32> -> vector<32x128xf32>
    %621 = vector.broadcast %12 : vector<1x128xf32> to vector<32x128xf32>
    %622 = arith.addf %620, %621 : vector<32x128xf32>
    %623 = vector.extract_strided_slice %1 {offsets = [0, 7], sizes = [32, 1], strides = [1, 1]} : vector<32x8xf32> to vector<32x1xf32>
    %624 = vector.broadcast %623 : vector<32x1xf32> to vector<32x128xf32>
    %625 = arith.mulf %624, %622 : vector<32x128xf32>
    %626 = arith.addf %550, %625 : vector<32x128xf32>
    %cst_180 = arith.constant 0.0333333351 : f32
    %627 = vector.broadcast %cst_180 : f32 to vector<32x128xf32>
    %628 = arith.mulf %626, %627 : vector<32x128xf32>
    %629 = arith.addf %0, %628 : vector<32x128xf32>
    %cst_181 = arith.constant dense<0.000000e+00> : vector<32xf32>
    %630 = vector.multi_reduction <add>, %629, %cst_181 [1] : vector<32x128xf32> to vector<32xf32>
    %631 = vector.shape_cast %630 : vector<32xf32> to vector<32x1xf32>
    %cst_182 = arith.constant 1.280000e+02 : f32
    %632 = vector.broadcast %cst_182 : f32 to vector<32x1xf32>
    %633 = arith.divf %631, %632 : vector<32x1xf32>
    %634 = vector.broadcast %633 : vector<32x1xf32> to vector<32x128xf32>
    %635 = arith.subf %629, %634 : vector<32x128xf32>
    %636 = arith.mulf %635, %635 : vector<32x128xf32>
    %cst_183 = arith.constant dense<0.000000e+00> : vector<32xf32>
    %637 = vector.multi_reduction <add>, %636, %cst_183 [1] : vector<32x128xf32> to vector<32xf32>
    %638 = vector.shape_cast %637 : vector<32xf32> to vector<32x1xf32>
    %cst_184 = arith.constant 1.280000e+02 : f32
    %639 = vector.broadcast %cst_184 : f32 to vector<32x1xf32>
    %640 = arith.divf %638, %639 : vector<32x1xf32>
    %cst_185 = arith.constant 9.99999974E-6 : f32
    %641 = vector.broadcast %cst_185 : f32 to vector<32x1xf32>
    %642 = arith.addf %640, %641 : vector<32x1xf32>
    %643 = math.rsqrt %642 : vector<32x1xf32>
    %644 = vector.broadcast %643 : vector<32x1xf32> to vector<32x128xf32>
    %645 = arith.mulf %635, %644 : vector<32x128xf32>
    %c0_186 = arith.constant 0 : index
    %c0_187 = arith.constant 0 : index
    %646 = vector.load %arg16[%c0_186, %c0_187] : memref<1x128xf32, #tpu.memory_space<vmem>>, vector<1x128xf32>
    %647 = vector.broadcast %646 : vector<1x128xf32> to vector<32x128xf32>
    %648 = arith.mulf %645, %647 : vector<32x128xf32>
    %c0_188 = arith.constant 0 : index
    %c0_189 = arith.constant 0 : index
    %649 = vector.load %arg17[%c0_188, %c0_189] : memref<1x128xf32, #tpu.memory_space<vmem>>, vector<1x128xf32>
    %650 = vector.broadcast %649 : vector<1x128xf32> to vector<32x128xf32>
    %651 = arith.addf %648, %650 : vector<32x128xf32>
    %c0_190 = arith.constant 0 : index
    %c0_191 = arith.constant 0 : index
    %652 = vector.load %arg18[%c0_190, %c0_191] : memref<128x512xf32, #tpu.memory_space<vmem>>, vector<128x512xf32>
    %cst_192 = arith.constant dense<0.000000e+00> : vector<32x512xf32>
    %653 = tpu.matmul %651, %652, %cst_192 {dimension_numbers = #tpu.dot_dimension_numbers<[1], [0], [0], [1], [0, 0, 1, 1], [], []>} : vector<32x128xf32>, vector<128x512xf32>, vector<32x512xf32> -> vector<32x512xf32>
    %c0_193 = arith.constant 0 : index
    %c0_194 = arith.constant 0 : index
    %654 = vector.load %arg19[%c0_193, %c0_194] : memref<1x512xf32, #tpu.memory_space<vmem>>, vector<1x512xf32>
    %655 = vector.broadcast %654 : vector<1x512xf32> to vector<32x512xf32>
    %656 = arith.addf %653, %655 : vector<32x512xf32>
    %cst_195 = arith.constant 5.000000e-01 : f32
    %657 = vector.broadcast %cst_195 : f32 to vector<32x512xf32>
    %658 = arith.mulf %657, %656 : vector<32x512xf32>
    %659 = arith.mulf %656, %656 : vector<32x512xf32>
    %660 = arith.mulf %659, %656 : vector<32x512xf32>
    %cst_196 = arith.constant 4.471500e-02 : f32
    %661 = vector.broadcast %cst_196 : f32 to vector<32x512xf32>
    %662 = arith.mulf %661, %660 : vector<32x512xf32>
    %663 = arith.addf %656, %662 : vector<32x512xf32>
    %cst_197 = arith.constant 0.797884583 : f32
    %664 = vector.broadcast %cst_197 : f32 to vector<32x512xf32>
    %665 = arith.mulf %664, %663 : vector<32x512xf32>
    %666 = math.tanh %665 : vector<32x512xf32>
    %cst_198 = arith.constant 1.000000e+00 : f32
    %667 = vector.broadcast %cst_198 : f32 to vector<32x512xf32>
    %668 = arith.addf %667, %666 : vector<32x512xf32>
    %669 = arith.mulf %658, %668 : vector<32x512xf32>
    %c0_199 = arith.constant 0 : index
    %c0_200 = arith.constant 0 : index
    %670 = vector.load %arg20[%c0_199, %c0_200] : memref<512x128xf32, #tpu.memory_space<vmem>>, vector<512x128xf32>
    %cst_201 = arith.constant dense<0.000000e+00> : vector<32x128xf32>
    %671 = tpu.matmul %669, %670, %cst_201 {dimension_numbers = #tpu.dot_dimension_numbers<[1], [0], [0], [1], [0, 0, 1, 1], [], []>} : vector<32x512xf32>, vector<512x128xf32>, vector<32x128xf32> -> vector<32x128xf32>
    %c0_202 = arith.constant 0 : index
    %c0_203 = arith.constant 0 : index
    %672 = vector.load %arg21[%c0_202, %c0_203] : memref<1x128xf32, #tpu.memory_space<vmem>>, vector<1x128xf32>
    %673 = vector.broadcast %672 : vector<1x128xf32> to vector<32x128xf32>
    %674 = arith.addf %671, %673 : vector<32x128xf32>
    %675 = arith.addf %629, %674 : vector<32x128xf32>
    %c0_204 = arith.constant 0 : index
    %c0_205 = arith.constant 0 : index
    %676 = vector.load %arg4[%c0_204, %c0_205] : memref<32x1xf32, #tpu.memory_space<vmem>>, vector<32x1xf32>
    %677 = vector.broadcast %676 : vector<32x1xf32> to vector<32x128xf32>
    %678 = arith.mulf %675, %677 : vector<32x128xf32>
    %c0_206 = arith.constant 0 : index
    %c0_207 = arith.constant 0 : index
    %679 = vector.load %arg22[%c0_206, %c0_207] : memref<32x128xf32, #tpu.memory_space<vmem>>, vector<32x128xf32>
    tpu.vector_store %arg22[%c0_206, %c0_207], %678 {strides = array<i32>} : memref<32x128xf32, #tpu.memory_space<vmem>>, vector<32x128xf32>,
    return
  }
  func.func @transform_0(%arg0: i32) -> (i32, i32) {
    %c0_i32 = arith.constant 0 : i32
    %c0_i32_0 = arith.constant 0 : i32
    return %arg0, %c0_i32 : i32, i32
  }
  func.func @transform_1(%arg0: i32) -> (i32, i32) {
    %c0_i32 = arith.constant 0 : i32
    %c0_i32_0 = arith.constant 0 : i32
    return %arg0, %c0_i32 : i32, i32
  }
  func.func @transform_2(%arg0: i32) -> (i32, i32) {
    %c0_i32 = arith.constant 0 : i32
    %c0_i32_0 = arith.constant 0 : i32
    return %arg0, %c0_i32 : i32, i32
  }
  func.func @transform_3(%arg0: i32) -> (i32, i32) {
    %c0_i32 = arith.constant 0 : i32
    %c0_i32_0 = arith.constant 0 : i32
    return %arg0, %c0_i32 : i32, i32
  }
  func.func @transform_4(%arg0: i32) -> (i32, i32) {
    %c0_i32 = arith.constant 0 : i32
    %c0_i32_0 = arith.constant 0 : i32
    %c0_i32_1 = arith.constant 0 : i32
    return %c0_i32, %c0_i32_0 : i32, i32
  }
  func.func @transform_5(%arg0: i32) -> (i32, i32) {
    %c0_i32 = arith.constant 0 : i32
    %c0_i32_0 = arith.constant 0 : i32
    %c0_i32_1 = arith.constant 0 : i32
    return %c0_i32, %c0_i32_0 : i32, i32
  }
  func.func @transform_6(%arg0: i32) -> (i32, i32) {
    %c0_i32 = arith.constant 0 : i32
    %c0_i32_0 = arith.constant 0 : i32
    %c0_i32_1 = arith.constant 0 : i32
    return %c0_i32, %c0_i32_0 : i32, i32
  }
  func.func @transform_7(%arg0: i32) -> (i32, i32) {
    %c0_i32 = arith.constant 0 : i32
    %c0_i32_0 = arith.constant 0 : i32
    %c0_i32_1 = arith.constant 0 : i32
    return %c0_i32, %c0_i32_0 : i32, i32
  }
  func.func @transform_8(%arg0: i32) -> (i32, i32) {
    %c0_i32 = arith.constant 0 : i32
    %c0_i32_0 = arith.constant 0 : i32
    %c0_i32_1 = arith.constant 0 : i32
    return %c0_i32, %c0_i32_0 : i32, i32
  }
  func.func @transform_9(%arg0: i32) -> (i32, i32) {
    %c0_i32 = arith.constant 0 : i32
    %c0_i32_0 = arith.constant 0 : i32
    %c0_i32_1 = arith.constant 0 : i32
    return %c0_i32, %c0_i32_0 : i32, i32
  }
  func.func @transform_10(%arg0: i32) -> (i32, i32) {
    %c0_i32 = arith.constant 0 : i32
    %c0_i32_0 = arith.constant 0 : i32
    %c0_i32_1 = arith.constant 0 : i32
    return %c0_i32, %c0_i32_0 : i32, i32
  }
  func.func @transform_11(%arg0: i32) -> (i32, i32) {
    %c0_i32 = arith.constant 0 : i32
    %c0_i32_0 = arith.constant 0 : i32
    %c0_i32_1 = arith.constant 0 : i32
    return %c0_i32, %c0_i32_0 : i32, i32
  }
  func.func @transform_12(%arg0: i32) -> (i32, i32) {
    %c0_i32 = arith.constant 0 : i32
    %c0_i32_0 = arith.constant 0 : i32
    %c0_i32_1 = arith.constant 0 : i32
    return %c0_i32, %c0_i32_0 : i32, i32
  }
  func.func @transform_13(%arg0: i32) -> (i32, i32) {
    %c0_i32 = arith.constant 0 : i32
    %c0_i32_0 = arith.constant 0 : i32
    %c0_i32_1 = arith.constant 0 : i32
    return %c0_i32, %c0_i32_0 : i32, i32
  }
  func.func @transform_14(%arg0: i32) -> (i32, i32) {
    %c0_i32 = arith.constant 0 : i32
    %c0_i32_0 = arith.constant 0 : i32
    %c0_i32_1 = arith.constant 0 : i32
    return %c0_i32, %c0_i32_0 : i32, i32
  }
  func.func @transform_15(%arg0: i32) -> (i32, i32) {
    %c0_i32 = arith.constant 0 : i32
    %c0_i32_0 = arith.constant 0 : i32
    %c0_i32_1 = arith.constant 0 : i32
    return %c0_i32, %c0_i32_0 : i32, i32
  }
  func.func @transform_16(%arg0: i32) -> (i32, i32) {
    %c0_i32 = arith.constant 0 : i32
    %c0_i32_0 = arith.constant 0 : i32
    %c0_i32_1 = arith.constant 0 : i32
    return %c0_i32, %c0_i32_0 : i32, i32
  }
  func.func @transform_17(%arg0: i32) -> (i32, i32) {
    %c0_i32 = arith.constant 0 : i32
    %c0_i32_0 = arith.constant 0 : i32
    %c0_i32_1 = arith.constant 0 : i32
    return %c0_i32, %c0_i32_0 : i32, i32
  }
  func.func @transform_18(%arg0: i32) -> (i32, i32) {
    %c0_i32 = arith.constant 0 : i32
    %c0_i32_0 = arith.constant 0 : i32
    %c0_i32_1 = arith.constant 0 : i32
    return %c0_i32, %c0_i32_0 : i32, i32
  }
  func.func @transform_19(%arg0: i32) -> (i32, i32) {
    %c0_i32 = arith.constant 0 : i32
    %c0_i32_0 = arith.constant 0 : i32
    %c0_i32_1 = arith.constant 0 : i32
    return %c0_i32, %c0_i32_0 : i32, i32
  }
  func.func @transform_20(%arg0: i32) -> (i32, i32) {
    %c0_i32 = arith.constant 0 : i32
    %c0_i32_0 = arith.constant 0 : i32
    %c0_i32_1 = arith.constant 0 : i32
    return %c0_i32, %c0_i32_0 : i32, i32
  }
  func.func @transform_21(%arg0: i32) -> (i32, i32) {
    %c0_i32 = arith.constant 0 : i32
    %c0_i32_0 = arith.constant 0 : i32
    return %arg0, %c0_i32 : i32, i32
  }
}

</mosaic_0001>

<llo_original>
// kernel: tpu_custom_call.1
$region0: #{tpu_custom_call.1}
  #allocation0 [shape = 'u32[]', space=smem, size = 0x4, offset = 0x4, fixed_abs, tag = 'smem constant byte address 0x4 - core index']
  #allocation1 [shape = 'u32[72,128]{1,0:T(1,128)}', space=vmem, size = 0x9000, scoped, tag = 'internal scratch']
  %s0 = inlined_call_operand.vmem [shape: f32[32,128], index: 0, kind: input, shape index: {}]
  %s1 = inlined_call_operand.hbm [shape: f32[32,1024], index: 1, kind: input, shape index: {}]
  %s2 = inlined_call_operand.vmem [shape: f32[32,8], index: 2, kind: input, shape index: {}]
  %s3 = inlined_call_operand.vmem [shape: f32[32,1], index: 3, kind: input, shape index: {}]
  %s4 = inlined_call_operand.vmem [shape: f32[1,128], index: 4, kind: input, shape index: {}]
  %s5 = inlined_call_operand.vmem [shape: f32[1,128], index: 5, kind: input, shape index: {}]
  %s6 = inlined_call_operand.vmem [shape: f32[1,128], index: 6, kind: input, shape index: {}]
  %s7 = inlined_call_operand.vmem [shape: f32[1,128], index: 7, kind: input, shape index: {}]
  %s8 = inlined_call_operand.hbm [shape: f32[128,128], index: 8, kind: input, shape index: {}]
  %s9 = inlined_call_operand.hbm [shape: f32[128,128], index: 9, kind: input, shape index: {}]
  %s10 = inlined_call_operand.vmem [shape: f32[1,128], index: 10, kind: input, shape index: {}]
  %s11 = inlined_call_operand.hbm [shape: f32[128,128], index: 11, kind: input, shape index: {}]
  %s12 = inlined_call_operand.vmem [shape: f32[1,128], index: 12, kind: input, shape index: {}]
  %s13 = inlined_call_operand.hbm [shape: f32[128,128], index: 13, kind: input, shape index: {}]
  %s14 = inlined_call_operand.vmem [shape: f32[1,128], index: 14, kind: input, shape index: {}]
  %s15 = inlined_call_operand.vmem [shape: f32[1,128], index: 15, kind: input, shape index: {}]
  %s16 = inlined_call_operand.vmem [shape: f32[1,128], index: 16, kind: input, shape index: {}]
  %s17 = inlined_call_operand.hbm [shape: f32[128,512], index: 17, kind: input, shape index: {}]
  %s18 = inlined_call_operand.vmem [shape: f32[1,512], index: 18, kind: input, shape index: {}]
  %s19 = inlined_call_operand.hbm [shape: f32[512,128], index: 19, kind: input, shape index: {}]
  %s20 = inlined_call_operand.vmem [shape: f32[1,128], index: 20, kind: input, shape index: {}]
  %s21 = inlined_call_operand.hbm [shape: f32[32,128], index: 21, kind: output, shape index: {}]
  %s22 = sld [smem:[#allocation0]]
  $region122: #{tpu_custom_call.1} parent=0
    _
  %s24 = ssub.s32 1, %s22
  %s25 = scalar_select 0, %s24, %s22
  $region1: #{tpu_custom_call.1} parent=0
    #allocation2 [shape = 'u8[131072]{0}', space=vmem, size = 0x20000, scoped, tag = 'input window, operand 1, single buffered']
    #allocation3 [shape = 's32[1]{0}', space=sflag, size = 0x4, scoped, tag = 'scoped memory for tpu_custom_call.1']
    #allocation4 [shape = 's32[1]{0}', space=sflag, size = 0x4, scoped, tag = 'scoped memory for tpu_custom_call.1']
    #allocation5 [shape = 'u8[65536]{0}', space=vmem, size = 0x10000, scoped, tag = 'input window, operand 8, single buffered']
    #allocation6 [shape = 's32[1]{0}', space=sflag, size = 0x4, scoped, tag = 'scoped memory for tpu_custom_call.1']
    #allocation7 [shape = 'u8[65536]{0}', space=vmem, size = 0x10000, scoped, tag = 'input window, operand 9, single buffered']
    #allocation8 [shape = 'u8[65536]{0}', space=vmem, size = 0x10000, scoped, tag = 'input window, operand 11, single buffered']
    #allocation9 [shape = 's32[1]{0}', space=sflag, size = 0x4, scoped, tag = 'scoped memory for tpu_custom_call.1']
    #allocation10 [shape = 'u8[65536]{0}', space=vmem, size = 0x10000, scoped, tag = 'input window, operand 13, single buffered']
    #allocation11 [shape = 'u8[262144]{0}', space=vmem, size = 0x40000, scoped, tag = 'input window, operand 17, single buffered']
    #allocation12 [shape = 's32[1]{0}', space=sflag, size = 0x4, scoped, tag = 'scoped memory for tpu_custom_call.1']
    #allocation13 [shape = 'u8[262144]{0}', space=vmem, size = 0x40000, scoped, tag = 'input window, operand 19, single buffered']
    #allocation14 [shape = 'u8[16384]{0}', space=vmem, size = 0x4000, scoped, tag = 'output window, operand 0, single buffered']
    %26 = vsyncpa [#allocation3], 0
    %27 = vsyncpa [#allocation6], 0
    %28 = vsyncpa [#allocation9], 0
    %29 = vsyncpa [#allocation12], 0
    %30 = vsyncpa [#allocation4], 0
    // Predicated region
    $region2: #{tpu_custom_call.1} parent=1 // pred_check
      _
    $region3: #{tpu_custom_call.1} parent=1 // pred_check_branch
      %32 = sbr.rel (0) target = $region5
    $region4: #{tpu_custom_call.1} parent=1 // pred_region
      _
    $region5: #{tpu_custom_call.1} parent=1 // pred_fallthru
      _
    // Predicated region
    $region6: #{tpu_custom_call.1} parent=1 // pred_check
      _
    $region7: #{tpu_custom_call.1} parent=1 // pred_check_branch
      %34 = sbr.rel (0) target = $region9
    $region8: #{tpu_custom_call.1} parent=1 // pred_region
      %36 = vsyncadd [#allocation3], 0
      %s37 = sshll.u32 %s1, 4
      %s38 = int_to_ptr.hbm [resolvable:$true] %s37
      %s39 = sshll.u32 [#allocation2], 4
      %s40 = int_to_ptr.vmem [resolvable:$true] %s39
      %45 = dma.hbm_to_vmem [thread:$0]  %s38, 4096, %s40, [#allocation3], 1024, 1024, 64
    $region9: #{tpu_custom_call.1} parent=1 // pred_fallthru
      _
    // Predicated region
    $region10: #{tpu_custom_call.1} parent=1 // pred_check
      _
    $region11: #{tpu_custom_call.1} parent=1 // pred_check_branch
      %47 = sbr.rel (0) target = $region13
    $region12: #{tpu_custom_call.1} parent=1 // pred_region
      _
    $region13: #{tpu_custom_call.1} parent=1 // pred_fallthru
      _
    // Predicated region
    $region14: #{tpu_custom_call.1} parent=1 // pred_check
      _
    $region15: #{tpu_custom_call.1} parent=1 // pred_check_branch
      %49 = sbr.rel (0) target = $region17
    $region16: #{tpu_custom_call.1} parent=1 // pred_region
      _
    $region17: #{tpu_custom_call.1} parent=1 // pred_fallthru
      _
    // Predicated region
    $region18: #{tpu_custom_call.1} parent=1 // pred_check
      _
    $region19: #{tpu_custom_call.1} parent=1 // pred_check_branch
      %51 = sbr.rel (0) target = $region21
    $region20: #{tpu_custom_call.1} parent=1 // pred_region
      _
    $region21: #{tpu_custom_call.1} parent=1 // pred_fallthru
      _
    // Predicated region
    $region22: #{tpu_custom_call.1} parent=1 // pred_check
      _
    $region23: #{tpu_custom_call.1} parent=1 // pred_check_branch
      %53 = sbr.rel (0) target = $region25
    $region24: #{tpu_custom_call.1} parent=1 // pred_region
      _
    $region25: #{tpu_custom_call.1} parent=1 // pred_fallthru
      _
    // Predicated region
    $region26: #{tpu_custom_call.1} parent=1 // pred_check
      _
    $region27: #{tpu_custom_call.1} parent=1 // pred_check_branch
      %55 = sbr.rel (0) target = $region29
    $region28: #{tpu_custom_call.1} parent=1 // pred_region
      _
    $region29: #{tpu_custom_call.1} parent=1 // pred_fallthru
      _
    // Predicated region
    $region30: #{tpu_custom_call.1} parent=1 // pred_check
      _
    $region31: #{tpu_custom_call.1} parent=1 // pred_check_branch
      %57 = sbr.rel (0) target = $region33
    $region32: #{tpu_custom_call.1} parent=1 // pred_region
      _
    $region33: #{tpu_custom_call.1} parent=1 // pred_fallthru
      _
    // Predicated region
    $region34: #{tpu_custom_call.1} parent=1 // pred_check
      _
    $region35: #{tpu_custom_call.1} parent=1 // pred_check_branch
      %59 = sbr.rel (0) target = $region37
    $region36: #{tpu_custom_call.1} parent=1 // pred_region
      %61 = vsyncadd [#allocation6], 0
      %s62 = sshll.u32 %s8, 4
      %s63 = int_to_ptr.hbm [resolvable:$true] %s62
      %s64 = sshll.u32 [#allocation5], 4
      %s65 = int_to_ptr.vmem [resolvable:$true] %s64
      %70 = dma.hbm_to_vmem [thread:$0]  %s63, 2048, %s65, [#allocation6], 128, 128, 8
    $region37: #{tpu_custom_call.1} parent=1 // pred_fallthru
      _
    // Predicated region
    $region38: #{tpu_custom_call.1} parent=1 // pred_check
      _
    $region39: #{tpu_custom_call.1} parent=1 // pred_check_branch
      %72 = sbr.rel (0) target = $region41
    $region40: #{tpu_custom_call.1} parent=1 // pred_region
      %74 = vsyncadd [#allocation6], 0
      %s75 = sshll.u32 %s9, 4
      %s76 = int_to_ptr.hbm [resolvable:$true] %s75
      %s77 = sshll.u32 [#allocation7], 4
      %s78 = int_to_ptr.vmem [resolvable:$true] %s77
      %83 = dma.hbm_to_vmem [thread:$0]  %s76, 2048, %s78, [#allocation6], 128, 128, 8
    $region41: #{tpu_custom_call.1} parent=1 // pred_fallthru
      _
    // Predicated region
    $region42: #{tpu_custom_call.1} parent=1 // pred_check
      _
    $region43: #{tpu_custom_call.1} parent=1 // pred_check_branch
      %85 = sbr.rel (0) target = $region45
    $region44: #{tpu_custom_call.1} parent=1 // pred_region
      _
    $region45: #{tpu_custom_call.1} parent=1 // pred_fallthru
      _
    // Predicated region
    $region46: #{tpu_custom_call.1} parent=1 // pred_check
      _
    $region47: #{tpu_custom_call.1} parent=1 // pred_check_branch
      %87 = sbr.rel (0) target = $region49
    $region48: #{tpu_custom_call.1} parent=1 // pred_region
      %89 = vsyncadd [#allocation9], 0
      %s90 = sshll.u32 %s11, 4
      %s91 = int_to_ptr.hbm [resolvable:$true] %s90
      %s92 = sshll.u32 [#allocation8], 4
      %s93 = int_to_ptr.vmem [resolvable:$true] %s92
      %98 = dma.hbm_to_vmem [thread:$0]  %s91, 2048, %s93, [#allocation9], 128, 128, 8
    $region49: #{tpu_custom_call.1} parent=1 // pred_fallthru
      _
    // Predicated region
    $region50: #{tpu_custom_call.1} parent=1 // pred_check
      _
    $region51: #{tpu_custom_call.1} parent=1 // pred_check_branch
      %100 = sbr.rel (0) target = $region53
    $region52: #{tpu_custom_call.1} parent=1 // pred_region
      _
    $region53: #{tpu_custom_call.1} parent=1 // pred_fallthru
      _
    // Predicated region
    $region54: #{tpu_custom_call.1} parent=1 // pred_check
      _
    $region55: #{tpu_custom_call.1} parent=1 // pred_check_branch
      %102 = sbr.rel (0) target = $region57
    $region56: #{tpu_custom_call.1} parent=1 // pred_region
      %104 = vsyncadd [#allocation9], 0
      %s105 = sshll.u32 %s13, 4
      %s106 = int_to_ptr.hbm [resolvable:$true] %s105
      %s107 = sshll.u32 [#allocation10], 4
      %s108 = int_to_ptr.vmem [resolvable:$true] %s107
      %113 = dma.hbm_to_vmem [thread:$0]  %s106, 2048, %s108, [#allocation9], 128, 128, 8
    $region57: #{tpu_custom_call.1} parent=1 // pred_fallthru
      _
    // Predicated region
    $region58: #{tpu_custom_call.1} parent=1 // pred_check
      _
    $region59: #{tpu_custom_call.1} parent=1 // pred_check_branch
      %115 = sbr.rel (0) target = $region61
    $region60: #{tpu_custom_call.1} parent=1 // pred_region
      _
    $region61: #{tpu_custom_call.1} parent=1 // pred_fallthru
      _
    // Predicated region
    $region62: #{tpu_custom_call.1} parent=1 // pred_check
      _
    $region63: #{tpu_custom_call.1} parent=1 // pred_check_branch
      %117 = sbr.rel (0) target = $region65
    $region64: #{tpu_custom_call.1} parent=1 // pred_region
      _
    $region65: #{tpu_custom_call.1} parent=1 // pred_fallthru
      _
    // Predicated region
    $region66: #{tpu_custom_call.1} parent=1 // pred_check
      _
    $region67: #{tpu_custom_call.1} parent=1 // pred_check_branch
      %119 = sbr.rel (0) target = $region69
    $region68: #{tpu_custom_call.1} parent=1 // pred_region
      _
    $region69: #{tpu_custom_call.1} parent=1 // pred_fallthru
      _
    // Predicated region
    $region70: #{tpu_custom_call.1} parent=1 // pred_check
      _
    $region71: #{tpu_custom_call.1} parent=1 // pred_check_branch
      %121 = sbr.rel (0) target = $region73
    $region72: #{tpu_custom_call.1} parent=1 // pred_region
      %123 = vsyncadd [#allocation12], 0
      %s124 = sshll.u32 %s17, 4
      %s125 = int_to_ptr.hbm [resolvable:$true] %s124
      %s126 = sshll.u32 [#allocation11], 4
      %s127 = int_to_ptr.vmem [resolvable:$true] %s126
      %132 = dma.hbm_to_vmem [thread:$0]  %s125, 8192, %s127, [#allocation12], 512, 512, 32
    $region73: #{tpu_custom_call.1} parent=1 // pred_fallthru
      _
    // Predicated region
    $region74: #{tpu_custom_call.1} parent=1 // pred_check
      _
    $region75: #{tpu_custom_call.1} parent=1 // pred_check_branch
      %134 = sbr.rel (0) target = $region77
    $region76: #{tpu_custom_call.1} parent=1 // pred_region
      _
    $region77: #{tpu_custom_call.1} parent=1 // pred_fallthru
      _
    // Predicated region
    $region78: #{tpu_custom_call.1} parent=1 // pred_check
      _
    $region79: #{tpu_custom_call.1} parent=1 // pred_check_branch
      %136 = sbr.rel (0) target = $region81
    $region80: #{tpu_custom_call.1} parent=1 // pred_region
      %138 = vsyncadd [#allocation12], 0
      %s139 = sshll.u32 %s19, 4
      %s140 = int_to_ptr.hbm [resolvable:$true] %s139
      %s141 = sshll.u32 [#allocation13], 4
      %s142 = int_to_ptr.vmem [resolvable:$true] %s141
      %147 = dma.hbm_to_vmem [thread:$0]  %s140, 8192, %s142, [#allocation12], 128, 128, 8
    $region81: #{tpu_custom_call.1} parent=1 // pred_fallthru
      _
    // Predicated region
    $region82: #{tpu_custom_call.1} parent=1 // pred_check
      _
    $region83: #{tpu_custom_call.1} parent=1 // pred_check_branch
      %149 = sbr.rel (0) target = $region85
    $region84: #{tpu_custom_call.1} parent=1 // pred_region
      _
    $region85: #{tpu_custom_call.1} parent=1 // pred_fallthru
      _
    // Predicated region
    $region86: #{tpu_custom_call.1} parent=1 // pred_check
      _
    $region87: #{tpu_custom_call.1} parent=1 // pred_check_branch
      %151 = sbr.rel (0) target = $region89
    $region88: #{tpu_custom_call.1} parent=1 // pred_region
      %153 = dma.done [#allocation3], 4096
    $region89: #{tpu_custom_call.1} parent=1 // pred_fallthru
      _
    // Predicated region
    $region90: #{tpu_custom_call.1} parent=1 // pred_check
      _
    $region91: #{tpu_custom_call.1} parent=1 // pred_check_branch
      %155 = sbr.rel (0) target = $region93
    $region92: #{tpu_custom_call.1} parent=1 // pred_region
      %157 = dma.done [#allocation6], 2048
    $region93: #{tpu_custom_call.1} parent=1 // pred_fallthru
      _
    // Predicated region
    $region94: #{tpu_custom_call.1} parent=1 // pred_check
      _
    $region95: #{tpu_custom_call.1} parent=1 // pred_check_branch
      %159 = sbr.rel (0) target = $region97
    $region96: #{tpu_custom_call.1} parent=1 // pred_region
      %161 = dma.done [#allocation6], 2048
    $region97: #{tpu_custom_call.1} parent=1 // pred_fallthru
      _
    // Predicated region
    $region98: #{tpu_custom_call.1} parent=1 // pred_check
      _
    $region99: #{tpu_custom_call.1} parent=1 // pred_check_branch
      %163 = sbr.rel (0) target = $region101
    $region100: #{tpu_custom_call.1} parent=1 // pred_region
      %165 = dma.done [#allocation9], 2048
    $region101: #{tpu_custom_call.1} parent=1 // pred_fallthru
      _
    // Predicated region
    $region102: #{tpu_custom_call.1} parent=1 // pred_check
      _
    $region103: #{tpu_custom_call.1} parent=1 // pred_check_branch
      %167 = sbr.rel (0) target = $region105
    $region104: #{tpu_custom_call.1} parent=1 // pred_region
      %169 = dma.done [#allocation9], 2048
    $region105: #{tpu_custom_call.1} parent=1 // pred_fallthru
      _
    // Predicated region
    $region106: #{tpu_custom_call.1} parent=1 // pred_check
      _
    $region107: #{tpu_custom_call.1} parent=1 // pred_check_branch
      %171 = sbr.rel (0) target = $region109
    $region108: #{tpu_custom_call.1} parent=1 // pred_region
      %173 = dma.done [#allocation12], 8192
    $region109: #{tpu_custom_call.1} parent=1 // pred_fallthru
      _
    // Predicated region
    $region110: #{tpu_custom_call.1} parent=1 // pred_check
      _
    $region111: #{tpu_custom_call.1} parent=1 // pred_check_branch
      %175 = sbr.rel (0) target = $region113
    $region112: #{tpu_custom_call.1} parent=1 // pred_region
      %177 = dma.done [#allocation12], 8192
    $region113: #{tpu_custom_call.1} parent=1 // pred_fallthru
      _
    %v178 = vld [vmem:[%s0] sm:$0xff]
    %v179 = vld [vmem:[%s0 + $0x8] sm:$0xff]
    %v180 = vld [vmem:[%s0 + $0x10] sm:$0xff]
    %v181 = vld [vmem:[%s0 + $0x18] sm:$0xff]
    %v182 = vld [vmem:[%s2] sm:$0xff]
    %v183 = vld [vmem:[%s2 + $0x8] sm:$0xff]
    %v184 = vld [vmem:[%s2 + $0x10] sm:$0xff]
    %v185 = vld [vmem:[%s2 + $0x18] sm:$0xff]
    %v186 = vld [vmem:[%s4] sm:$0x1]
    %v187 = vld [vmem:[%s5] sm:$0x1]
    %v188 = vld [vmem:[%s6] sm:$0x1]
    %v189 = vld [vmem:[%s7] sm:$0x1]
    %v190 = vld [vmem:[#allocation5] sm:$0xff]
    %v191 = vld [vmem:[#allocation5 + $0x8] sm:$0xff]
    %v192 = vld [vmem:[#allocation5 + $0x10] sm:$0xff]
    %v193 = vld [vmem:[#allocation5 + $0x18] sm:$0xff]
    %v194 = vld [vmem:[#allocation5 + $0x20] sm:$0xff]
    %v195 = vld [vmem:[#allocation5 + $0x28] sm:$0xff]
    %v196 = vld [vmem:[#allocation5 + $0x30] sm:$0xff]
    %v197 = vld [vmem:[#allocation5 + $0x38] sm:$0xff]
    %v198 = vld [vmem:[#allocation5 + $0x40] sm:$0xff]
    %v199 = vld [vmem:[#allocation5 + $0x48] sm:$0xff]
    %v200 = vld [vmem:[#allocation5 + $0x50] sm:$0xff]
    %v201 = vld [vmem:[#allocation5 + $0x58] sm:$0xff]
    %v202 = vld [vmem:[#allocation5 + $0x60] sm:$0xff]
    %v203 = vld [vmem:[#allocation5 + $0x68] sm:$0xff]
    %v204 = vld [vmem:[#allocation5 + $0x70] sm:$0xff]
    %v205 = vld [vmem:[#allocation5 + $0x78] sm:$0xff]
    %v206 = vld [vmem:[#allocation7] sm:$0xff]
    %v207 = vld [vmem:[#allocation7 + $0x8] sm:$0xff]
    %v208 = vld [vmem:[#allocation7 + $0x10] sm:$0xff]
    %v209 = vld [vmem:[#allocation7 + $0x18] sm:$0xff]
    %v210 = vld [vmem:[#allocation7 + $0x20] sm:$0xff]
    %v211 = vld [vmem:[#allocation7 + $0x28] sm:$0xff]
    %v212 = vld [vmem:[#allocation7 + $0x30] sm:$0xff]
    %v213 = vld [vmem:[#allocation7 + $0x38] sm:$0xff]
    %v214 = vld [vmem:[#allocation7 + $0x40] sm:$0xff]
    %v215 = vld [vmem:[#allocation7 + $0x48] sm:$0xff]
    %v216 = vld [vmem:[#allocation7 + $0x50] sm:$0xff]
    %v217 = vld [vmem:[#allocation7 + $0x58] sm:$0xff]
    %v218 = vld [vmem:[#allocation7 + $0x60] sm:$0xff]
    %v219 = vld [vmem:[#allocation7 + $0x68] sm:$0xff]
    %v220 = vld [vmem:[#allocation7 + $0x70] sm:$0xff]
    %v221 = vld [vmem:[#allocation7 + $0x78] sm:$0xff]
    %v222 = vld [vmem:[%s10] sm:$0x1]
    %v223 = vld [vmem:[#allocation8] sm:$0xff]
    %v224 = vld [vmem:[#allocation8 + $0x8] sm:$0xff]
    %v225 = vld [vmem:[#allocation8 + $0x10] sm:$0xff]
    %v226 = vld [vmem:[#allocation8 + $0x18] sm:$0xff]
    %v227 = vld [vmem:[#allocation8 + $0x20] sm:$0xff]
    %v228 = vld [vmem:[#allocation8 + $0x28] sm:$0xff]
    %v229 = vld [vmem:[#allocation8 + $0x30] sm:$0xff]
    %v230 = vld [vmem:[#allocation8 + $0x38] sm:$0xff]
    %v231 = vld [vmem:[#allocation8 + $0x40] sm:$0xff]
    %v232 = vld [vmem:[#allocation8 + $0x48] sm:$0xff]
    %v233 = vld [vmem:[#allocation8 + $0x50] sm:$0xff]
    %v234 = vld [vmem:[#allocation8 + $0x58] sm:$0xff]
    %v235 = vld [vmem:[#allocation8 + $0x60] sm:$0xff]
    %v236 = vld [vmem:[#allocation8 + $0x68] sm:$0xff]
    %v237 = vld [vmem:[#allocation8 + $0x70] sm:$0xff]
    %v238 = vld [vmem:[#allocation8 + $0x78] sm:$0xff]
    %v239 = vld [vmem:[%s12] sm:$0x1]
    %v240 = vld [vmem:[#allocation10] sm:$0xff]
    %v241 = vld [vmem:[#allocation10 + $0x8] sm:$0xff]
    %v242 = vld [vmem:[#allocation10 + $0x10] sm:$0xff]
    %v243 = vld [vmem:[#allocation10 + $0x18] sm:$0xff]
    %v244 = vld [vmem:[#allocation10 + $0x20] sm:$0xff]
    %v245 = vld [vmem:[#allocation10 + $0x28] sm:$0xff]
    %v246 = vld [vmem:[#allocation10 + $0x30] sm:$0xff]
    %v247 = vld [vmem:[#allocation10 + $0x38] sm:$0xff]
    %v248 = vld [vmem:[#allocation10 + $0x40] sm:$0xff]
    %v249 = vld [vmem:[#allocation10 + $0x48] sm:$0xff]
    %v250 = vld [vmem:[#allocation10 + $0x50] sm:$0xff]
    %v251 = vld [vmem:[#allocation10 + $0x58] sm:$0xff]
    %v252 = vld [vmem:[#allocation10 + $0x60] sm:$0xff]
    %v253 = vld [vmem:[#allocation10 + $0x68] sm:$0xff]
    %v254 = vld [vmem:[#allocation10 + $0x70] sm:$0xff]
    %v255 = vld [vmem:[#allocation10 + $0x78] sm:$0xff]
    %v256 = vld [vmem:[%s14] sm:$0x1]
    %257 = vadd.xlane.f32.xlu0 %v178
    %v258 = vpop.xlane.xlu0 %257
    %259 = vadd.xlane.f32.xlu0 %v179
    %v260 = vpop.xlane.xlu0 %259
    %261 = vadd.xlane.f32.xlu0 %v180
    %v262 = vpop.xlane.xlu0 %261
    %263 = vadd.xlane.f32.xlu0 %v181
    %v264 = vpop.xlane.xlu0 %263
    %v265 = vmul.f32 %v178, %v178
    %v266 = vmul.f32 %v179, %v179
    %v267 = vmul.f32 %v180, %v180
    %v268 = vmul.f32 %v181, %v181
    %269 = vadd.xlane.f32.xlu0 %v265
    %v270 = vpop.xlane.xlu0 %269
    %271 = vadd.xlane.f32.xlu0 %v266
    %v272 = vpop.xlane.xlu0 %271
    %273 = vadd.xlane.f32.xlu0 %v267
    %v274 = vpop.xlane.xlu0 %273
    %275 = vadd.xlane.f32.xlu0 %v268
    %v276 = vpop.xlane.xlu0 %275
    %v277 = vld [vmem:[#allocation2] sm:$0xff]
    %v278 = vld [vmem:[#allocation2 + $0x40] sm:$0xff]
    %v279 = vld [vmem:[#allocation2 + $0x80] sm:$0xff]
    %v280 = vld [vmem:[#allocation2 + $0xc0] sm:$0xff]
    %281 = vadd.xlane.f32.xlu0 %v277
    %v282 = vpop.xlane.xlu0 %281
    %283 = vadd.xlane.f32.xlu0 %v278
    %v284 = vpop.xlane.xlu0 %283
    %285 = vadd.xlane.f32.xlu0 %v279
    %v286 = vpop.xlane.xlu0 %285
    %287 = vadd.xlane.f32.xlu0 %v280
    %v288 = vpop.xlane.xlu0 %287
    %v289 = vmul.f32 %v277, %v277
    %v290 = vmul.f32 %v278, %v278
    %v291 = vmul.f32 %v279, %v279
    %v292 = vmul.f32 %v280, %v280
    %293 = vadd.xlane.f32.xlu0 %v289
    %v294 = vpop.xlane.xlu0 %293
    %295 = vadd.xlane.f32.xlu0 %v290
    %v296 = vpop.xlane.xlu0 %295
    %297 = vadd.xlane.f32.xlu0 %v291
    %v298 = vpop.xlane.xlu0 %297
    %299 = vadd.xlane.f32.xlu0 %v292
    %v300 = vpop.xlane.xlu0 %299
    %v301 = vadd.f32 %v258, %v282
    %v302 = vadd.f32 %v260, %v284
    %v303 = vadd.f32 %v262, %v286
    %v304 = vadd.f32 %v264, %v288
    %v305 = vmul.f32 %v301, 0.00390625
    %v306 = vmul.f32 %v302, 0.00390625
    %v307 = vmul.f32 %v303, 0.00390625
    %v308 = vmul.f32 %v304, 0.00390625
    %v309 = vadd.f32 %v270, %v294
    %v310 = vadd.f32 %v272, %v296
    %v311 = vadd.f32 %v274, %v298
    %v312 = vadd.f32 %v276, %v300
    %v313 = vmul.f32 %v309, 0.00390625
    %v314 = vmul.f32 %v310, 0.00390625
    %v315 = vmul.f32 %v311, 0.00390625
    %v316 = vmul.f32 %v312, 0.00390625
    %v317 = vmul.f32 %v305, %v305
    %v318 = vmul.f32 %v306, %v306
    %v319 = vmul.f32 %v307, %v307
    %v320 = vmul.f32 %v308, %v308
    %v321 = vsub.f32 %v313, %v317
    %v322 = vsub.f32 %v314, %v318
    %v323 = vsub.f32 %v315, %v319
    %v324 = vsub.f32 %v316, %v320
    %v325 = vmax.f32 %v321, 0.0
    %v326 = vmax.f32 %v322, 0.0
    %v327 = vmax.f32 %v323, 0.0
    %v328 = vmax.f32 %v324, 0.0
    %v329 = vadd.f32 %v325, 1e-05
    %v330 = vadd.f32 %v326, 1e-05
    %v331 = vadd.f32 %v327, 1e-05
    %v332 = vadd.f32 %v328, 1e-05
    %v333 = vrsqrt.pop %v329
    %v334 = vmul.f32 %v333, %v329
    %v335 = vmul.f32 %v334, %v333
    %v336 = vmul.f32 0.5, %v335
    %v337 = vsub.f32 1.5, %v336
    %v338 = vmul.f32 %v333, %v337
    %vm339 = vweird.f32 %v329
    %vm340 = vweird.f32 %v333
    %vm341 = vmor %vm339, %vm340
    %v342 = vsel %vm341, %v333, %v338
    %v343 = vrsqrt.pop %v330
    %v344 = vmul.f32 %v343, %v330
    %v345 = vmul.f32 %v344, %v343
    %v346 = vmul.f32 0.5, %v345
    %v347 = vsub.f32 1.5, %v346
    %v348 = vmul.f32 %v343, %v347
    %vm349 = vweird.f32 %v330
    %vm350 = vweird.f32 %v343
    %vm351 = vmor %vm349, %vm350
    %v352 = vsel %vm351, %v343, %v348
    %v353 = vrsqrt.pop %v331
    %v354 = vmul.f32 %v353, %v331
    %v355 = vmul.f32 %v354, %v353
    %v356 = vmul.f32 0.5, %v355
    %v357 = vsub.f32 1.5, %v356
    %v358 = vmul.f32 %v353, %v357
    %vm359 = vweird.f32 %v331
    %vm360 = vweird.f32 %v353
    %vm361 = vmor %vm359, %vm360
    %v362 = vsel %vm361, %v353, %v358
    %v363 = vrsqrt.pop %v332
    %v364 = vmul.f32 %v363, %v332
    %v365 = vmul.f32 %v364, %v363
    %v366 = vmul.f32 0.5, %v365
    %v367 = vsub.f32 1.5, %v366
    %v368 = vmul.f32 %v363, %v367
    %vm369 = vweird.f32 %v332
    %vm370 = vweird.f32 %v363
    %vm371 = vmor %vm369, %vm370
    %v372 = vsel %vm371, %v363, %v368
    %v373 = vsub.f32 %v178, %v305
    %v374 = vsub.f32 %v179, %v306
    %v375 = vsub.f32 %v180, %v307
    %v376 = vsub.f32 %v181, %v308
    %v377 = vmul.f32 %v373, %v342
    %v378 = vmul.f32 %v374, %v352
    %v379 = vmul.f32 %v375, %v362
    %v380 = vmul.f32 %v376, %v372
    %v382 = vperm.slane %v186, 0
    %v384 = vmul.f32 %v377, %v382
    %v385 = vmul.f32 %v378, %v382
    %v386 = vmul.f32 %v379, %v382
    %v387 = vmul.f32 %v380, %v382
    %v389 = vperm.slane %v187, 0
    %v391 = vadd.f32 %v384, %v389
    %v392 = vadd.f32 %v385, %v389
    %v393 = vadd.f32 %v386, %v389
    %v394 = vadd.f32 %v387, %v389
    %v395 = vsub.f32 %v277, %v305
    %v396 = vsub.f32 %v278, %v306
    %v397 = vsub.f32 %v279, %v307
    %v398 = vsub.f32 %v280, %v308
    %v399 = vmul.f32 %v395, %v342
    %v400 = vmul.f32 %v396, %v352
    %v401 = vmul.f32 %v397, %v362
    %v402 = vmul.f32 %v398, %v372
    %v404 = vperm.slane %v188, 0
    %v406 = vmul.f32 %v399, %v404
    %v407 = vmul.f32 %v400, %v404
    %v408 = vmul.f32 %v401, %v404
    %v409 = vmul.f32 %v402, %v404
    %v411 = vperm.slane %v189, 0
    %v413 = vadd.f32 %v406, %v411
    %v414 = vadd.f32 %v407, %v411
    %v415 = vadd.f32 %v408, %v411
    %v416 = vadd.f32 %v409, %v411
    %417 = vmatpush.msra.mxu0 %v221
    %418 = vmatpush.msra.mxu0 %v220
    %419 = vmatpush.msra.mxu0 %v219
    %420 = vmatpush.msra.mxu0 %v218
    %421 = vmatpush.msra.mxu0 %v217
    %422 = vmatpush.msra.mxu0 %v216
    %423 = vmatpush.msra.mxu0 %v215
    %424 = vmatpush.msra.mxu0 %v214
    %425 = vmatpush.msra.mxu0 %v213
    %426 = vmatpush.msra.mxu0 %v212
    %427 = vmatpush.msra.mxu0 %v211
    %428 = vmatpush.msra.mxu0 %v210
    %429 = vmatpush.msra.mxu0 %v209
    %430 = vmatpush.msra.mxu0 %v208
    %431 = vmatpush.msra.mxu0 %v207
    %432 = vmatpush.msra.mxu0 %v206
    %433 = vmatmul.f32.gmra.mxu0 %v413
    %v434 = vpop.f32.mrf.mxu0
    %v435 = vadd.f32 0.0, %v434
    %436 = vmatmul.f32.gmra.mxu0 %v414
    %v437 = vpop.f32.mrf.mxu0
    %v438 = vadd.f32 0.0, %v437
    %439 = vmatmul.f32.gmra.mxu0 %v415
    %v440 = vpop.f32.mrf.mxu0
    %v441 = vadd.f32 0.0, %v440
    %442 = vmatmul.f32.gmra.mxu0 %v416
    %v443 = vpop.f32.mrf.mxu0
    %v444 = vadd.f32 0.0, %v443
    %445 = vdwg.mxu0
    %446 = vmatpush.msra.mxu0 %v205
    %447 = vmatpush.msra.mxu0 %v204
    %448 = vmatpush.msra.mxu0 %v203
    %449 = vmatpush.msra.mxu0 %v202
    %450 = vmatpush.msra.mxu0 %v201
    %451 = vmatpush.msra.mxu0 %v200
    %452 = vmatpush.msra.mxu0 %v199
    %453 = vmatpush.msra.mxu0 %v198
    %454 = vmatpush.msra.mxu0 %v197
    %455 = vmatpush.msra.mxu0 %v196
    %456 = vmatpush.msra.mxu0 %v195
    %457 = vmatpush.msra.mxu0 %v194
    %458 = vmatpush.msra.mxu0 %v193
    %459 = vmatpush.msra.mxu0 %v192
    %460 = vmatpush.msra.mxu0 %v191
    %461 = vmatpush.msra.mxu0 %v190
    %462 = vmatmul.f32.gmra.mxu0 %v391
    %v463 = vpop.f32.mrf.mxu0
    %v464 = vadd.f32 %v435, %v463
    %465 = vmatmul.f32.gmra.mxu0 %v392
    %v466 = vpop.f32.mrf.mxu0
    %v467 = vadd.f32 %v438, %v466
    %468 = vmatmul.f32.gmra.mxu0 %v393
    %v469 = vpop.f32.mrf.mxu0
    %v470 = vadd.f32 %v441, %v469
    %471 = vmatmul.f32.gmra.mxu0 %v394
    %v472 = vpop.f32.mrf.mxu0
    %v473 = vadd.f32 %v444, %v472
    %474 = vdwg.mxu0
    %v476 = vperm.slane %v222, 0
    %v478 = vadd.f32 %v464, %v476
    %v479 = vadd.f32 %v467, %v476
    %v480 = vadd.f32 %v470, %v476
    %v481 = vadd.f32 %v473, %v476
    %v482 = vmul.f32 %v478, 0.5
    %v483 = vmul.f32 %v479, 0.5
    %v484 = vmul.f32 %v480, 0.5
    %v485 = vmul.f32 %v481, 0.5
    %v486 = vmul.f32 %v478, %v478
    %v487 = vmul.f32 %v479, %v479
    %v488 = vmul.f32 %v480, %v480
    %v489 = vmul.f32 %v481, %v481
    %v490 = vmul.f32 %v486, %v478
    %v491 = vmul.f32 %v487, %v479
    %v492 = vmul.f32 %v488, %v480
    %v493 = vmul.f32 %v489, %v481
    %v494 = vmul.f32 %v490, 0.044715
    %v495 = vmul.f32 %v491, 0.044715
    %v496 = vmul.f32 %v492, 0.044715
    %v497 = vmul.f32 %v493, 0.044715
    %v498 = vadd.f32 %v478, %v494
    %v499 = vadd.f32 %v479, %v495
    %v500 = vadd.f32 %v480, %v496
    %v501 = vadd.f32 %v481, %v497
    %v502 = vmul.f32 %v498, 0.7978846
    %v503 = vmul.f32 %v499, 0.7978846
    %v504 = vmul.f32 %v500, 0.7978846
    %v505 = vmul.f32 %v501, 0.7978846
    %v506 = vtanh.pop %v502
    %v507 = vtanh.pop %v503
    %v508 = vtanh.pop %v504
    %v509 = vtanh.pop %v505
    %v510 = vadd.f32 %v506, 1.0
    %v511 = vadd.f32 %v507, 1.0
    %v512 = vadd.f32 %v508, 1.0
    %v513 = vadd.f32 %v509, 1.0
    %v514 = vmul.f32 %v482, %v510
    %v515 = vmul.f32 %v483, %v511
    %v516 = vmul.f32 %v484, %v512
    %v517 = vmul.f32 %v485, %v513
    %v519 = vperm.slane %v239, 0
    %521 = vmatpush.msra.mxu0 %v238
    %522 = vmatpush.msra.mxu0 %v237
    %523 = vmatpush.msra.mxu0 %v236
    %524 = vmatpush.msra.mxu0 %v235
    %525 = vmatpush.msra.mxu0 %v234
    %526 = vmatpush.msra.mxu0 %v233
    %527 = vmatpush.msra.mxu0 %v232
    %528 = vmatpush.msra.mxu0 %v231
    %529 = vmatpush.msra.mxu0 %v230
    %530 = vmatpush.msra.mxu0 %v229
    %531 = vmatpush.msra.mxu0 %v228
    %532 = vmatpush.msra.mxu0 %v227
    %533 = vmatpush.msra.mxu0 %v226
    %534 = vmatpush.msra.mxu0 %v225
    %535 = vmatpush.msra.mxu0 %v224
    %536 = vmatpush.msra.mxu0 %v223
    %537 = vmatmul.f32.gmra.mxu0 %v514
    %v538 = vpop.f32.mrf.mxu0
    %v539 = vadd.f32 %v519, %v538
    %540 = vmatmul.f32.gmra.mxu0 %v515
    %v541 = vpop.f32.mrf.mxu0
    %v542 = vadd.f32 %v519, %v541
    %543 = vmatmul.f32.gmra.mxu0 %v516
    %v544 = vpop.f32.mrf.mxu0
    %v545 = vadd.f32 %v519, %v544
    %546 = vmatmul.f32.gmra.mxu0 %v517
    %v547 = vpop.f32.mrf.mxu0
    %v548 = vadd.f32 %v519, %v547
    %549 = vdwg.mxu0
    %v550 = vmul.f32 %v539, 0.5
    %v551 = vmul.f32 %v542, 0.5
    %v552 = vmul.f32 %v545, 0.5
    %v553 = vmul.f32 %v548, 0.5
    %v554 = vmul.f32 %v539, %v539
    %v555 = vmul.f32 %v542, %v542
    %v556 = vmul.f32 %v545, %v545
    %v557 = vmul.f32 %v548, %v548
    %v558 = vmul.f32 %v554, %v539
    %v559 = vmul.f32 %v555, %v542
    %v560 = vmul.f32 %v556, %v545
    %v561 = vmul.f32 %v557, %v548
    %v562 = vmul.f32 %v558, 0.044715
    %v563 = vmul.f32 %v559, 0.044715
    %v564 = vmul.f32 %v560, 0.044715
    %v565 = vmul.f32 %v561, 0.044715
    %v566 = vadd.f32 %v539, %v562
    %v567 = vadd.f32 %v542, %v563
    %v568 = vadd.f32 %v545, %v564
    %v569 = vadd.f32 %v548, %v565
    %v570 = vmul.f32 %v566, 0.7978846
    %v571 = vmul.f32 %v567, 0.7978846
    %v572 = vmul.f32 %v568, 0.7978846
    %v573 = vmul.f32 %v569, 0.7978846
    %v574 = vtanh.pop %v570
    %v575 = vtanh.pop %v571
    %v576 = vtanh.pop %v572
    %v577 = vtanh.pop %v573
    %v578 = vadd.f32 %v574, 1.0
    %v579 = vadd.f32 %v575, 1.0
    %v580 = vadd.f32 %v576, 1.0
    %v581 = vadd.f32 %v577, 1.0
    %v582 = vmul.f32 %v550, %v578
    %v583 = vmul.f32 %v551, %v579
    %v584 = vmul.f32 %v552, %v580
    %v585 = vmul.f32 %v553, %v581
    %v587 = vperm.slane %v256, 0
    %589 = vmatpush.msra.mxu0 %v255
    %590 = vmatpush.msra.mxu0 %v254
    %591 = vmatpush.msra.mxu0 %v253
    %592 = vmatpush.msra.mxu0 %v252
    %593 = vmatpush.msra.mxu0 %v251
    %594 = vmatpush.msra.mxu0 %v250
    %595 = vmatpush.msra.mxu0 %v249
    %596 = vmatpush.msra.mxu0 %v248
    %597 = vmatpush.msra.mxu0 %v247
    %598 = vmatpush.msra.mxu0 %v246
    %599 = vmatpush.msra.mxu0 %v245
    %600 = vmatpush.msra.mxu0 %v244
    %601 = vmatpush.msra.mxu0 %v243
    %602 = vmatpush.msra.mxu0 %v242
    %603 = vmatpush.msra.mxu0 %v241
    %604 = vmatpush.msra.mxu0 %v240
    %605 = vmatmul.f32.gmra.mxu0 %v582
    %v606 = vpop.f32.mrf.mxu0
    %v607 = vadd.f32 %v587, %v606
    %608 = vmatmul.f32.gmra.mxu0 %v583
    %v609 = vpop.f32.mrf.mxu0
    %v610 = vadd.f32 %v587, %v609
    %611 = vmatmul.f32.gmra.mxu0 %v584
    %v612 = vpop.f32.mrf.mxu0
    %v613 = vadd.f32 %v587, %v612
    %614 = vmatmul.f32.gmra.mxu0 %v585
    %v615 = vpop.f32.mrf.mxu0
    %v616 = vadd.f32 %v587, %v615
    %617 = vdwg.mxu0
    %619 = vset.pattern.permute.xlu0 0
    %620 = vperm.xlu0 %619, %v182
    %v621 = vpop.permute.xlu0 %620
    %624 = vset.pattern.permute.xlu0 0
    %625 = vperm.xlu0 %624, %v183
    %v626 = vpop.permute.xlu0 %625
    %629 = vset.pattern.permute.xlu0 0
    %630 = vperm.xlu0 %629, %v184
    %v631 = vpop.permute.xlu0 %630
    %634 = vset.pattern.permute.xlu0 0
    %635 = vperm.xlu0 %634, %v185
    %v636 = vpop.permute.xlu0 %635
    %v638 = vmul.f32 %v621, %v607
    %v639 = vmul.f32 %v626, %v610
    %v640 = vmul.f32 %v631, %v613
    %v641 = vmul.f32 %v636, %v616
    %v642 = vadd.f32 %v638, 0.0
    %v643 = vadd.f32 %v639, 0.0
    %v644 = vadd.f32 %v640, 0.0
    %v645 = vadd.f32 %v641, 0.0
    %v646 = vld [vmem:[#allocation2 + $0x8] sm:$0xff]
    %v647 = vld [vmem:[#allocation2 + $0x48] sm:$0xff]
    %v648 = vld [vmem:[#allocation2 + $0x88] sm:$0xff]
    %v649 = vld [vmem:[#allocation2 + $0xc8] sm:$0xff]
    %650 = vadd.xlane.f32.xlu0 %v646
    %v651 = vpop.xlane.xlu0 %650
    %652 = vadd.xlane.f32.xlu0 %v647
    %v653 = vpop.xlane.xlu0 %652
    %654 = vadd.xlane.f32.xlu0 %v648
    %v655 = vpop.xlane.xlu0 %654
    %656 = vadd.xlane.f32.xlu0 %v649
    %v657 = vpop.xlane.xlu0 %656
    %v658 = vmul.f32 %v646, %v646
    %v659 = vmul.f32 %v647, %v647
    %v660 = vmul.f32 %v648, %v648
    %v661 = vmul.f32 %v649, %v649
    %662 = vadd.xlane.f32.xlu0 %v658
    %v663 = vpop.xlane.xlu0 %662
    %664 = vadd.xlane.f32.xlu0 %v659
    %v665 = vpop.xlane.xlu0 %664
    %666 = vadd.xlane.f32.xlu0 %v660
    %v667 = vpop.xlane.xlu0 %666
    %668 = vadd.xlane.f32.xlu0 %v661
    %v669 = vpop.xlane.xlu0 %668
    %v670 = vadd.f32 %v258, %v651
    %v671 = vadd.f32 %v260, %v653
    %v672 = vadd.f32 %v262, %v655
    %v673 = vadd.f32 %v264, %v657
    %v674 = vmul.f32 %v670, 0.00390625
    %v675 = vmul.f32 %v671, 0.00390625
    %v676 = vmul.f32 %v672, 0.00390625
    %v677 = vmul.f32 %v673, 0.00390625
    %v678 = vadd.f32 %v270, %v663
    %v679 = vadd.f32 %v272, %v665
    %v680 = vadd.f32 %v274, %v667
    %v681 = vadd.f32 %v276, %v669
    %v682 = vmul.f32 %v678, 0.00390625
    %v683 = vmul.f32 %v679, 0.00390625
    %v684 = vmul.f32 %v680, 0.00390625
    %v685 = vmul.f32 %v681, 0.00390625
    %v686 = vmul.f32 %v674, %v674
    %v687 = vmul.f32 %v675, %v675
    %v688 = vmul.f32 %v676, %v676
    %v689 = vmul.f32 %v677, %v677
    %v690 = vsub.f32 %v682, %v686
    %v691 = vsub.f32 %v683, %v687
    %v692 = vsub.f32 %v684, %v688
    %v693 = vsub.f32 %v685, %v689
    %v694 = vmax.f32 %v690, 0.0
    %v695 = vmax.f32 %v691, 0.0
    %v696 = vmax.f32 %v692, 0.0
    %v697 = vmax.f32 %v693, 0.0
    %v698 = vadd.f32 %v694, 1e-05
    %v699 = vadd.f32 %v695, 1e-05
    %v700 = vadd.f32 %v696, 1e-05
    %v701 = vadd.f32 %v697, 1e-05
    %v702 = vrsqrt.pop %v698
    %v703 = vmul.f32 %v702, %v698
    %v704 = vmul.f32 %v703, %v702
    %v705 = vmul.f32 0.5, %v704
    %v706 = vsub.f32 1.5, %v705
    %v707 = vmul.f32 %v702, %v706
    %vm708 = vweird.f32 %v698
    %vm709 = vweird.f32 %v702
    %vm710 = vmor %vm708, %vm709
    %v711 = vsel %vm710, %v702, %v707
    %v712 = vrsqrt.pop %v699
    %v713 = vmul.f32 %v712, %v699
    %v714 = vmul.f32 %v713, %v712
    %v715 = vmul.f32 0.5, %v714
    %v716 = vsub.f32 1.5, %v715
    %v717 = vmul.f32 %v712, %v716
    %vm718 = vweird.f32 %v699
    %vm719 = vweird.f32 %v712
    %vm720 = vmor %vm718, %vm719
    %v721 = vsel %vm720, %v712, %v717
    %v722 = vrsqrt.pop %v700
    %v723 = vmul.f32 %v722, %v700
    %v724 = vmul.f32 %v723, %v722
    %v725 = vmul.f32 0.5, %v724
    %v726 = vsub.f32 1.5, %v725
    %v727 = vmul.f32 %v722, %v726
    %vm728 = vweird.f32 %v700
    %vm729 = vweird.f32 %v722
    %vm730 = vmor %vm728, %vm729
    %v731 = vsel %vm730, %v722, %v727
    %v732 = vrsqrt.pop %v701
    %v733 = vmul.f32 %v732, %v701
    %v734 = vmul.f32 %v733, %v732
    %v735 = vmul.f32 0.5, %v734
    %v736 = vsub.f32 1.5, %v735
    %v737 = vmul.f32 %v732, %v736
    %vm738 = vweird.f32 %v701
    %vm739 = vweird.f32 %v732
    %vm740 = vmor %vm738, %vm739
    %v741 = vsel %vm740, %v732, %v737
    %v742 = vsub.f32 %v178, %v674
    %v743 = vsub.f32 %v179, %v675
    %v744 = vsub.f32 %v180, %v676
    %v745 = vsub.f32 %v181, %v677
    %v746 = vmul.f32 %v742, %v711
    %v747 = vmul.f32 %v743, %v721
    %v748 = vmul.f32 %v744, %v731
    %v749 = vmul.f32 %v745, %v741
    %v750 = vmul.f32 %v746, %v382
    %v751 = vmul.f32 %v747, %v382
    %v752 = vmul.f32 %v748, %v382
    %v753 = vmul.f32 %v749, %v382
    %v754 = vadd.f32 %v750, %v389
    %v755 = vadd.f32 %v751, %v389
    %v756 = vadd.f32 %v752, %v389
    %v757 = vadd.f32 %v753, %v389
    %v758 = vsub.f32 %v646, %v674
    %v759 = vsub.f32 %v647, %v675
    %v760 = vsub.f32 %v648, %v676
    %v761 = vsub.f32 %v649, %v677
    %v762 = vmul.f32 %v758, %v711
    %v763 = vmul.f32 %v759, %v721
    %v764 = vmul.f32 %v760, %v731
    %v765 = vmul.f32 %v761, %v741
    %v766 = vmul.f32 %v762, %v404
    %v767 = vmul.f32 %v763, %v404
    %v768 = vmul.f32 %v764, %v404
    %v769 = vmul.f32 %v765, %v404
    %v770 = vadd.f32 %v766, %v411
    %v771 = vadd.f32 %v767, %v411
    %v772 = vadd.f32 %v768, %v411
    %v773 = vadd.f32 %v769, %v411
    %774 = vmatpush.msra.mxu0 %v221
    %775 = vmatpush.msra.mxu0 %v220
    %776 = vmatpush.msra.mxu0 %v219
    %777 = vmatpush.msra.mxu0 %v218
    %778 = vmatpush.msra.mxu0 %v217
    %779 = vmatpush.msra.mxu0 %v216
    %780 = vmatpush.msra.mxu0 %v215
    %781 = vmatpush.msra.mxu0 %v214
    %782 = vmatpush.msra.mxu0 %v213
    %783 = vmatpush.msra.mxu0 %v212
    %784 = vmatpush.msra.mxu0 %v211
    %785 = vmatpush.msra.mxu0 %v210
    %786 = vmatpush.msra.mxu0 %v209
    %787 = vmatpush.msra.mxu0 %v208
    %788 = vmatpush.msra.mxu0 %v207
    %789 = vmatpush.msra.mxu0 %v206
    %790 = vmatmul.f32.gmra.mxu0 %v770
    %v791 = vpop.f32.mrf.mxu0
    %v792 = vadd.f32 0.0, %v791
    %793 = vmatmul.f32.gmra.mxu0 %v771
    %v794 = vpop.f32.mrf.mxu0
    %v795 = vadd.f32 0.0, %v794
    %796 = vmatmul.f32.gmra.mxu0 %v772
    %v797 = vpop.f32.mrf.mxu0
    %v798 = vadd.f32 0.0, %v797
    %799 = vmatmul.f32.gmra.mxu0 %v773
    %v800 = vpop.f32.mrf.mxu0
    %v801 = vadd.f32 0.0, %v800
    %802 = vdwg.mxu0
    %803 = vmatpush.msra.mxu0 %v205
    %804 = vmatpush.msra.mxu0 %v204
    %805 = vmatpush.msra.mxu0 %v203
    %806 = vmatpush.msra.mxu0 %v202
    %807 = vmatpush.msra.mxu0 %v201
    %808 = vmatpush.msra.mxu0 %v200
    %809 = vmatpush.msra.mxu0 %v199
    %810 = vmatpush.msra.mxu0 %v198
    %811 = vmatpush.msra.mxu0 %v197
    %812 = vmatpush.msra.mxu0 %v196
    %813 = vmatpush.msra.mxu0 %v195
    %814 = vmatpush.msra.mxu0 %v194
    %815 = vmatpush.msra.mxu0 %v193
    %816 = vmatpush.msra.mxu0 %v192
    %817 = vmatpush.msra.mxu0 %v191
    %818 = vmatpush.msra.mxu0 %v190
    %819 = vmatmul.f32.gmra.mxu0 %v754
    %v820 = vpop.f32.mrf.mxu0
    %v821 = vadd.f32 %v792, %v820
    %822 = vmatmul.f32.gmra.mxu0 %v755
    %v823 = vpop.f32.mrf.mxu0
    %v824 = vadd.f32 %v795, %v823
    %825 = vmatmul.f32.gmra.mxu0 %v756
    %v826 = vpop.f32.mrf.mxu0
    %v827 = vadd.f32 %v798, %v826
    %828 = vmatmul.f32.gmra.mxu0 %v757
    %v829 = vpop.f32.mrf.mxu0
    %v830 = vadd.f32 %v801, %v829
    %831 = vdwg.mxu0
    %v832 = vadd.f32 %v821, %v476
    %v833 = vadd.f32 %v824, %v476
    %v834 = vadd.f32 %v827, %v476
    %v835 = vadd.f32 %v830, %v476
    %v836 = vmul.f32 %v832, 0.5
    %v837 = vmul.f32 %v833, 0.5
    %v838 = vmul.f32 %v834, 0.5
    %v839 = vmul.f32 %v835, 0.5
    %v840 = vmul.f32 %v832, %v832
    %v841 = vmul.f32 %v833, %v833
    %v842 = vmul.f32 %v834, %v834
    %v843 = vmul.f32 %v835, %v835
    %v844 = vmul.f32 %v840, %v832
    %v845 = vmul.f32 %v841, %v833
    %v846 = vmul.f32 %v842, %v834
    %v847 = vmul.f32 %v843, %v835
    %v848 = vmul.f32 %v844, 0.044715
    %v849 = vmul.f32 %v845, 0.044715
    %v850 = vmul.f32 %v846, 0.044715
    %v851 = vmul.f32 %v847, 0.044715
    %v852 = vadd.f32 %v832, %v848
    %v853 = vadd.f32 %v833, %v849
    %v854 = vadd.f32 %v834, %v850
    %v855 = vadd.f32 %v835, %v851
    %v856 = vmul.f32 %v852, 0.7978846
    %v857 = vmul.f32 %v853, 0.7978846
    %v858 = vmul.f32 %v854, 0.7978846
    %v859 = vmul.f32 %v855, 0.7978846
    %v860 = vtanh.pop %v856
    %v861 = vtanh.pop %v857
    %v862 = vtanh.pop %v858
    %v863 = vtanh.pop %v859
    %v864 = vadd.f32 %v860, 1.0
    %v865 = vadd.f32 %v861, 1.0
    %v866 = vadd.f32 %v862, 1.0
    %v867 = vadd.f32 %v863, 1.0
    %v868 = vmul.f32 %v836, %v864
    %v869 = vmul.f32 %v837, %v865
    %v870 = vmul.f32 %v838, %v866
    %v871 = vmul.f32 %v839, %v867
    %872 = vmatpush.msra.mxu0 %v238
    %873 = vmatpush.msra.mxu0 %v237
    %874 = vmatpush.msra.mxu0 %v236
    %875 = vmatpush.msra.mxu0 %v235
    %876 = vmatpush.msra.mxu0 %v234
    %877 = vmatpush.msra.mxu0 %v233
    %878 = vmatpush.msra.mxu0 %v232
    %879 = vmatpush.msra.mxu0 %v231
    %880 = vmatpush.msra.mxu0 %v230
    %881 = vmatpush.msra.mxu0 %v229
    %882 = vmatpush.msra.mxu0 %v228
    %883 = vmatpush.msra.mxu0 %v227
    %884 = vmatpush.msra.mxu0 %v226
    %885 = vmatpush.msra.mxu0 %v225
    %886 = vmatpush.msra.mxu0 %v224
    %887 = vmatpush.msra.mxu0 %v223
    %888 = vmatmul.f32.gmra.mxu0 %v868
    %v889 = vpop.f32.mrf.mxu0
    %v890 = vadd.f32 %v519, %v889
    %891 = vmatmul.f32.gmra.mxu0 %v869
    %v892 = vpop.f32.mrf.mxu0
    %v893 = vadd.f32 %v519, %v892
    %894 = vmatmul.f32.gmra.mxu0 %v870
    %v895 = vpop.f32.mrf.mxu0
    %v896 = vadd.f32 %v519, %v895
    %897 = vmatmul.f32.gmra.mxu0 %v871
    %v898 = vpop.f32.mrf.mxu0
    %v899 = vadd.f32 %v519, %v898
    %900 = vdwg.mxu0
    %v901 = vmul.f32 %v890, 0.5
    %v902 = vmul.f32 %v893, 0.5
    %v903 = vmul.f32 %v896, 0.5
    %v904 = vmul.f32 %v899, 0.5
    %v905 = vmul.f32 %v890, %v890
    %v906 = vmul.f32 %v893, %v893
    %v907 = vmul.f32 %v896, %v896
    %v908 = vmul.f32 %v899, %v899
    %v909 = vmul.f32 %v905, %v890
    %v910 = vmul.f32 %v906, %v893
    %v911 = vmul.f32 %v907, %v896
    %v912 = vmul.f32 %v908, %v899
    %v913 = vmul.f32 %v909, 0.044715
    %v914 = vmul.f32 %v910, 0.044715
    %v915 = vmul.f32 %v911, 0.044715
    %v916 = vmul.f32 %v912, 0.044715
    %v917 = vadd.f32 %v890, %v913
    %v918 = vadd.f32 %v893, %v914
    %v919 = vadd.f32 %v896, %v915
    %v920 = vadd.f32 %v899, %v916
    %v921 = vmul.f32 %v917, 0.7978846
    %v922 = vmul.f32 %v918, 0.7978846
    %v923 = vmul.f32 %v919, 0.7978846
    %v924 = vmul.f32 %v920, 0.7978846
    %v925 = vtanh.pop %v921
    %v926 = vtanh.pop %v922
    %v927 = vtanh.pop %v923
    %v928 = vtanh.pop %v924
    %v929 = vadd.f32 %v925, 1.0
    %v930 = vadd.f32 %v926, 1.0
    %v931 = vadd.f32 %v927, 1.0
    %v932 = vadd.f32 %v928, 1.0
    %v933 = vmul.f32 %v901, %v929
    %v934 = vmul.f32 %v902, %v930
    %v935 = vmul.f32 %v903, %v931
    %v936 = vmul.f32 %v904, %v932
    %937 = vmatpush.msra.mxu0 %v255
    %938 = vmatpush.msra.mxu0 %v254
    %939 = vmatpush.msra.mxu0 %v253
    %940 = vmatpush.msra.mxu0 %v252
    %941 = vmatpush.msra.mxu0 %v251
    %942 = vmatpush.msra.mxu0 %v250
    %943 = vmatpush.msra.mxu0 %v249
    %944 = vmatpush.msra.mxu0 %v248
    %945 = vmatpush.msra.mxu0 %v247
    %946 = vmatpush.msra.mxu0 %v246
    %947 = vmatpush.msra.mxu0 %v245
    %948 = vmatpush.msra.mxu0 %v244
    %949 = vmatpush.msra.mxu0 %v243
    %950 = vmatpush.msra.mxu0 %v242
    %951 = vmatpush.msra.mxu0 %v241
    %952 = vmatpush.msra.mxu0 %v240
    %953 = vmatmul.f32.gmra.mxu0 %v933
    %v954 = vpop.f32.mrf.mxu0
    %v955 = vadd.f32 %v587, %v954
    %956 = vmatmul.f32.gmra.mxu0 %v934
    %v957 = vpop.f32.mrf.mxu0
    %v958 = vadd.f32 %v587, %v957
    %959 = vmatmul.f32.gmra.mxu0 %v935
    %v960 = vpop.f32.mrf.mxu0
    %v961 = vadd.f32 %v587, %v960
    %962 = vmatmul.f32.gmra.mxu0 %v936
    %v963 = vpop.f32.mrf.mxu0
    %v964 = vadd.f32 %v587, %v963
    %965 = vdwg.mxu0
    %966 = vset.pattern.permute.xlu0 1
    %967 = vperm.xlu0 %966, %v182
    %v968 = vpop.permute.xlu0 %967
    %970 = vset.pattern.permute.xlu0 1
    %971 = vperm.xlu0 %970, %v183
    %v972 = vpop.permute.xlu0 %971
    %974 = vset.pattern.permute.xlu0 1
    %975 = vperm.xlu0 %974, %v184
    %v976 = vpop.permute.xlu0 %975
    %978 = vset.pattern.permute.xlu0 1
    %979 = vperm.xlu0 %978, %v185
    %v980 = vpop.permute.xlu0 %979
    %v982 = vmul.f32 %v968, %v955
    %v983 = vmul.f32 %v972, %v958
    %v984 = vmul.f32 %v976, %v961
    %v985 = vmul.f32 %v980, %v964
    %v986 = vadd.f32 %v642, %v982
    %v987 = vadd.f32 %v643, %v983
    %v988 = vadd.f32 %v644, %v984
    %v989 = vadd.f32 %v645, %v985
    %v990 = vld [vmem:[#allocation2 + $0x10] sm:$0xff]
    %v991 = vld [vmem:[#allocation2 + $0x50] sm:$0xff]
    %v992 = vld [vmem:[#allocation2 + $0x90] sm:$0xff]
    %v993 = vld [vmem:[#allocation2 + $0xd0] sm:$0xff]
    %994 = vadd.xlane.f32.xlu0 %v990
    %v995 = vpop.xlane.xlu0 %994
    %996 = vadd.xlane.f32.xlu0 %v991
    %v997 = vpop.xlane.xlu0 %996
    %998 = vadd.xlane.f32.xlu0 %v992
    %v999 = vpop.xlane.xlu0 %998
    %1000 = vadd.xlane.f32.xlu0 %v993
    %v1001 = vpop.xlane.xlu0 %1000
    %v1002 = vmul.f32 %v990, %v990
    %v1003 = vmul.f32 %v991, %v991
    %v1004 = vmul.f32 %v992, %v992
    %v1005 = vmul.f32 %v993, %v993
    %1006 = vadd.xlane.f32.xlu0 %v1002
    %v1007 = vpop.xlane.xlu0 %1006
    %1008 = vadd.xlane.f32.xlu0 %v1003
    %v1009 = vpop.xlane.xlu0 %1008
    %1010 = vadd.xlane.f32.xlu0 %v1004
    %v1011 = vpop.xlane.xlu0 %1010
    %1012 = vadd.xlane.f32.xlu0 %v1005
    %v1013 = vpop.xlane.xlu0 %1012
    %v1014 = vadd.f32 %v258, %v995
    %v1015 = vadd.f32 %v260, %v997
    %v1016 = vadd.f32 %v262, %v999
    %v1017 = vadd.f32 %v264, %v1001
    %v1018 = vmul.f32 %v1014, 0.00390625
    %v1019 = vmul.f32 %v1015, 0.00390625
    %v1020 = vmul.f32 %v1016, 0.00390625
    %v1021 = vmul.f32 %v1017, 0.00390625
    %v1022 = vadd.f32 %v270, %v1007
    %v1023 = vadd.f32 %v272, %v1009
    %v1024 = vadd.f32 %v274, %v1011
    %v1025 = vadd.f32 %v276, %v1013
    %v1026 = vmul.f32 %v1022, 0.00390625
    %v1027 = vmul.f32 %v1023, 0.00390625
    %v1028 = vmul.f32 %v1024, 0.00390625
    %v1029 = vmul.f32 %v1025, 0.00390625
    %v1030 = vmul.f32 %v1018, %v1018
    %v1031 = vmul.f32 %v1019, %v1019
    %v1032 = vmul.f32 %v1020, %v1020
    %v1033 = vmul.f32 %v1021, %v1021
    %v1034 = vsub.f32 %v1026, %v1030
    %v1035 = vsub.f32 %v1027, %v1031
    %v1036 = vsub.f32 %v1028, %v1032
    %v1037 = vsub.f32 %v1029, %v1033
    %v1038 = vmax.f32 %v1034, 0.0
    %v1039 = vmax.f32 %v1035, 0.0
    %v1040 = vmax.f32 %v1036, 0.0
    %v1041 = vmax.f32 %v1037, 0.0
    %v1042 = vadd.f32 %v1038, 1e-05
    %v1043 = vadd.f32 %v1039, 1e-05
    %v1044 = vadd.f32 %v1040, 1e-05
    %v1045 = vadd.f32 %v1041, 1e-05
    %v1046 = vrsqrt.pop %v1042
    %v1047 = vmul.f32 %v1046, %v1042
    %v1048 = vmul.f32 %v1047, %v1046
    %v1049 = vmul.f32 0.5, %v1048
    %v1050 = vsub.f32 1.5, %v1049
    %v1051 = vmul.f32 %v1046, %v1050
    %vm1052 = vweird.f32 %v1042
    %vm1053 = vweird.f32 %v1046
    %vm1054 = vmor %vm1052, %vm1053
    %v1055 = vsel %vm1054, %v1046, %v1051
    %v1056 = vrsqrt.pop %v1043
    %v1057 = vmul.f32 %v1056, %v1043
    %v1058 = vmul.f32 %v1057, %v1056
    %v1059 = vmul.f32 0.5, %v1058
    %v1060 = vsub.f32 1.5, %v1059
    %v1061 = vmul.f32 %v1056, %v1060
    %vm1062 = vweird.f32 %v1043
    %vm1063 = vweird.f32 %v1056
    %vm1064 = vmor %vm1062, %vm1063
    %v1065 = vsel %vm1064, %v1056, %v1061
    %v1066 = vrsqrt.pop %v1044
    %v1067 = vmul.f32 %v1066, %v1044
    %v1068 = vmul.f32 %v1067, %v1066
    %v1069 = vmul.f32 0.5, %v1068
    %v1070 = vsub.f32 1.5, %v1069
    %v1071 = vmul.f32 %v1066, %v1070
    %vm1072 = vweird.f32 %v1044
    %vm1073 = vweird.f32 %v1066
    %vm1074 = vmor %vm1072, %vm1073
    %v1075 = vsel %vm1074, %v1066, %v1071
    %v1076 = vrsqrt.pop %v1045
    %v1077 = vmul.f32 %v1076, %v1045
    %v1078 = vmul.f32 %v1077, %v1076
    %v1079 = vmul.f32 0.5, %v1078
    %v1080 = vsub.f32 1.5, %v1079
    %v1081 = vmul.f32 %v1076, %v1080
    %vm1082 = vweird.f32 %v1045
    %vm1083 = vweird.f32 %v1076
    %vm1084 = vmor %vm1082, %vm1083
    %v1085 = vsel %vm1084, %v1076, %v1081
    %v1086 = vsub.f32 %v178, %v1018
    %v1087 = vsub.f32 %v179, %v1019
    %v1088 = vsub.f32 %v180, %v1020
    %v1089 = vsub.f32 %v181, %v1021
    %v1090 = vmul.f32 %v1086, %v1055
    %v1091 = vmul.f32 %v1087, %v1065
    %v1092 = vmul.f32 %v1088, %v1075
    %v1093 = vmul.f32 %v1089, %v1085
    %v1094 = vmul.f32 %v1090, %v382
    %v1095 = vmul.f32 %v1091, %v382
    %v1096 = vmul.f32 %v1092, %v382
    %v1097 = vmul.f32 %v1093, %v382
    %v1098 = vadd.f32 %v1094, %v389
    %v1099 = vadd.f32 %v1095, %v389
    %v1100 = vadd.f32 %v1096, %v389
    %v1101 = vadd.f32 %v1097, %v389
    %v1102 = vsub.f32 %v990, %v1018
    %v1103 = vsub.f32 %v991, %v1019
    %v1104 = vsub.f32 %v992, %v1020
    %v1105 = vsub.f32 %v993, %v1021
    %v1106 = vmul.f32 %v1102, %v1055
    %v1107 = vmul.f32 %v1103, %v1065
    %v1108 = vmul.f32 %v1104, %v1075
    %v1109 = vmul.f32 %v1105, %v1085
    %v1110 = vmul.f32 %v1106, %v404
    %v1111 = vmul.f32 %v1107, %v404
    %v1112 = vmul.f32 %v1108, %v404
    %v1113 = vmul.f32 %v1109, %v404
    %v1114 = vadd.f32 %v1110, %v411
    %v1115 = vadd.f32 %v1111, %v411
    %v1116 = vadd.f32 %v1112, %v411
    %v1117 = vadd.f32 %v1113, %v411
    %1118 = vmatpush.msra.mxu0 %v221
    %1119 = vmatpush.msra.mxu0 %v220
    %1120 = vmatpush.msra.mxu0 %v219
    %1121 = vmatpush.msra.mxu0 %v218
    %1122 = vmatpush.msra.mxu0 %v217
    %1123 = vmatpush.msra.mxu0 %v216
    %1124 = vmatpush.msra.mxu0 %v215
    %1125 = vmatpush.msra.mxu0 %v214
    %1126 = vmatpush.msra.mxu0 %v213
    %1127 = vmatpush.msra.mxu0 %v212
    %1128 = vmatpush.msra.mxu0 %v211
    %1129 = vmatpush.msra.mxu0 %v210
    %1130 = vmatpush.msra.mxu0 %v209
    %1131 = vmatpush.msra.mxu0 %v208
    %1132 = vmatpush.msra.mxu0 %v207
    %1133 = vmatpush.msra.mxu0 %v206
    %1134 = vmatmul.f32.gmra.mxu0 %v1114
    %v1135 = vpop.f32.mrf.mxu0
    %v1136 = vadd.f32 0.0, %v1135
    %1137 = vmatmul.f32.gmra.mxu0 %v1115
    %v1138 = vpop.f32.mrf.mxu0
    %v1139 = vadd.f32 0.0, %v1138
    %1140 = vmatmul.f32.gmra.mxu0 %v1116
    %v1141 = vpop.f32.mrf.mxu0
    %v1142 = vadd.f32 0.0, %v1141
    %1143 = vmatmul.f32.gmra.mxu0 %v1117
    %v1144 = vpop.f32.mrf.mxu0
    %v1145 = vadd.f32 0.0, %v1144
    %1146 = vdwg.mxu0
    %1147 = vmatpush.msra.mxu0 %v205
    %1148 = vmatpush.msra.mxu0 %v204
    %1149 = vmatpush.msra.mxu0 %v203
    %1150 = vmatpush.msra.mxu0 %v202
    %1151 = vmatpush.msra.mxu0 %v201
    %1152 = vmatpush.msra.mxu0 %v200
    %1153 = vmatpush.msra.mxu0 %v199
    %1154 = vmatpush.msra.mxu0 %v198
    %1155 = vmatpush.msra.mxu0 %v197
    %1156 = vmatpush.msra.mxu0 %v196
    %1157 = vmatpush.msra.mxu0 %v195
    %1158 = vmatpush.msra.mxu0 %v194
    %1159 = vmatpush.msra.mxu0 %v193
    %1160 = vmatpush.msra.mxu0 %v192
    %1161 = vmatpush.msra.mxu0 %v191
    %1162 = vmatpush.msra.mxu0 %v190
    %1163 = vmatmul.f32.gmra.mxu0 %v1098
    %v1164 = vpop.f32.mrf.mxu0
    %v1165 = vadd.f32 %v1136, %v1164
    %1166 = vmatmul.f32.gmra.mxu0 %v1099
    %v1167 = vpop.f32.mrf.mxu0
    %v1168 = vadd.f32 %v1139, %v1167
    %1169 = vmatmul.f32.gmra.mxu0 %v1100
    %v1170 = vpop.f32.mrf.mxu0
    %v1171 = vadd.f32 %v1142, %v1170
    %1172 = vmatmul.f32.gmra.mxu0 %v1101
    %v1173 = vpop.f32.mrf.mxu0
    %v1174 = vadd.f32 %v1145, %v1173
    %1175 = vdwg.mxu0
    %v1176 = vadd.f32 %v1165, %v476
    %v1177 = vadd.f32 %v1168, %v476
    %v1178 = vadd.f32 %v1171, %v476
    %v1179 = vadd.f32 %v1174, %v476
    %v1180 = vmul.f32 %v1176, 0.5
    %v1181 = vmul.f32 %v1177, 0.5
    %v1182 = vmul.f32 %v1178, 0.5
    %v1183 = vmul.f32 %v1179, 0.5
    %v1184 = vmul.f32 %v1176, %v1176
    %v1185 = vmul.f32 %v1177, %v1177
    %v1186 = vmul.f32 %v1178, %v1178
    %v1187 = vmul.f32 %v1179, %v1179
    %v1188 = vmul.f32 %v1184, %v1176
    %v1189 = vmul.f32 %v1185, %v1177
    %v1190 = vmul.f32 %v1186, %v1178
    %v1191 = vmul.f32 %v1187, %v1179
    %v1192 = vmul.f32 %v1188, 0.044715
    %v1193 = vmul.f32 %v1189, 0.044715
    %v1194 = vmul.f32 %v1190, 0.044715
    %v1195 = vmul.f32 %v1191, 0.044715
    %v1196 = vadd.f32 %v1176, %v1192
    %v1197 = vadd.f32 %v1177, %v1193
    %v1198 = vadd.f32 %v1178, %v1194
    %v1199 = vadd.f32 %v1179, %v1195
    %v1200 = vmul.f32 %v1196, 0.7978846
    %v1201 = vmul.f32 %v1197, 0.7978846
    %v1202 = vmul.f32 %v1198, 0.7978846
    %v1203 = vmul.f32 %v1199, 0.7978846
    %v1204 = vtanh.pop %v1200
    %v1205 = vtanh.pop %v1201
    %v1206 = vtanh.pop %v1202
    %v1207 = vtanh.pop %v1203
    %v1208 = vadd.f32 %v1204, 1.0
    %v1209 = vadd.f32 %v1205, 1.0
    %v1210 = vadd.f32 %v1206, 1.0
    %v1211 = vadd.f32 %v1207, 1.0
    %v1212 = vmul.f32 %v1180, %v1208
    %v1213 = vmul.f32 %v1181, %v1209
    %v1214 = vmul.f32 %v1182, %v1210
    %v1215 = vmul.f32 %v1183, %v1211
    %1216 = vmatpush.msra.mxu0 %v238
    %1217 = vmatpush.msra.mxu0 %v237
    %1218 = vmatpush.msra.mxu0 %v236
    %1219 = vmatpush.msra.mxu0 %v235
    %1220 = vmatpush.msra.mxu0 %v234
    %1221 = vmatpush.msra.mxu0 %v233
    %1222 = vmatpush.msra.mxu0 %v232
    %1223 = vmatpush.msra.mxu0 %v231
    %1224 = vmatpush.msra.mxu0 %v230
    %1225 = vmatpush.msra.mxu0 %v229
    %1226 = vmatpush.msra.mxu0 %v228
    %1227 = vmatpush.msra.mxu0 %v227
    %1228 = vmatpush.msra.mxu0 %v226
    %1229 = vmatpush.msra.mxu0 %v225
    %1230 = vmatpush.msra.mxu0 %v224
    %1231 = vmatpush.msra.mxu0 %v223
    %1232 = vmatmul.f32.gmra.mxu0 %v1212
    %v1233 = vpop.f32.mrf.mxu0
    %v1234 = vadd.f32 %v519, %v1233
    %1235 = vmatmul.f32.gmra.mxu0 %v1213
    %v1236 = vpop.f32.mrf.mxu0
    %v1237 = vadd.f32 %v519, %v1236
    %1238 = vmatmul.f32.gmra.mxu0 %v1214
    %v1239 = vpop.f32.mrf.mxu0
    %v1240 = vadd.f32 %v519, %v1239
    %1241 = vmatmul.f32.gmra.mxu0 %v1215
    %v1242 = vpop.f32.mrf.mxu0
    %v1243 = vadd.f32 %v519, %v1242
    %1244 = vdwg.mxu0
    %v1245 = vmul.f32 %v1234, 0.5
    %v1246 = vmul.f32 %v1237, 0.5
    %v1247 = vmul.f32 %v1240, 0.5
    %v1248 = vmul.f32 %v1243, 0.5
    %v1249 = vmul.f32 %v1234, %v1234
    %v1250 = vmul.f32 %v1237, %v1237
    %v1251 = vmul.f32 %v1240, %v1240
    %v1252 = vmul.f32 %v1243, %v1243
    %v1253 = vmul.f32 %v1249, %v1234
    %v1254 = vmul.f32 %v1250, %v1237
    %v1255 = vmul.f32 %v1251, %v1240
    %v1256 = vmul.f32 %v1252, %v1243
    %v1257 = vmul.f32 %v1253, 0.044715
    %v1258 = vmul.f32 %v1254, 0.044715
    %v1259 = vmul.f32 %v1255, 0.044715
    %v1260 = vmul.f32 %v1256, 0.044715
    %v1261 = vadd.f32 %v1234, %v1257
    %v1262 = vadd.f32 %v1237, %v1258
    %v1263 = vadd.f32 %v1240, %v1259
    %v1264 = vadd.f32 %v1243, %v1260
    %v1265 = vmul.f32 %v1261, 0.7978846
    %v1266 = vmul.f32 %v1262, 0.7978846
    %v1267 = vmul.f32 %v1263, 0.7978846
    %v1268 = vmul.f32 %v1264, 0.7978846
    %v1269 = vtanh.pop %v1265
    %v1270 = vtanh.pop %v1266
    %v1271 = vtanh.pop %v1267
    %v1272 = vtanh.pop %v1268
    %v1273 = vadd.f32 %v1269, 1.0
    %v1274 = vadd.f32 %v1270, 1.0
    %v1275 = vadd.f32 %v1271, 1.0
    %v1276 = vadd.f32 %v1272, 1.0
    %v1277 = vmul.f32 %v1245, %v1273
    %v1278 = vmul.f32 %v1246, %v1274
    %v1279 = vmul.f32 %v1247, %v1275
    %v1280 = vmul.f32 %v1248, %v1276
    %1281 = vmatpush.msra.mxu0 %v255
    %1282 = vmatpush.msra.mxu0 %v254
    %1283 = vmatpush.msra.mxu0 %v253
    %1284 = vmatpush.msra.mxu0 %v252
    %1285 = vmatpush.msra.mxu0 %v251
    %1286 = vmatpush.msra.mxu0 %v250
    %1287 = vmatpush.msra.mxu0 %v249
    %1288 = vmatpush.msra.mxu0 %v248
    %1289 = vmatpush.msra.mxu0 %v247
    %1290 = vmatpush.msra.mxu0 %v246
    %1291 = vmatpush.msra.mxu0 %v245
    %1292 = vmatpush.msra.mxu0 %v244
    %1293 = vmatpush.msra.mxu0 %v243
    %1294 = vmatpush.msra.mxu0 %v242
    %1295 = vmatpush.msra.mxu0 %v241
    %1296 = vmatpush.msra.mxu0 %v240
    %1297 = vmatmul.f32.gmra.mxu0 %v1277
    %v1298 = vpop.f32.mrf.mxu0
    %v1299 = vadd.f32 %v587, %v1298
    %1300 = vmatmul.f32.gmra.mxu0 %v1278
    %v1301 = vpop.f32.mrf.mxu0
    %v1302 = vadd.f32 %v587, %v1301
    %1303 = vmatmul.f32.gmra.mxu0 %v1279
    %v1304 = vpop.f32.mrf.mxu0
    %v1305 = vadd.f32 %v587, %v1304
    %1306 = vmatmul.f32.gmra.mxu0 %v1280
    %v1307 = vpop.f32.mrf.mxu0
    %v1308 = vadd.f32 %v587, %v1307
    %1309 = vdwg.mxu0
    %1310 = vset.pattern.permute.xlu0 2
    %1311 = vperm.xlu0 %1310, %v182
    %v1312 = vpop.permute.xlu0 %1311
    %1314 = vset.pattern.permute.xlu0 2
    %1315 = vperm.xlu0 %1314, %v183
    %v1316 = vpop.permute.xlu0 %1315
    %1318 = vset.pattern.permute.xlu0 2
    %1319 = vperm.xlu0 %1318, %v184
    %v1320 = vpop.permute.xlu0 %1319
    %1322 = vset.pattern.permute.xlu0 2
    %1323 = vperm.xlu0 %1322, %v185
    %v1324 = vpop.permute.xlu0 %1323
    %v1326 = vmul.f32 %v1312, %v1299
    %v1327 = vmul.f32 %v1316, %v1302
    %v1328 = vmul.f32 %v1320, %v1305
    %v1329 = vmul.f32 %v1324, %v1308
    %v1330 = vadd.f32 %v986, %v1326
    %v1331 = vadd.f32 %v987, %v1327
    %v1332 = vadd.f32 %v988, %v1328
    %v1333 = vadd.f32 %v989, %v1329
    %v1334 = vld [vmem:[#allocation2 + $0x18] sm:$0xff]
    %v1335 = vld [vmem:[#allocation2 + $0x58] sm:$0xff]
    %v1336 = vld [vmem:[#allocation2 + $0x98] sm:$0xff]
    %v1337 = vld [vmem:[#allocation2 + $0xd8] sm:$0xff]
    %1338 = vadd.xlane.f32.xlu0 %v1334
    %v1339 = vpop.xlane.xlu0 %1338
    %1340 = vadd.xlane.f32.xlu0 %v1335
    %v1341 = vpop.xlane.xlu0 %1340
    %1342 = vadd.xlane.f32.xlu0 %v1336
    %v1343 = vpop.xlane.xlu0 %1342
    %1344 = vadd.xlane.f32.xlu0 %v1337
    %v1345 = vpop.xlane.xlu0 %1344
    %v1346 = vmul.f32 %v1334, %v1334
    %v1347 = vmul.f32 %v1335, %v1335
    %v1348 = vmul.f32 %v1336, %v1336
    %v1349 = vmul.f32 %v1337, %v1337
    %1350 = vadd.xlane.f32.xlu0 %v1346
    %v1351 = vpop.xlane.xlu0 %1350
    %1352 = vadd.xlane.f32.xlu0 %v1347
    %v1353 = vpop.xlane.xlu0 %1352
    %1354 = vadd.xlane.f32.xlu0 %v1348
    %v1355 = vpop.xlane.xlu0 %1354
    %1356 = vadd.xlane.f32.xlu0 %v1349
    %v1357 = vpop.xlane.xlu0 %1356
    %v1358 = vadd.f32 %v258, %v1339
    %v1359 = vadd.f32 %v260, %v1341
    %v1360 = vadd.f32 %v262, %v1343
    %v1361 = vadd.f32 %v264, %v1345
    %v1362 = vmul.f32 %v1358, 0.00390625
    %v1363 = vmul.f32 %v1359, 0.00390625
    %v1364 = vmul.f32 %v1360, 0.00390625
    %v1365 = vmul.f32 %v1361, 0.00390625
    %v1366 = vadd.f32 %v270, %v1351
    %v1367 = vadd.f32 %v272, %v1353
    %v1368 = vadd.f32 %v274, %v1355
    %v1369 = vadd.f32 %v276, %v1357
    %v1370 = vmul.f32 %v1366, 0.00390625
    %v1371 = vmul.f32 %v1367, 0.00390625
    %v1372 = vmul.f32 %v1368, 0.00390625
    %v1373 = vmul.f32 %v1369, 0.00390625
    %v1374 = vmul.f32 %v1362, %v1362
    %v1375 = vmul.f32 %v1363, %v1363
    %v1376 = vmul.f32 %v1364, %v1364
    %v1377 = vmul.f32 %v1365, %v1365
    %v1378 = vsub.f32 %v1370, %v1374
    %v1379 = vsub.f32 %v1371, %v1375
    %v1380 = vsub.f32 %v1372, %v1376
    %v1381 = vsub.f32 %v1373, %v1377
    %v1382 = vmax.f32 %v1378, 0.0
    %v1383 = vmax.f32 %v1379, 0.0
    %v1384 = vmax.f32 %v1380, 0.0
    %v1385 = vmax.f32 %v1381, 0.0
    %v1386 = vadd.f32 %v1382, 1e-05
    %v1387 = vadd.f32 %v1383, 1e-05
    %v1388 = vadd.f32 %v1384, 1e-05
    %v1389 = vadd.f32 %v1385, 1e-05
    %v1390 = vrsqrt.pop %v1386
    %v1391 = vmul.f32 %v1390, %v1386
    %v1392 = vmul.f32 %v1391, %v1390
    %v1393 = vmul.f32 0.5, %v1392
    %v1394 = vsub.f32 1.5, %v1393
    %v1395 = vmul.f32 %v1390, %v1394
    %vm1396 = vweird.f32 %v1386
    %vm1397 = vweird.f32 %v1390
    %vm1398 = vmor %vm1396, %vm1397
    %v1399 = vsel %vm1398, %v1390, %v1395
    %v1400 = vrsqrt.pop %v1387
    %v1401 = vmul.f32 %v1400, %v1387
    %v1402 = vmul.f32 %v1401, %v1400
    %v1403 = vmul.f32 0.5, %v1402
    %v1404 = vsub.f32 1.5, %v1403
    %v1405 = vmul.f32 %v1400, %v1404
    %vm1406 = vweird.f32 %v1387
    %vm1407 = vweird.f32 %v1400
    %vm1408 = vmor %vm1406, %vm1407
    %v1409 = vsel %vm1408, %v1400, %v1405
    %v1410 = vrsqrt.pop %v1388
    %v1411 = vmul.f32 %v1410, %v1388
    %v1412 = vmul.f32 %v1411, %v1410
    %v1413 = vmul.f32 0.5, %v1412
    %v1414 = vsub.f32 1.5, %v1413
    %v1415 = vmul.f32 %v1410, %v1414
    %vm1416 = vweird.f32 %v1388
    %vm1417 = vweird.f32 %v1410
    %vm1418 = vmor %vm1416, %vm1417
    %v1419 = vsel %vm1418, %v1410, %v1415
    %v1420 = vrsqrt.pop %v1389
    %v1421 = vmul.f32 %v1420, %v1389
    %v1422 = vmul.f32 %v1421, %v1420
    %v1423 = vmul.f32 0.5, %v1422
    %v1424 = vsub.f32 1.5, %v1423
    %v1425 = vmul.f32 %v1420, %v1424
    %vm1426 = vweird.f32 %v1389
    %vm1427 = vweird.f32 %v1420
    %vm1428 = vmor %vm1426, %vm1427
    %v1429 = vsel %vm1428, %v1420, %v1425
    %v1430 = vsub.f32 %v178, %v1362
    %v1431 = vsub.f32 %v179, %v1363
    %v1432 = vsub.f32 %v180, %v1364
    %v1433 = vsub.f32 %v181, %v1365
    %v1434 = vmul.f32 %v1430, %v1399
    %v1435 = vmul.f32 %v1431, %v1409
    %v1436 = vmul.f32 %v1432, %v1419
    %v1437 = vmul.f32 %v1433, %v1429
    %v1438 = vmul.f32 %v1434, %v382
    %v1439 = vmul.f32 %v1435, %v382
    %v1440 = vmul.f32 %v1436, %v382
    %v1441 = vmul.f32 %v1437, %v382
    %v1442 = vadd.f32 %v1438, %v389
    %v1443 = vadd.f32 %v1439, %v389
    %v1444 = vadd.f32 %v1440, %v389
    %v1445 = vadd.f32 %v1441, %v389
    %v1446 = vsub.f32 %v1334, %v1362
    %v1447 = vsub.f32 %v1335, %v1363
    %v1448 = vsub.f32 %v1336, %v1364
    %v1449 = vsub.f32 %v1337, %v1365
    %v1450 = vmul.f32 %v1446, %v1399
    %v1451 = vmul.f32 %v1447, %v1409
    %v1452 = vmul.f32 %v1448, %v1419
    %v1453 = vmul.f32 %v1449, %v1429
    %v1454 = vmul.f32 %v1450, %v404
    %v1455 = vmul.f32 %v1451, %v404
    %v1456 = vmul.f32 %v1452, %v404
    %v1457 = vmul.f32 %v1453, %v404
    %v1458 = vadd.f32 %v1454, %v411
    %v1459 = vadd.f32 %v1455, %v411
    %v1460 = vadd.f32 %v1456, %v411
    %v1461 = vadd.f32 %v1457, %v411
    %1462 = vmatpush.msra.mxu0 %v221
    %1463 = vmatpush.msra.mxu0 %v220
    %1464 = vmatpush.msra.mxu0 %v219
    %1465 = vmatpush.msra.mxu0 %v218
    %1466 = vmatpush.msra.mxu0 %v217
    %1467 = vmatpush.msra.mxu0 %v216
    %1468 = vmatpush.msra.mxu0 %v215
    %1469 = vmatpush.msra.mxu0 %v214
    %1470 = vmatpush.msra.mxu0 %v213
    %1471 = vmatpush.msra.mxu0 %v212
    %1472 = vmatpush.msra.mxu0 %v211
    %1473 = vmatpush.msra.mxu0 %v210
    %1474 = vmatpush.msra.mxu0 %v209
    %1475 = vmatpush.msra.mxu0 %v208
    %1476 = vmatpush.msra.mxu0 %v207
    %1477 = vmatpush.msra.mxu0 %v206
    %1478 = vmatmul.f32.gmra.mxu0 %v1458
    %v1479 = vpop.f32.mrf.mxu0
    %v1480 = vadd.f32 0.0, %v1479
    %1481 = vmatmul.f32.gmra.mxu0 %v1459
    %v1482 = vpop.f32.mrf.mxu0
    %v1483 = vadd.f32 0.0, %v1482
    %1484 = vmatmul.f32.gmra.mxu0 %v1460
    %v1485 = vpop.f32.mrf.mxu0
    %v1486 = vadd.f32 0.0, %v1485
    %1487 = vmatmul.f32.gmra.mxu0 %v1461
    %v1488 = vpop.f32.mrf.mxu0
    %v1489 = vadd.f32 0.0, %v1488
    %1490 = vdwg.mxu0
    %1491 = vmatpush.msra.mxu0 %v205
    %1492 = vmatpush.msra.mxu0 %v204
    %1493 = vmatpush.msra.mxu0 %v203
    %1494 = vmatpush.msra.mxu0 %v202
    %1495 = vmatpush.msra.mxu0 %v201
    %1496 = vmatpush.msra.mxu0 %v200
    %1497 = vmatpush.msra.mxu0 %v199
    %1498 = vmatpush.msra.mxu0 %v198
    %1499 = vmatpush.msra.mxu0 %v197
    %1500 = vmatpush.msra.mxu0 %v196
    %1501 = vmatpush.msra.mxu0 %v195
    %1502 = vmatpush.msra.mxu0 %v194
    %1503 = vmatpush.msra.mxu0 %v193
    %1504 = vmatpush.msra.mxu0 %v192
    %1505 = vmatpush.msra.mxu0 %v191
    %1506 = vmatpush.msra.mxu0 %v190
    %1507 = vmatmul.f32.gmra.mxu0 %v1442
    %v1508 = vpop.f32.mrf.mxu0
    %v1509 = vadd.f32 %v1480, %v1508
    %1510 = vmatmul.f32.gmra.mxu0 %v1443
    %v1511 = vpop.f32.mrf.mxu0
    %v1512 = vadd.f32 %v1483, %v1511
    %1513 = vmatmul.f32.gmra.mxu0 %v1444
    %v1514 = vpop.f32.mrf.mxu0
    %v1515 = vadd.f32 %v1486, %v1514
    %1516 = vmatmul.f32.gmra.mxu0 %v1445
    %v1517 = vpop.f32.mrf.mxu0
    %v1518 = vadd.f32 %v1489, %v1517
    %1519 = vdwg.mxu0
    %v1520 = vadd.f32 %v1509, %v476
    %v1521 = vadd.f32 %v1512, %v476
    %v1522 = vadd.f32 %v1515, %v476
    %v1523 = vadd.f32 %v1518, %v476
    %v1524 = vmul.f32 %v1520, 0.5
    %v1525 = vmul.f32 %v1521, 0.5
    %v1526 = vmul.f32 %v1522, 0.5
    %v1527 = vmul.f32 %v1523, 0.5
    %v1528 = vmul.f32 %v1520, %v1520
    %v1529 = vmul.f32 %v1521, %v1521
    %v1530 = vmul.f32 %v1522, %v1522
    %v1531 = vmul.f32 %v1523, %v1523
    %v1532 = vmul.f32 %v1528, %v1520
    %v1533 = vmul.f32 %v1529, %v1521
    %v1534 = vmul.f32 %v1530, %v1522
    %v1535 = vmul.f32 %v1531, %v1523
    %v1536 = vmul.f32 %v1532, 0.044715
    %v1537 = vmul.f32 %v1533, 0.044715
    %v1538 = vmul.f32 %v1534, 0.044715
    %v1539 = vmul.f32 %v1535, 0.044715
    %v1540 = vadd.f32 %v1520, %v1536
    %v1541 = vadd.f32 %v1521, %v1537
    %v1542 = vadd.f32 %v1522, %v1538
    %v1543 = vadd.f32 %v1523, %v1539
    %v1544 = vmul.f32 %v1540, 0.7978846
    %v1545 = vmul.f32 %v1541, 0.7978846
    %v1546 = vmul.f32 %v1542, 0.7978846
    %v1547 = vmul.f32 %v1543, 0.7978846
    %v1548 = vtanh.pop %v1544
    %v1549 = vtanh.pop %v1545
    %v1550 = vtanh.pop %v1546
    %v1551 = vtanh.pop %v1547
    %v1552 = vadd.f32 %v1548, 1.0
    %v1553 = vadd.f32 %v1549, 1.0
    %v1554 = vadd.f32 %v1550, 1.0
    %v1555 = vadd.f32 %v1551, 1.0
    %v1556 = vmul.f32 %v1524, %v1552
    %v1557 = vmul.f32 %v1525, %v1553
    %v1558 = vmul.f32 %v1526, %v1554
    %v1559 = vmul.f32 %v1527, %v1555
    %1560 = vmatpush.msra.mxu0 %v238
    %1561 = vmatpush.msra.mxu0 %v237
    %1562 = vmatpush.msra.mxu0 %v236
    %1563 = vmatpush.msra.mxu0 %v235
    %1564 = vmatpush.msra.mxu0 %v234
    %1565 = vmatpush.msra.mxu0 %v233
    %1566 = vmatpush.msra.mxu0 %v232
    %1567 = vmatpush.msra.mxu0 %v231
    %1568 = vmatpush.msra.mxu0 %v230
    %1569 = vmatpush.msra.mxu0 %v229
    %1570 = vmatpush.msra.mxu0 %v228
    %1571 = vmatpush.msra.mxu0 %v227
    %1572 = vmatpush.msra.mxu0 %v226
    %1573 = vmatpush.msra.mxu0 %v225
    %1574 = vmatpush.msra.mxu0 %v224
    %1575 = vmatpush.msra.mxu0 %v223
    %1576 = vmatmul.f32.gmra.mxu0 %v1556
    %v1577 = vpop.f32.mrf.mxu0
    %v1578 = vadd.f32 %v519, %v1577
    %1579 = vmatmul.f32.gmra.mxu0 %v1557
    %v1580 = vpop.f32.mrf.mxu0
    %v1581 = vadd.f32 %v519, %v1580
    %1582 = vmatmul.f32.gmra.mxu0 %v1558
    %v1583 = vpop.f32.mrf.mxu0
    %v1584 = vadd.f32 %v519, %v1583
    %1585 = vmatmul.f32.gmra.mxu0 %v1559
    %v1586 = vpop.f32.mrf.mxu0
    %v1587 = vadd.f32 %v519, %v1586
    %1588 = vdwg.mxu0
    %v1589 = vmul.f32 %v1578, 0.5
    %v1590 = vmul.f32 %v1581, 0.5
    %v1591 = vmul.f32 %v1584, 0.5
    %v1592 = vmul.f32 %v1587, 0.5
    %v1593 = vmul.f32 %v1578, %v1578
    %v1594 = vmul.f32 %v1581, %v1581
    %v1595 = vmul.f32 %v1584, %v1584
    %v1596 = vmul.f32 %v1587, %v1587
    %v1597 = vmul.f32 %v1593, %v1578
    %v1598 = vmul.f32 %v1594, %v1581
    %v1599 = vmul.f32 %v1595, %v1584
    %v1600 = vmul.f32 %v1596, %v1587
    %v1601 = vmul.f32 %v1597, 0.044715
    %v1602 = vmul.f32 %v1598, 0.044715
    %v1603 = vmul.f32 %v1599, 0.044715
    %v1604 = vmul.f32 %v1600, 0.044715
    %v1605 = vadd.f32 %v1578, %v1601
    %v1606 = vadd.f32 %v1581, %v1602
    %v1607 = vadd.f32 %v1584, %v1603
    %v1608 = vadd.f32 %v1587, %v1604
    %v1609 = vmul.f32 %v1605, 0.7978846
    %v1610 = vmul.f32 %v1606, 0.7978846
    %v1611 = vmul.f32 %v1607, 0.7978846
    %v1612 = vmul.f32 %v1608, 0.7978846
    %v1613 = vtanh.pop %v1609
    %v1614 = vtanh.pop %v1610
    %v1615 = vtanh.pop %v1611
    %v1616 = vtanh.pop %v1612
    %v1617 = vadd.f32 %v1613, 1.0
    %v1618 = vadd.f32 %v1614, 1.0
    %v1619 = vadd.f32 %v1615, 1.0
    %v1620 = vadd.f32 %v1616, 1.0
    %v1621 = vmul.f32 %v1589, %v1617
    %v1622 = vmul.f32 %v1590, %v1618
    %v1623 = vmul.f32 %v1591, %v1619
    %v1624 = vmul.f32 %v1592, %v1620
    %1625 = vmatpush.msra.mxu0 %v255
    %1626 = vmatpush.msra.mxu0 %v254
    %1627 = vmatpush.msra.mxu0 %v253
    %1628 = vmatpush.msra.mxu0 %v252
    %1629 = vmatpush.msra.mxu0 %v251
    %1630 = vmatpush.msra.mxu0 %v250
    %1631 = vmatpush.msra.mxu0 %v249
    %1632 = vmatpush.msra.mxu0 %v248
    %1633 = vmatpush.msra.mxu0 %v247
    %1634 = vmatpush.msra.mxu0 %v246
    %1635 = vmatpush.msra.mxu0 %v245
    %1636 = vmatpush.msra.mxu0 %v244
    %1637 = vmatpush.msra.mxu0 %v243
    %1638 = vmatpush.msra.mxu0 %v242
    %1639 = vmatpush.msra.mxu0 %v241
    %1640 = vmatpush.msra.mxu0 %v240
    %1641 = vmatmul.f32.gmra.mxu0 %v1621
    %v1642 = vpop.f32.mrf.mxu0
    %v1643 = vadd.f32 %v587, %v1642
    %1644 = vmatmul.f32.gmra.mxu0 %v1622
    %v1645 = vpop.f32.mrf.mxu0
    %v1646 = vadd.f32 %v587, %v1645
    %1647 = vmatmul.f32.gmra.mxu0 %v1623
    %v1648 = vpop.f32.mrf.mxu0
    %v1649 = vadd.f32 %v587, %v1648
    %1650 = vmatmul.f32.gmra.mxu0 %v1624
    %v1651 = vpop.f32.mrf.mxu0
    %v1652 = vadd.f32 %v587, %v1651
    %1653 = vdwg.mxu0
    %1654 = vset.pattern.permute.xlu0 3
    %1655 = vperm.xlu0 %1654, %v182
    %v1656 = vpop.permute.xlu0 %1655
    %1658 = vset.pattern.permute.xlu0 3
    %1659 = vperm.xlu0 %1658, %v183
    %v1660 = vpop.permute.xlu0 %1659
    %1662 = vset.pattern.permute.xlu0 3
    %1663 = vperm.xlu0 %1662, %v184
    %v1664 = vpop.permute.xlu0 %1663
    %1666 = vset.pattern.permute.xlu0 3
    %1667 = vperm.xlu0 %1666, %v185
    %v1668 = vpop.permute.xlu0 %1667
    %v1670 = vmul.f32 %v1656, %v1643
    %v1671 = vmul.f32 %v1660, %v1646
    %v1672 = vmul.f32 %v1664, %v1649
    %v1673 = vmul.f32 %v1668, %v1652
    %v1674 = vadd.f32 %v1330, %v1670
    %v1675 = vadd.f32 %v1331, %v1671
    %v1676 = vadd.f32 %v1332, %v1672
    %v1677 = vadd.f32 %v1333, %v1673
    %v1678 = vld [vmem:[#allocation2 + $0x20] sm:$0xff]
    %v1679 = vld [vmem:[#allocation2 + $0x60] sm:$0xff]
    %v1680 = vld [vmem:[#allocation2 + $0xa0] sm:$0xff]
    %v1681 = vld [vmem:[#allocation2 + $0xe0] sm:$0xff]
    %1682 = vadd.xlane.f32.xlu0 %v1678
    %v1683 = vpop.xlane.xlu0 %1682
    %1684 = vadd.xlane.f32.xlu0 %v1679
    %v1685 = vpop.xlane.xlu0 %1684
    %1686 = vadd.xlane.f32.xlu0 %v1680
    %v1687 = vpop.xlane.xlu0 %1686
    %1688 = vadd.xlane.f32.xlu0 %v1681
    %v1689 = vpop.xlane.xlu0 %1688
    %v1690 = vmul.f32 %v1678, %v1678
    %v1691 = vmul.f32 %v1679, %v1679
    %v1692 = vmul.f32 %v1680, %v1680
    %v1693 = vmul.f32 %v1681, %v1681
    %1694 = vadd.xlane.f32.xlu0 %v1690
    %v1695 = vpop.xlane.xlu0 %1694
    %1696 = vadd.xlane.f32.xlu0 %v1691
    %v1697 = vpop.xlane.xlu0 %1696
    %1698 = vadd.xlane.f32.xlu0 %v1692
    %v1699 = vpop.xlane.xlu0 %1698
    %1700 = vadd.xlane.f32.xlu0 %v1693
    %v1701 = vpop.xlane.xlu0 %1700
    %v1702 = vadd.f32 %v258, %v1683
    %v1703 = vadd.f32 %v260, %v1685
    %v1704 = vadd.f32 %v262, %v1687
    %v1705 = vadd.f32 %v264, %v1689
    %v1706 = vmul.f32 %v1702, 0.00390625
    %v1707 = vmul.f32 %v1703, 0.00390625
    %v1708 = vmul.f32 %v1704, 0.00390625
    %v1709 = vmul.f32 %v1705, 0.00390625
    %v1710 = vadd.f32 %v270, %v1695
    %v1711 = vadd.f32 %v272, %v1697
    %v1712 = vadd.f32 %v274, %v1699
    %v1713 = vadd.f32 %v276, %v1701
    %v1714 = vmul.f32 %v1710, 0.00390625
    %v1715 = vmul.f32 %v1711, 0.00390625
    %v1716 = vmul.f32 %v1712, 0.00390625
    %v1717 = vmul.f32 %v1713, 0.00390625
    %v1718 = vmul.f32 %v1706, %v1706
    %v1719 = vmul.f32 %v1707, %v1707
    %v1720 = vmul.f32 %v1708, %v1708
    %v1721 = vmul.f32 %v1709, %v1709
    %v1722 = vsub.f32 %v1714, %v1718
    %v1723 = vsub.f32 %v1715, %v1719
    %v1724 = vsub.f32 %v1716, %v1720
    %v1725 = vsub.f32 %v1717, %v1721
    %v1726 = vmax.f32 %v1722, 0.0
    %v1727 = vmax.f32 %v1723, 0.0
    %v1728 = vmax.f32 %v1724, 0.0
    %v1729 = vmax.f32 %v1725, 0.0
    %v1730 = vadd.f32 %v1726, 1e-05
    %v1731 = vadd.f32 %v1727, 1e-05
    %v1732 = vadd.f32 %v1728, 1e-05
    %v1733 = vadd.f32 %v1729, 1e-05
    %v1734 = vrsqrt.pop %v1730
    %v1735 = vmul.f32 %v1734, %v1730
    %v1736 = vmul.f32 %v1735, %v1734
    %v1737 = vmul.f32 0.5, %v1736
    %v1738 = vsub.f32 1.5, %v1737
    %v1739 = vmul.f32 %v1734, %v1738
    %vm1740 = vweird.f32 %v1730
    %vm1741 = vweird.f32 %v1734
    %vm1742 = vmor %vm1740, %vm1741
    %v1743 = vsel %vm1742, %v1734, %v1739
    %v1744 = vrsqrt.pop %v1731
    %v1745 = vmul.f32 %v1744, %v1731
    %v1746 = vmul.f32 %v1745, %v1744
    %v1747 = vmul.f32 0.5, %v1746
    %v1748 = vsub.f32 1.5, %v1747
    %v1749 = vmul.f32 %v1744, %v1748
    %vm1750 = vweird.f32 %v1731
    %vm1751 = vweird.f32 %v1744
    %vm1752 = vmor %vm1750, %vm1751
    %v1753 = vsel %vm1752, %v1744, %v1749
    %v1754 = vrsqrt.pop %v1732
    %v1755 = vmul.f32 %v1754, %v1732
    %v1756 = vmul.f32 %v1755, %v1754
    %v1757 = vmul.f32 0.5, %v1756
    %v1758 = vsub.f32 1.5, %v1757
    %v1759 = vmul.f32 %v1754, %v1758
    %vm1760 = vweird.f32 %v1732
    %vm1761 = vweird.f32 %v1754
    %vm1762 = vmor %vm1760, %vm1761
    %v1763 = vsel %vm1762, %v1754, %v1759
    %v1764 = vrsqrt.pop %v1733
    %v1765 = vmul.f32 %v1764, %v1733
    %v1766 = vmul.f32 %v1765, %v1764
    %v1767 = vmul.f32 0.5, %v1766
    %v1768 = vsub.f32 1.5, %v1767
    %v1769 = vmul.f32 %v1764, %v1768
    %vm1770 = vweird.f32 %v1733
    %vm1771 = vweird.f32 %v1764
    %vm1772 = vmor %vm1770, %vm1771
    %v1773 = vsel %vm1772, %v1764, %v1769
    %v1774 = vsub.f32 %v178, %v1706
    %v1775 = vsub.f32 %v179, %v1707
    %v1776 = vsub.f32 %v180, %v1708
    %v1777 = vsub.f32 %v181, %v1709
    %v1778 = vmul.f32 %v1774, %v1743
    %v1779 = vmul.f32 %v1775, %v1753
    %v1780 = vmul.f32 %v1776, %v1763
    %v1781 = vmul.f32 %v1777, %v1773
    %v1782 = vmul.f32 %v1778, %v382
    %v1783 = vmul.f32 %v1779, %v382
    %v1784 = vmul.f32 %v1780, %v382
    %v1785 = vmul.f32 %v1781, %v382
    %v1786 = vadd.f32 %v1782, %v389
    %v1787 = vadd.f32 %v1783, %v389
    %v1788 = vadd.f32 %v1784, %v389
    %v1789 = vadd.f32 %v1785, %v389
    %v1790 = vsub.f32 %v1678, %v1706
    %v1791 = vsub.f32 %v1679, %v1707
    %v1792 = vsub.f32 %v1680, %v1708
    %v1793 = vsub.f32 %v1681, %v1709
    %v1794 = vmul.f32 %v1790, %v1743
    %v1795 = vmul.f32 %v1791, %v1753
    %v1796 = vmul.f32 %v1792, %v1763
    %v1797 = vmul.f32 %v1793, %v1773
    %v1798 = vmul.f32 %v1794, %v404
    %v1799 = vmul.f32 %v1795, %v404
    %v1800 = vmul.f32 %v1796, %v404
    %v1801 = vmul.f32 %v1797, %v404
    %v1802 = vadd.f32 %v1798, %v411
    %v1803 = vadd.f32 %v1799, %v411
    %v1804 = vadd.f32 %v1800, %v411
    %v1805 = vadd.f32 %v1801, %v411
    %1806 = vmatpush.msra.mxu0 %v221
    %1807 = vmatpush.msra.mxu0 %v220
    %1808 = vmatpush.msra.mxu0 %v219
    %1809 = vmatpush.msra.mxu0 %v218
    %1810 = vmatpush.msra.mxu0 %v217
    %1811 = vmatpush.msra.mxu0 %v216
    %1812 = vmatpush.msra.mxu0 %v215
    %1813 = vmatpush.msra.mxu0 %v214
    %1814 = vmatpush.msra.mxu0 %v213
    %1815 = vmatpush.msra.mxu0 %v212
    %1816 = vmatpush.msra.mxu0 %v211
    %1817 = vmatpush.msra.mxu0 %v210
    %1818 = vmatpush.msra.mxu0 %v209
    %1819 = vmatpush.msra.mxu0 %v208
    %1820 = vmatpush.msra.mxu0 %v207
    %1821 = vmatpush.msra.mxu0 %v206
    %1822 = vmatmul.f32.gmra.mxu0 %v1802
    %v1823 = vpop.f32.mrf.mxu0
    %v1824 = vadd.f32 0.0, %v1823
    %1825 = vmatmul.f32.gmra.mxu0 %v1803
    %v1826 = vpop.f32.mrf.mxu0
    %v1827 = vadd.f32 0.0, %v1826
    %1828 = vmatmul.f32.gmra.mxu0 %v1804
    %v1829 = vpop.f32.mrf.mxu0
    %v1830 = vadd.f32 0.0, %v1829
    %1831 = vmatmul.f32.gmra.mxu0 %v1805
    %v1832 = vpop.f32.mrf.mxu0
    %v1833 = vadd.f32 0.0, %v1832
    %1834 = vdwg.mxu0
    %1835 = vmatpush.msra.mxu0 %v205
    %1836 = vmatpush.msra.mxu0 %v204
    %1837 = vmatpush.msra.mxu0 %v203
    %1838 = vmatpush.msra.mxu0 %v202
    %1839 = vmatpush.msra.mxu0 %v201
    %1840 = vmatpush.msra.mxu0 %v200
    %1841 = vmatpush.msra.mxu0 %v199
    %1842 = vmatpush.msra.mxu0 %v198
    %1843 = vmatpush.msra.mxu0 %v197
    %1844 = vmatpush.msra.mxu0 %v196
    %1845 = vmatpush.msra.mxu0 %v195
    %1846 = vmatpush.msra.mxu0 %v194
    %1847 = vmatpush.msra.mxu0 %v193
    %1848 = vmatpush.msra.mxu0 %v192
    %1849 = vmatpush.msra.mxu0 %v191
    %1850 = vmatpush.msra.mxu0 %v190
    %1851 = vmatmul.f32.gmra.mxu0 %v1786
    %v1852 = vpop.f32.mrf.mxu0
    %v1853 = vadd.f32 %v1824, %v1852
    %1854 = vmatmul.f32.gmra.mxu0 %v1787
    %v1855 = vpop.f32.mrf.mxu0
    %v1856 = vadd.f32 %v1827, %v1855
    %1857 = vmatmul.f32.gmra.mxu0 %v1788
    %v1858 = vpop.f32.mrf.mxu0
    %v1859 = vadd.f32 %v1830, %v1858
    %1860 = vmatmul.f32.gmra.mxu0 %v1789
    %v1861 = vpop.f32.mrf.mxu0
    %v1862 = vadd.f32 %v1833, %v1861
    %1863 = vdwg.mxu0
    %v1864 = vadd.f32 %v1853, %v476
    %v1865 = vadd.f32 %v1856, %v476
    %v1866 = vadd.f32 %v1859, %v476
    %v1867 = vadd.f32 %v1862, %v476
    %v1868 = vmul.f32 %v1864, 0.5
    %v1869 = vmul.f32 %v1865, 0.5
    %v1870 = vmul.f32 %v1866, 0.5
    %v1871 = vmul.f32 %v1867, 0.5
    %v1872 = vmul.f32 %v1864, %v1864
    %v1873 = vmul.f32 %v1865, %v1865
    %v1874 = vmul.f32 %v1866, %v1866
    %v1875 = vmul.f32 %v1867, %v1867
    %v1876 = vmul.f32 %v1872, %v1864
    %v1877 = vmul.f32 %v1873, %v1865
    %v1878 = vmul.f32 %v1874, %v1866
    %v1879 = vmul.f32 %v1875, %v1867
    %v1880 = vmul.f32 %v1876, 0.044715
    %v1881 = vmul.f32 %v1877, 0.044715
    %v1882 = vmul.f32 %v1878, 0.044715
    %v1883 = vmul.f32 %v1879, 0.044715
    %v1884 = vadd.f32 %v1864, %v1880
    %v1885 = vadd.f32 %v1865, %v1881
    %v1886 = vadd.f32 %v1866, %v1882
    %v1887 = vadd.f32 %v1867, %v1883
    %v1888 = vmul.f32 %v1884, 0.7978846
    %v1889 = vmul.f32 %v1885, 0.7978846
    %v1890 = vmul.f32 %v1886, 0.7978846
    %v1891 = vmul.f32 %v1887, 0.7978846
    %v1892 = vtanh.pop %v1888
    %v1893 = vtanh.pop %v1889
    %v1894 = vtanh.pop %v1890
    %v1895 = vtanh.pop %v1891
    %v1896 = vadd.f32 %v1892, 1.0
    %v1897 = vadd.f32 %v1893, 1.0
    %v1898 = vadd.f32 %v1894, 1.0
    %v1899 = vadd.f32 %v1895, 1.0
    %v1900 = vmul.f32 %v1868, %v1896
    %v1901 = vmul.f32 %v1869, %v1897
    %v1902 = vmul.f32 %v1870, %v1898
    %v1903 = vmul.f32 %v1871, %v1899
    %1904 = vmatpush.msra.mxu0 %v238
    %1905 = vmatpush.msra.mxu0 %v237
    %1906 = vmatpush.msra.mxu0 %v236
    %1907 = vmatpush.msra.mxu0 %v235
    %1908 = vmatpush.msra.mxu0 %v234
    %1909 = vmatpush.msra.mxu0 %v233
    %1910 = vmatpush.msra.mxu0 %v232
    %1911 = vmatpush.msra.mxu0 %v231
    %1912 = vmatpush.msra.mxu0 %v230
    %1913 = vmatpush.msra.mxu0 %v229
    %1914 = vmatpush.msra.mxu0 %v228
    %1915 = vmatpush.msra.mxu0 %v227
    %1916 = vmatpush.msra.mxu0 %v226
    %1917 = vmatpush.msra.mxu0 %v225
    %1918 = vmatpush.msra.mxu0 %v224
    %1919 = vmatpush.msra.mxu0 %v223
    %1920 = vmatmul.f32.gmra.mxu0 %v1900
    %v1921 = vpop.f32.mrf.mxu0
    %v1922 = vadd.f32 %v519, %v1921
    %1923 = vmatmul.f32.gmra.mxu0 %v1901
    %v1924 = vpop.f32.mrf.mxu0
    %v1925 = vadd.f32 %v519, %v1924
    %1926 = vmatmul.f32.gmra.mxu0 %v1902
    %v1927 = vpop.f32.mrf.mxu0
    %v1928 = vadd.f32 %v519, %v1927
    %1929 = vmatmul.f32.gmra.mxu0 %v1903
    %v1930 = vpop.f32.mrf.mxu0
    %v1931 = vadd.f32 %v519, %v1930
    %1932 = vdwg.mxu0
    %v1933 = vmul.f32 %v1922, 0.5
    %v1934 = vmul.f32 %v1925, 0.5
    %v1935 = vmul.f32 %v1928, 0.5
    %v1936 = vmul.f32 %v1931, 0.5
    %v1937 = vmul.f32 %v1922, %v1922
    %v1938 = vmul.f32 %v1925, %v1925
    %v1939 = vmul.f32 %v1928, %v1928
    %v1940 = vmul.f32 %v1931, %v1931
    %v1941 = vmul.f32 %v1937, %v1922
    %v1942 = vmul.f32 %v1938, %v1925
    %v1943 = vmul.f32 %v1939, %v1928
    %v1944 = vmul.f32 %v1940, %v1931
    %v1945 = vmul.f32 %v1941, 0.044715
    %v1946 = vmul.f32 %v1942, 0.044715
    %v1947 = vmul.f32 %v1943, 0.044715
    %v1948 = vmul.f32 %v1944, 0.044715
    %v1949 = vadd.f32 %v1922, %v1945
    %v1950 = vadd.f32 %v1925, %v1946
    %v1951 = vadd.f32 %v1928, %v1947
    %v1952 = vadd.f32 %v1931, %v1948
    %v1953 = vmul.f32 %v1949, 0.7978846
    %v1954 = vmul.f32 %v1950, 0.7978846
    %v1955 = vmul.f32 %v1951, 0.7978846
    %v1956 = vmul.f32 %v1952, 0.7978846
    %v1957 = vtanh.pop %v1953
    %v1958 = vtanh.pop %v1954
    %v1959 = vtanh.pop %v1955
    %v1960 = vtanh.pop %v1956
    %v1961 = vadd.f32 %v1957, 1.0
    %v1962 = vadd.f32 %v1958, 1.0
    %v1963 = vadd.f32 %v1959, 1.0
    %v1964 = vadd.f32 %v1960, 1.0
    %v1965 = vmul.f32 %v1933, %v1961
    %v1966 = vmul.f32 %v1934, %v1962
    %v1967 = vmul.f32 %v1935, %v1963
    %v1968 = vmul.f32 %v1936, %v1964
    %1969 = vmatpush.msra.mxu0 %v255
    %1970 = vmatpush.msra.mxu0 %v254
    %1971 = vmatpush.msra.mxu0 %v253
    %1972 = vmatpush.msra.mxu0 %v252
    %1973 = vmatpush.msra.mxu0 %v251
    %1974 = vmatpush.msra.mxu0 %v250
    %1975 = vmatpush.msra.mxu0 %v249
    %1976 = vmatpush.msra.mxu0 %v248
    %1977 = vmatpush.msra.mxu0 %v247
    %1978 = vmatpush.msra.mxu0 %v246
    %1979 = vmatpush.msra.mxu0 %v245
    %1980 = vmatpush.msra.mxu0 %v244
    %1981 = vmatpush.msra.mxu0 %v243
    %1982 = vmatpush.msra.mxu0 %v242
    %1983 = vmatpush.msra.mxu0 %v241
    %1984 = vmatpush.msra.mxu0 %v240
    %1985 = vmatmul.f32.gmra.mxu0 %v1965
    %v1986 = vpop.f32.mrf.mxu0
    %v1987 = vadd.f32 %v587, %v1986
    %1988 = vmatmul.f32.gmra.mxu0 %v1966
    %v1989 = vpop.f32.mrf.mxu0
    %v1990 = vadd.f32 %v587, %v1989
    %1991 = vmatmul.f32.gmra.mxu0 %v1967
    %v1992 = vpop.f32.mrf.mxu0
    %v1993 = vadd.f32 %v587, %v1992
    %1994 = vmatmul.f32.gmra.mxu0 %v1968
    %v1995 = vpop.f32.mrf.mxu0
    %v1996 = vadd.f32 %v587, %v1995
    %1997 = vdwg.mxu0
    %1998 = vset.pattern.permute.xlu0 4
    %1999 = vperm.xlu0 %1998, %v182
    %v2000 = vpop.permute.xlu0 %1999
    %2002 = vset.pattern.permute.xlu0 4
    %2003 = vperm.xlu0 %2002, %v183
    %v2004 = vpop.permute.xlu0 %2003
    %2006 = vset.pattern.permute.xlu0 4
    %2007 = vperm.xlu0 %2006, %v184
    %v2008 = vpop.permute.xlu0 %2007
    %2010 = vset.pattern.permute.xlu0 4
    %2011 = vperm.xlu0 %2010, %v185
    %v2012 = vpop.permute.xlu0 %2011
    %v2014 = vmul.f32 %v2000, %v1987
    %v2015 = vmul.f32 %v2004, %v1990
    %v2016 = vmul.f32 %v2008, %v1993
    %v2017 = vmul.f32 %v2012, %v1996
    %v2018 = vadd.f32 %v1674, %v2014
    %v2019 = vadd.f32 %v1675, %v2015
    %v2020 = vadd.f32 %v1676, %v2016
    %v2021 = vadd.f32 %v1677, %v2017
    %v2022 = vld [vmem:[#allocation2 + $0x28] sm:$0xff]
    %v2023 = vld [vmem:[#allocation2 + $0x68] sm:$0xff]
    %v2024 = vld [vmem:[#allocation2 + $0xa8] sm:$0xff]
    %v2025 = vld [vmem:[#allocation2 + $0xe8] sm:$0xff]
    %2026 = vadd.xlane.f32.xlu0 %v2022
    %v2027 = vpop.xlane.xlu0 %2026
    %2028 = vadd.xlane.f32.xlu0 %v2023
    %v2029 = vpop.xlane.xlu0 %2028
    %2030 = vadd.xlane.f32.xlu0 %v2024
    %v2031 = vpop.xlane.xlu0 %2030
    %2032 = vadd.xlane.f32.xlu0 %v2025
    %v2033 = vpop.xlane.xlu0 %2032
    %v2034 = vmul.f32 %v2022, %v2022
    %v2035 = vmul.f32 %v2023, %v2023
    %v2036 = vmul.f32 %v2024, %v2024
    %v2037 = vmul.f32 %v2025, %v2025
    %2038 = vadd.xlane.f32.xlu0 %v2034
    %v2039 = vpop.xlane.xlu0 %2038
    %2040 = vadd.xlane.f32.xlu0 %v2035
    %v2041 = vpop.xlane.xlu0 %2040
    %2042 = vadd.xlane.f32.xlu0 %v2036
    %v2043 = vpop.xlane.xlu0 %2042
    %2044 = vadd.xlane.f32.xlu0 %v2037
    %v2045 = vpop.xlane.xlu0 %2044
    %v2046 = vadd.f32 %v258, %v2027
    %v2047 = vadd.f32 %v260, %v2029
    %v2048 = vadd.f32 %v262, %v2031
    %v2049 = vadd.f32 %v264, %v2033
    %v2050 = vmul.f32 %v2046, 0.00390625
    %v2051 = vmul.f32 %v2047, 0.00390625
    %v2052 = vmul.f32 %v2048, 0.00390625
    %v2053 = vmul.f32 %v2049, 0.00390625
    %v2054 = vadd.f32 %v270, %v2039
    %v2055 = vadd.f32 %v272, %v2041
    %v2056 = vadd.f32 %v274, %v2043
    %v2057 = vadd.f32 %v276, %v2045
    %v2058 = vmul.f32 %v2054, 0.00390625
    %v2059 = vmul.f32 %v2055, 0.00390625
    %v2060 = vmul.f32 %v2056, 0.00390625
    %v2061 = vmul.f32 %v2057, 0.00390625
    %v2062 = vmul.f32 %v2050, %v2050
    %v2063 = vmul.f32 %v2051, %v2051
    %v2064 = vmul.f32 %v2052, %v2052
    %v2065 = vmul.f32 %v2053, %v2053
    %v2066 = vsub.f32 %v2058, %v2062
    %v2067 = vsub.f32 %v2059, %v2063
    %v2068 = vsub.f32 %v2060, %v2064
    %v2069 = vsub.f32 %v2061, %v2065
    %v2070 = vmax.f32 %v2066, 0.0
    %v2071 = vmax.f32 %v2067, 0.0
    %v2072 = vmax.f32 %v2068, 0.0
    %v2073 = vmax.f32 %v2069, 0.0
    %v2074 = vadd.f32 %v2070, 1e-05
    %v2075 = vadd.f32 %v2071, 1e-05
    %v2076 = vadd.f32 %v2072, 1e-05
    %v2077 = vadd.f32 %v2073, 1e-05
    %v2078 = vrsqrt.pop %v2074
    %v2079 = vmul.f32 %v2078, %v2074
    %v2080 = vmul.f32 %v2079, %v2078
    %v2081 = vmul.f32 0.5, %v2080
    %v2082 = vsub.f32 1.5, %v2081
    %v2083 = vmul.f32 %v2078, %v2082
    %vm2084 = vweird.f32 %v2074
    %vm2085 = vweird.f32 %v2078
    %vm2086 = vmor %vm2084, %vm2085
    %v2087 = vsel %vm2086, %v2078, %v2083
    %v2088 = vrsqrt.pop %v2075
    %v2089 = vmul.f32 %v2088, %v2075
    %v2090 = vmul.f32 %v2089, %v2088
    %v2091 = vmul.f32 0.5, %v2090
    %v2092 = vsub.f32 1.5, %v2091
    %v2093 = vmul.f32 %v2088, %v2092
    %vm2094 = vweird.f32 %v2075
    %vm2095 = vweird.f32 %v2088
    %vm2096 = vmor %vm2094, %vm2095
    %v2097 = vsel %vm2096, %v2088, %v2093
    %v2098 = vrsqrt.pop %v2076
    %v2099 = vmul.f32 %v2098, %v2076
    %v2100 = vmul.f32 %v2099, %v2098
    %v2101 = vmul.f32 0.5, %v2100
    %v2102 = vsub.f32 1.5, %v2101
    %v2103 = vmul.f32 %v2098, %v2102
    %vm2104 = vweird.f32 %v2076
    %vm2105 = vweird.f32 %v2098
    %vm2106 = vmor %vm2104, %vm2105
    %v2107 = vsel %vm2106, %v2098, %v2103
    %v2108 = vrsqrt.pop %v2077
    %v2109 = vmul.f32 %v2108, %v2077
    %v2110 = vmul.f32 %v2109, %v2108
    %v2111 = vmul.f32 0.5, %v2110
    %v2112 = vsub.f32 1.5, %v2111
    %v2113 = vmul.f32 %v2108, %v2112
    %vm2114 = vweird.f32 %v2077
    %vm2115 = vweird.f32 %v2108
    %vm2116 = vmor %vm2114, %vm2115
    %v2117 = vsel %vm2116, %v2108, %v2113
    %v2118 = vsub.f32 %v178, %v2050
    %v2119 = vsub.f32 %v179, %v2051
    %v2120 = vsub.f32 %v180, %v2052
    %v2121 = vsub.f32 %v181, %v2053
    %v2122 = vmul.f32 %v2118, %v2087
    %v2123 = vmul.f32 %v2119, %v2097
    %v2124 = vmul.f32 %v2120, %v2107
    %v2125 = vmul.f32 %v2121, %v2117
    %v2126 = vmul.f32 %v2122, %v382
    %v2127 = vmul.f32 %v2123, %v382
    %v2128 = vmul.f32 %v2124, %v382
    %v2129 = vmul.f32 %v2125, %v382
    %v2130 = vadd.f32 %v2126, %v389
    %v2131 = vadd.f32 %v2127, %v389
    %v2132 = vadd.f32 %v2128, %v389
    %v2133 = vadd.f32 %v2129, %v389
    %v2134 = vsub.f32 %v2022, %v2050
    %v2135 = vsub.f32 %v2023, %v2051
    %v2136 = vsub.f32 %v2024, %v2052
    %v2137 = vsub.f32 %v2025, %v2053
    %v2138 = vmul.f32 %v2134, %v2087
    %v2139 = vmul.f32 %v2135, %v2097
    %v2140 = vmul.f32 %v2136, %v2107
    %v2141 = vmul.f32 %v2137, %v2117
    %v2142 = vmul.f32 %v2138, %v404
    %v2143 = vmul.f32 %v2139, %v404
    %v2144 = vmul.f32 %v2140, %v404
    %v2145 = vmul.f32 %v2141, %v404
    %v2146 = vadd.f32 %v2142, %v411
    %v2147 = vadd.f32 %v2143, %v411
    %v2148 = vadd.f32 %v2144, %v411
    %v2149 = vadd.f32 %v2145, %v411
    %2150 = vmatpush.msra.mxu0 %v221
    %2151 = vmatpush.msra.mxu0 %v220
    %2152 = vmatpush.msra.mxu0 %v219
    %2153 = vmatpush.msra.mxu0 %v218
    %2154 = vmatpush.msra.mxu0 %v217
    %2155 = vmatpush.msra.mxu0 %v216
    %2156 = vmatpush.msra.mxu0 %v215
    %2157 = vmatpush.msra.mxu0 %v214
    %2158 = vmatpush.msra.mxu0 %v213
    %2159 = vmatpush.msra.mxu0 %v212
    %2160 = vmatpush.msra.mxu0 %v211
    %2161 = vmatpush.msra.mxu0 %v210
    %2162 = vmatpush.msra.mxu0 %v209
    %2163 = vmatpush.msra.mxu0 %v208
    %2164 = vmatpush.msra.mxu0 %v207
    %2165 = vmatpush.msra.mxu0 %v206
    %2166 = vmatmul.f32.gmra.mxu0 %v2146
    %v2167 = vpop.f32.mrf.mxu0
    %v2168 = vadd.f32 0.0, %v2167
    %2169 = vmatmul.f32.gmra.mxu0 %v2147
    %v2170 = vpop.f32.mrf.mxu0
    %v2171 = vadd.f32 0.0, %v2170
    %2172 = vmatmul.f32.gmra.mxu0 %v2148
    %v2173 = vpop.f32.mrf.mxu0
    %v2174 = vadd.f32 0.0, %v2173
    %2175 = vmatmul.f32.gmra.mxu0 %v2149
    %v2176 = vpop.f32.mrf.mxu0
    %v2177 = vadd.f32 0.0, %v2176
    %2178 = vdwg.mxu0
    %2179 = vmatpush.msra.mxu0 %v205
    %2180 = vmatpush.msra.mxu0 %v204
    %2181 = vmatpush.msra.mxu0 %v203
    %2182 = vmatpush.msra.mxu0 %v202
    %2183 = vmatpush.msra.mxu0 %v201
    %2184 = vmatpush.msra.mxu0 %v200
    %2185 = vmatpush.msra.mxu0 %v199
    %2186 = vmatpush.msra.mxu0 %v198
    %2187 = vmatpush.msra.mxu0 %v197
    %2188 = vmatpush.msra.mxu0 %v196
    %2189 = vmatpush.msra.mxu0 %v195
    %2190 = vmatpush.msra.mxu0 %v194
    %2191 = vmatpush.msra.mxu0 %v193
    %2192 = vmatpush.msra.mxu0 %v192
    %2193 = vmatpush.msra.mxu0 %v191
    %2194 = vmatpush.msra.mxu0 %v190
    %2195 = vmatmul.f32.gmra.mxu0 %v2130
    %v2196 = vpop.f32.mrf.mxu0
    %v2197 = vadd.f32 %v2168, %v2196
    %2198 = vmatmul.f32.gmra.mxu0 %v2131
    %v2199 = vpop.f32.mrf.mxu0
    %v2200 = vadd.f32 %v2171, %v2199
    %2201 = vmatmul.f32.gmra.mxu0 %v2132
    %v2202 = vpop.f32.mrf.mxu0
    %v2203 = vadd.f32 %v2174, %v2202
    %2204 = vmatmul.f32.gmra.mxu0 %v2133
    %v2205 = vpop.f32.mrf.mxu0
    %v2206 = vadd.f32 %v2177, %v2205
    %2207 = vdwg.mxu0
    %v2208 = vadd.f32 %v2197, %v476
    %v2209 = vadd.f32 %v2200, %v476
    %v2210 = vadd.f32 %v2203, %v476
    %v2211 = vadd.f32 %v2206, %v476
    %v2212 = vmul.f32 %v2208, 0.5
    %v2213 = vmul.f32 %v2209, 0.5
    %v2214 = vmul.f32 %v2210, 0.5
    %v2215 = vmul.f32 %v2211, 0.5
    %v2216 = vmul.f32 %v2208, %v2208
    %v2217 = vmul.f32 %v2209, %v2209
    %v2218 = vmul.f32 %v2210, %v2210
    %v2219 = vmul.f32 %v2211, %v2211
    %v2220 = vmul.f32 %v2216, %v2208
    %v2221 = vmul.f32 %v2217, %v2209
    %v2222 = vmul.f32 %v2218, %v2210
    %v2223 = vmul.f32 %v2219, %v2211
    %v2224 = vmul.f32 %v2220, 0.044715
    %v2225 = vmul.f32 %v2221, 0.044715
    %v2226 = vmul.f32 %v2222, 0.044715
    %v2227 = vmul.f32 %v2223, 0.044715
    %v2228 = vadd.f32 %v2208, %v2224
    %v2229 = vadd.f32 %v2209, %v2225
    %v2230 = vadd.f32 %v2210, %v2226
    %v2231 = vadd.f32 %v2211, %v2227
    %v2232 = vmul.f32 %v2228, 0.7978846
    %v2233 = vmul.f32 %v2229, 0.7978846
    %v2234 = vmul.f32 %v2230, 0.7978846
    %v2235 = vmul.f32 %v2231, 0.7978846
    %v2236 = vtanh.pop %v2232
    %v2237 = vtanh.pop %v2233
    %v2238 = vtanh.pop %v2234
    %v2239 = vtanh.pop %v2235
    %v2240 = vadd.f32 %v2236, 1.0
    %v2241 = vadd.f32 %v2237, 1.0
    %v2242 = vadd.f32 %v2238, 1.0
    %v2243 = vadd.f32 %v2239, 1.0
    %v2244 = vmul.f32 %v2212, %v2240
    %v2245 = vmul.f32 %v2213, %v2241
    %v2246 = vmul.f32 %v2214, %v2242
    %v2247 = vmul.f32 %v2215, %v2243
    %2248 = vmatpush.msra.mxu0 %v238
    %2249 = vmatpush.msra.mxu0 %v237
    %2250 = vmatpush.msra.mxu0 %v236
    %2251 = vmatpush.msra.mxu0 %v235
    %2252 = vmatpush.msra.mxu0 %v234
    %2253 = vmatpush.msra.mxu0 %v233
    %2254 = vmatpush.msra.mxu0 %v232
    %2255 = vmatpush.msra.mxu0 %v231
    %2256 = vmatpush.msra.mxu0 %v230
    %2257 = vmatpush.msra.mxu0 %v229
    %2258 = vmatpush.msra.mxu0 %v228
    %2259 = vmatpush.msra.mxu0 %v227
    %2260 = vmatpush.msra.mxu0 %v226
    %2261 = vmatpush.msra.mxu0 %v225
    %2262 = vmatpush.msra.mxu0 %v224
    %2263 = vmatpush.msra.mxu0 %v223
    %2264 = vmatmul.f32.gmra.mxu0 %v2244
    %v2265 = vpop.f32.mrf.mxu0
    %v2266 = vadd.f32 %v519, %v2265
    %2267 = vmatmul.f32.gmra.mxu0 %v2245
    %v2268 = vpop.f32.mrf.mxu0
    %v2269 = vadd.f32 %v519, %v2268
    %2270 = vmatmul.f32.gmra.mxu0 %v2246
    %v2271 = vpop.f32.mrf.mxu0
    %v2272 = vadd.f32 %v519, %v2271
    %2273 = vmatmul.f32.gmra.mxu0 %v2247
    %v2274 = vpop.f32.mrf.mxu0
    %v2275 = vadd.f32 %v519, %v2274
    %2276 = vdwg.mxu0
    %v2277 = vmul.f32 %v2266, 0.5
    %v2278 = vmul.f32 %v2269, 0.5
    %v2279 = vmul.f32 %v2272, 0.5
    %v2280 = vmul.f32 %v2275, 0.5
    %v2281 = vmul.f32 %v2266, %v2266
    %v2282 = vmul.f32 %v2269, %v2269
    %v2283 = vmul.f32 %v2272, %v2272
    %v2284 = vmul.f32 %v2275, %v2275
    %v2285 = vmul.f32 %v2281, %v2266
    %v2286 = vmul.f32 %v2282, %v2269
    %v2287 = vmul.f32 %v2283, %v2272
    %v2288 = vmul.f32 %v2284, %v2275
    %v2289 = vmul.f32 %v2285, 0.044715
    %v2290 = vmul.f32 %v2286, 0.044715
    %v2291 = vmul.f32 %v2287, 0.044715
    %v2292 = vmul.f32 %v2288, 0.044715
    %v2293 = vadd.f32 %v2266, %v2289
    %v2294 = vadd.f32 %v2269, %v2290
    %v2295 = vadd.f32 %v2272, %v2291
    %v2296 = vadd.f32 %v2275, %v2292
    %v2297 = vmul.f32 %v2293, 0.7978846
    %v2298 = vmul.f32 %v2294, 0.7978846
    %v2299 = vmul.f32 %v2295, 0.7978846
    %v2300 = vmul.f32 %v2296, 0.7978846
    %v2301 = vtanh.pop %v2297
    %v2302 = vtanh.pop %v2298
    %v2303 = vtanh.pop %v2299
    %v2304 = vtanh.pop %v2300
    %v2305 = vadd.f32 %v2301, 1.0
    %v2306 = vadd.f32 %v2302, 1.0
    %v2307 = vadd.f32 %v2303, 1.0
    %v2308 = vadd.f32 %v2304, 1.0
    %v2309 = vmul.f32 %v2277, %v2305
    %v2310 = vmul.f32 %v2278, %v2306
    %v2311 = vmul.f32 %v2279, %v2307
    %v2312 = vmul.f32 %v2280, %v2308
    %2313 = vmatpush.msra.mxu0 %v255
    %2314 = vmatpush.msra.mxu0 %v254
    %2315 = vmatpush.msra.mxu0 %v253
    %2316 = vmatpush.msra.mxu0 %v252
    %2317 = vmatpush.msra.mxu0 %v251
    %2318 = vmatpush.msra.mxu0 %v250
    %2319 = vmatpush.msra.mxu0 %v249
    %2320 = vmatpush.msra.mxu0 %v248
    %2321 = vmatpush.msra.mxu0 %v247
    %2322 = vmatpush.msra.mxu0 %v246
    %2323 = vmatpush.msra.mxu0 %v245
    %2324 = vmatpush.msra.mxu0 %v244
    %2325 = vmatpush.msra.mxu0 %v243
    %2326 = vmatpush.msra.mxu0 %v242
    %2327 = vmatpush.msra.mxu0 %v241
    %2328 = vmatpush.msra.mxu0 %v240
    %2329 = vmatmul.f32.gmra.mxu0 %v2309
    %v2330 = vpop.f32.mrf.mxu0
    %v2331 = vadd.f32 %v587, %v2330
    %2332 = vmatmul.f32.gmra.mxu0 %v2310
    %v2333 = vpop.f32.mrf.mxu0
    %v2334 = vadd.f32 %v587, %v2333
    %2335 = vmatmul.f32.gmra.mxu0 %v2311
    %v2336 = vpop.f32.mrf.mxu0
    %v2337 = vadd.f32 %v587, %v2336
    %2338 = vmatmul.f32.gmra.mxu0 %v2312
    %v2339 = vpop.f32.mrf.mxu0
    %v2340 = vadd.f32 %v587, %v2339
    %2341 = vdwg.mxu0
    %2342 = vset.pattern.permute.xlu0 5
    %2343 = vperm.xlu0 %2342, %v182
    %v2344 = vpop.permute.xlu0 %2343
    %2346 = vset.pattern.permute.xlu0 5
    %2347 = vperm.xlu0 %2346, %v183
    %v2348 = vpop.permute.xlu0 %2347
    %2350 = vset.pattern.permute.xlu0 5
    %2351 = vperm.xlu0 %2350, %v184
    %v2352 = vpop.permute.xlu0 %2351
    %2354 = vset.pattern.permute.xlu0 5
    %2355 = vperm.xlu0 %2354, %v185
    %v2356 = vpop.permute.xlu0 %2355
    %v2358 = vmul.f32 %v2344, %v2331
    %v2359 = vmul.f32 %v2348, %v2334
    %v2360 = vmul.f32 %v2352, %v2337
    %v2361 = vmul.f32 %v2356, %v2340
    %v2362 = vadd.f32 %v2018, %v2358
    %v2363 = vadd.f32 %v2019, %v2359
    %v2364 = vadd.f32 %v2020, %v2360
    %v2365 = vadd.f32 %v2021, %v2361
    %v2366 = vld [vmem:[#allocation2 + $0x30] sm:$0xff]
    %v2367 = vld [vmem:[#allocation2 + $0x70] sm:$0xff]
    %v2368 = vld [vmem:[#allocation2 + $0xb0] sm:$0xff]
    %v2369 = vld [vmem:[#allocation2 + $0xf0] sm:$0xff]
    %2370 = vadd.xlane.f32.xlu0 %v2366
    %v2371 = vpop.xlane.xlu0 %2370
    %2372 = vadd.xlane.f32.xlu0 %v2367
    %v2373 = vpop.xlane.xlu0 %2372
    %2374 = vadd.xlane.f32.xlu0 %v2368
    %v2375 = vpop.xlane.xlu0 %2374
    %2376 = vadd.xlane.f32.xlu0 %v2369
    %v2377 = vpop.xlane.xlu0 %2376
    %v2378 = vmul.f32 %v2366, %v2366
    %v2379 = vmul.f32 %v2367, %v2367
    %v2380 = vmul.f32 %v2368, %v2368
    %v2381 = vmul.f32 %v2369, %v2369
    %2382 = vadd.xlane.f32.xlu0 %v2378
    %v2383 = vpop.xlane.xlu0 %2382
    %2384 = vadd.xlane.f32.xlu0 %v2379
    %v2385 = vpop.xlane.xlu0 %2384
    %2386 = vadd.xlane.f32.xlu0 %v2380
    %v2387 = vpop.xlane.xlu0 %2386
    %2388 = vadd.xlane.f32.xlu0 %v2381
    %v2389 = vpop.xlane.xlu0 %2388
    %v2390 = vadd.f32 %v258, %v2371
    %v2391 = vadd.f32 %v260, %v2373
    %v2392 = vadd.f32 %v262, %v2375
    %v2393 = vadd.f32 %v264, %v2377
    %v2394 = vmul.f32 %v2390, 0.00390625
    %v2395 = vmul.f32 %v2391, 0.00390625
    %v2396 = vmul.f32 %v2392, 0.00390625
    %v2397 = vmul.f32 %v2393, 0.00390625
    %v2398 = vadd.f32 %v270, %v2383
    %v2399 = vadd.f32 %v272, %v2385
    %v2400 = vadd.f32 %v274, %v2387
    %v2401 = vadd.f32 %v276, %v2389
    %v2402 = vmul.f32 %v2398, 0.00390625
    %v2403 = vmul.f32 %v2399, 0.00390625
    %v2404 = vmul.f32 %v2400, 0.00390625
    %v2405 = vmul.f32 %v2401, 0.00390625
    %v2406 = vmul.f32 %v2394, %v2394
    %v2407 = vmul.f32 %v2395, %v2395
    %v2408 = vmul.f32 %v2396, %v2396
    %v2409 = vmul.f32 %v2397, %v2397
    %v2410 = vsub.f32 %v2402, %v2406
    %v2411 = vsub.f32 %v2403, %v2407
    %v2412 = vsub.f32 %v2404, %v2408
    %v2413 = vsub.f32 %v2405, %v2409
    %v2414 = vmax.f32 %v2410, 0.0
    %v2415 = vmax.f32 %v2411, 0.0
    %v2416 = vmax.f32 %v2412, 0.0
    %v2417 = vmax.f32 %v2413, 0.0
    %v2418 = vadd.f32 %v2414, 1e-05
    %v2419 = vadd.f32 %v2415, 1e-05
    %v2420 = vadd.f32 %v2416, 1e-05
    %v2421 = vadd.f32 %v2417, 1e-05
    %v2422 = vrsqrt.pop %v2418
    %v2423 = vmul.f32 %v2422, %v2418
    %v2424 = vmul.f32 %v2423, %v2422
    %v2425 = vmul.f32 0.5, %v2424
    %v2426 = vsub.f32 1.5, %v2425
    %v2427 = vmul.f32 %v2422, %v2426
    %vm2428 = vweird.f32 %v2418
    %vm2429 = vweird.f32 %v2422
    %vm2430 = vmor %vm2428, %vm2429
    %v2431 = vsel %vm2430, %v2422, %v2427
    %v2432 = vrsqrt.pop %v2419
    %v2433 = vmul.f32 %v2432, %v2419
    %v2434 = vmul.f32 %v2433, %v2432
    %v2435 = vmul.f32 0.5, %v2434
    %v2436 = vsub.f32 1.5, %v2435
    %v2437 = vmul.f32 %v2432, %v2436
    %vm2438 = vweird.f32 %v2419
    %vm2439 = vweird.f32 %v2432
    %vm2440 = vmor %vm2438, %vm2439
    %v2441 = vsel %vm2440, %v2432, %v2437
    %v2442 = vrsqrt.pop %v2420
    %v2443 = vmul.f32 %v2442, %v2420
    %v2444 = vmul.f32 %v2443, %v2442
    %v2445 = vmul.f32 0.5, %v2444
    %v2446 = vsub.f32 1.5, %v2445
    %v2447 = vmul.f32 %v2442, %v2446
    %vm2448 = vweird.f32 %v2420
    %vm2449 = vweird.f32 %v2442
    %vm2450 = vmor %vm2448, %vm2449
    %v2451 = vsel %vm2450, %v2442, %v2447
    %v2452 = vrsqrt.pop %v2421
    %v2453 = vmul.f32 %v2452, %v2421
    %v2454 = vmul.f32 %v2453, %v2452
    %v2455 = vmul.f32 0.5, %v2454
    %v2456 = vsub.f32 1.5, %v2455
    %v2457 = vmul.f32 %v2452, %v2456
    %vm2458 = vweird.f32 %v2421
    %vm2459 = vweird.f32 %v2452
    %vm2460 = vmor %vm2458, %vm2459
    %v2461 = vsel %vm2460, %v2452, %v2457
    %v2462 = vsub.f32 %v178, %v2394
    %v2463 = vsub.f32 %v179, %v2395
    %v2464 = vsub.f32 %v180, %v2396
    %v2465 = vsub.f32 %v181, %v2397
    %v2466 = vmul.f32 %v2462, %v2431
    %v2467 = vmul.f32 %v2463, %v2441
    %v2468 = vmul.f32 %v2464, %v2451
    %v2469 = vmul.f32 %v2465, %v2461
    %v2470 = vmul.f32 %v2466, %v382
    %v2471 = vmul.f32 %v2467, %v382
    %v2472 = vmul.f32 %v2468, %v382
    %v2473 = vmul.f32 %v2469, %v382
    %v2474 = vadd.f32 %v2470, %v389
    %v2475 = vadd.f32 %v2471, %v389
    %v2476 = vadd.f32 %v2472, %v389
    %v2477 = vadd.f32 %v2473, %v389
    %v2478 = vsub.f32 %v2366, %v2394
    %v2479 = vsub.f32 %v2367, %v2395
    %v2480 = vsub.f32 %v2368, %v2396
    %v2481 = vsub.f32 %v2369, %v2397
    %v2482 = vmul.f32 %v2478, %v2431
    %v2483 = vmul.f32 %v2479, %v2441
    %v2484 = vmul.f32 %v2480, %v2451
    %v2485 = vmul.f32 %v2481, %v2461
    %v2486 = vmul.f32 %v2482, %v404
    %v2487 = vmul.f32 %v2483, %v404
    %v2488 = vmul.f32 %v2484, %v404
    %v2489 = vmul.f32 %v2485, %v404
    %v2490 = vadd.f32 %v2486, %v411
    %v2491 = vadd.f32 %v2487, %v411
    %v2492 = vadd.f32 %v2488, %v411
    %v2493 = vadd.f32 %v2489, %v411
    %2494 = vmatpush.msra.mxu0 %v221
    %2495 = vmatpush.msra.mxu0 %v220
    %2496 = vmatpush.msra.mxu0 %v219
    %2497 = vmatpush.msra.mxu0 %v218
    %2498 = vmatpush.msra.mxu0 %v217
    %2499 = vmatpush.msra.mxu0 %v216
    %2500 = vmatpush.msra.mxu0 %v215
    %2501 = vmatpush.msra.mxu0 %v214
    %2502 = vmatpush.msra.mxu0 %v213
    %2503 = vmatpush.msra.mxu0 %v212
    %2504 = vmatpush.msra.mxu0 %v211
    %2505 = vmatpush.msra.mxu0 %v210
    %2506 = vmatpush.msra.mxu0 %v209
    %2507 = vmatpush.msra.mxu0 %v208
    %2508 = vmatpush.msra.mxu0 %v207
    %2509 = vmatpush.msra.mxu0 %v206
    %2510 = vmatmul.f32.gmra.mxu0 %v2490
    %v2511 = vpop.f32.mrf.mxu0
    %v2512 = vadd.f32 0.0, %v2511
    %2513 = vmatmul.f32.gmra.mxu0 %v2491
    %v2514 = vpop.f32.mrf.mxu0
    %v2515 = vadd.f32 0.0, %v2514
    %2516 = vmatmul.f32.gmra.mxu0 %v2492
    %v2517 = vpop.f32.mrf.mxu0
    %v2518 = vadd.f32 0.0, %v2517
    %2519 = vmatmul.f32.gmra.mxu0 %v2493
    %v2520 = vpop.f32.mrf.mxu0
    %v2521 = vadd.f32 0.0, %v2520
    %2522 = vdwg.mxu0
    %2523 = vmatpush.msra.mxu0 %v205
    %2524 = vmatpush.msra.mxu0 %v204
    %2525 = vmatpush.msra.mxu0 %v203
    %2526 = vmatpush.msra.mxu0 %v202
    %2527 = vmatpush.msra.mxu0 %v201
    %2528 = vmatpush.msra.mxu0 %v200
    %2529 = vmatpush.msra.mxu0 %v199
    %2530 = vmatpush.msra.mxu0 %v198
    %2531 = vmatpush.msra.mxu0 %v197
    %2532 = vmatpush.msra.mxu0 %v196
    %2533 = vmatpush.msra.mxu0 %v195
    %2534 = vmatpush.msra.mxu0 %v194
    %2535 = vmatpush.msra.mxu0 %v193
    %2536 = vmatpush.msra.mxu0 %v192
    %2537 = vmatpush.msra.mxu0 %v191
    %2538 = vmatpush.msra.mxu0 %v190
    %2539 = vmatmul.f32.gmra.mxu0 %v2474
    %v2540 = vpop.f32.mrf.mxu0
    %v2541 = vadd.f32 %v2512, %v2540
    %2542 = vmatmul.f32.gmra.mxu0 %v2475
    %v2543 = vpop.f32.mrf.mxu0
    %v2544 = vadd.f32 %v2515, %v2543
    %2545 = vmatmul.f32.gmra.mxu0 %v2476
    %v2546 = vpop.f32.mrf.mxu0
    %v2547 = vadd.f32 %v2518, %v2546
    %2548 = vmatmul.f32.gmra.mxu0 %v2477
    %v2549 = vpop.f32.mrf.mxu0
    %v2550 = vadd.f32 %v2521, %v2549
    %2551 = vdwg.mxu0
    %v2552 = vadd.f32 %v2541, %v476
    %v2553 = vadd.f32 %v2544, %v476
    %v2554 = vadd.f32 %v2547, %v476
    %v2555 = vadd.f32 %v2550, %v476
    %v2556 = vmul.f32 %v2552, 0.5
    %v2557 = vmul.f32 %v2553, 0.5
    %v2558 = vmul.f32 %v2554, 0.5
    %v2559 = vmul.f32 %v2555, 0.5
    %v2560 = vmul.f32 %v2552, %v2552
    %v2561 = vmul.f32 %v2553, %v2553
    %v2562 = vmul.f32 %v2554, %v2554
    %v2563 = vmul.f32 %v2555, %v2555
    %v2564 = vmul.f32 %v2560, %v2552
    %v2565 = vmul.f32 %v2561, %v2553
    %v2566 = vmul.f32 %v2562, %v2554
    %v2567 = vmul.f32 %v2563, %v2555
    %v2568 = vmul.f32 %v2564, 0.044715
    %v2569 = vmul.f32 %v2565, 0.044715
    %v2570 = vmul.f32 %v2566, 0.044715
    %v2571 = vmul.f32 %v2567, 0.044715
    %v2572 = vadd.f32 %v2552, %v2568
    %v2573 = vadd.f32 %v2553, %v2569
    %v2574 = vadd.f32 %v2554, %v2570
    %v2575 = vadd.f32 %v2555, %v2571
    %v2576 = vmul.f32 %v2572, 0.7978846
    %v2577 = vmul.f32 %v2573, 0.7978846
    %v2578 = vmul.f32 %v2574, 0.7978846
    %v2579 = vmul.f32 %v2575, 0.7978846
    %v2580 = vtanh.pop %v2576
    %v2581 = vtanh.pop %v2577
    %v2582 = vtanh.pop %v2578
    %v2583 = vtanh.pop %v2579
    %v2584 = vadd.f32 %v2580, 1.0
    %v2585 = vadd.f32 %v2581, 1.0
    %v2586 = vadd.f32 %v2582, 1.0
    %v2587 = vadd.f32 %v2583, 1.0
    %v2588 = vmul.f32 %v2556, %v2584
    %v2589 = vmul.f32 %v2557, %v2585
    %v2590 = vmul.f32 %v2558, %v2586
    %v2591 = vmul.f32 %v2559, %v2587
    %2592 = vmatpush.msra.mxu0 %v238
    %2593 = vmatpush.msra.mxu0 %v237
    %2594 = vmatpush.msra.mxu0 %v236
    %2595 = vmatpush.msra.mxu0 %v235
    %2596 = vmatpush.msra.mxu0 %v234
    %2597 = vmatpush.msra.mxu0 %v233
    %2598 = vmatpush.msra.mxu0 %v232
    %2599 = vmatpush.msra.mxu0 %v231
    %2600 = vmatpush.msra.mxu0 %v230
    %2601 = vmatpush.msra.mxu0 %v229
    %2602 = vmatpush.msra.mxu0 %v228
    %2603 = vmatpush.msra.mxu0 %v227
    %2604 = vmatpush.msra.mxu0 %v226
    %2605 = vmatpush.msra.mxu0 %v225
    %2606 = vmatpush.msra.mxu0 %v224
    %2607 = vmatpush.msra.mxu0 %v223
    %2608 = vmatmul.f32.gmra.mxu0 %v2588
    %v2609 = vpop.f32.mrf.mxu0
    %v2610 = vadd.f32 %v519, %v2609
    %2611 = vmatmul.f32.gmra.mxu0 %v2589
    %v2612 = vpop.f32.mrf.mxu0
    %v2613 = vadd.f32 %v519, %v2612
    %2614 = vmatmul.f32.gmra.mxu0 %v2590
    %v2615 = vpop.f32.mrf.mxu0
    %v2616 = vadd.f32 %v519, %v2615
    %2617 = vmatmul.f32.gmra.mxu0 %v2591
    %v2618 = vpop.f32.mrf.mxu0
    %v2619 = vadd.f32 %v519, %v2618
    %2620 = vdwg.mxu0
    %v2621 = vmul.f32 %v2610, 0.5
    %v2622 = vmul.f32 %v2613, 0.5
    %v2623 = vmul.f32 %v2616, 0.5
    %v2624 = vmul.f32 %v2619, 0.5
    %v2625 = vmul.f32 %v2610, %v2610
    %v2626 = vmul.f32 %v2613, %v2613
    %v2627 = vmul.f32 %v2616, %v2616
    %v2628 = vmul.f32 %v2619, %v2619
    %v2629 = vmul.f32 %v2625, %v2610
    %v2630 = vmul.f32 %v2626, %v2613
    %v2631 = vmul.f32 %v2627, %v2616
    %v2632 = vmul.f32 %v2628, %v2619
    %v2633 = vmul.f32 %v2629, 0.044715
    %v2634 = vmul.f32 %v2630, 0.044715
    %v2635 = vmul.f32 %v2631, 0.044715
    %v2636 = vmul.f32 %v2632, 0.044715
    %v2637 = vadd.f32 %v2610, %v2633
    %v2638 = vadd.f32 %v2613, %v2634
    %v2639 = vadd.f32 %v2616, %v2635
    %v2640 = vadd.f32 %v2619, %v2636
    %v2641 = vmul.f32 %v2637, 0.7978846
    %v2642 = vmul.f32 %v2638, 0.7978846
    %v2643 = vmul.f32 %v2639, 0.7978846
    %v2644 = vmul.f32 %v2640, 0.7978846
    %v2645 = vtanh.pop %v2641
    %v2646 = vtanh.pop %v2642
    %v2647 = vtanh.pop %v2643
    %v2648 = vtanh.pop %v2644
    %v2649 = vadd.f32 %v2645, 1.0
    %v2650 = vadd.f32 %v2646, 1.0
    %v2651 = vadd.f32 %v2647, 1.0
    %v2652 = vadd.f32 %v2648, 1.0
    %v2653 = vmul.f32 %v2621, %v2649
    %v2654 = vmul.f32 %v2622, %v2650
    %v2655 = vmul.f32 %v2623, %v2651
    %v2656 = vmul.f32 %v2624, %v2652
    %2657 = vmatpush.msra.mxu0 %v255
    %2658 = vmatpush.msra.mxu0 %v254
    %2659 = vmatpush.msra.mxu0 %v253
    %2660 = vmatpush.msra.mxu0 %v252
    %2661 = vmatpush.msra.mxu0 %v251
    %2662 = vmatpush.msra.mxu0 %v250
    %2663 = vmatpush.msra.mxu0 %v249
    %2664 = vmatpush.msra.mxu0 %v248
    %2665 = vmatpush.msra.mxu0 %v247
    %2666 = vmatpush.msra.mxu0 %v246
    %2667 = vmatpush.msra.mxu0 %v245
    %2668 = vmatpush.msra.mxu0 %v244
    %2669 = vmatpush.msra.mxu0 %v243
    %2670 = vmatpush.msra.mxu0 %v242
    %2671 = vmatpush.msra.mxu0 %v241
    %2672 = vmatpush.msra.mxu0 %v240
    %2673 = vmatmul.f32.gmra.mxu0 %v2653
    %v2674 = vpop.f32.mrf.mxu0
    %v2675 = vadd.f32 %v587, %v2674
    %2676 = vmatmul.f32.gmra.mxu0 %v2654
    %v2677 = vpop.f32.mrf.mxu0
    %v2678 = vadd.f32 %v587, %v2677
    %2679 = vmatmul.f32.gmra.mxu0 %v2655
    %v2680 = vpop.f32.mrf.mxu0
    %v2681 = vadd.f32 %v587, %v2680
    %2682 = vmatmul.f32.gmra.mxu0 %v2656
    %v2683 = vpop.f32.mrf.mxu0
    %v2684 = vadd.f32 %v587, %v2683
    %2685 = vdwg.mxu0
    %2686 = vset.pattern.permute.xlu0 6
    %2687 = vperm.xlu0 %2686, %v182
    %v2688 = vpop.permute.xlu0 %2687
    %2690 = vset.pattern.permute.xlu0 6
    %2691 = vperm.xlu0 %2690, %v183
    %v2692 = vpop.permute.xlu0 %2691
    %2694 = vset.pattern.permute.xlu0 6
    %2695 = vperm.xlu0 %2694, %v184
    %v2696 = vpop.permute.xlu0 %2695
    %2698 = vset.pattern.permute.xlu0 6
    %2699 = vperm.xlu0 %2698, %v185
    %v2700 = vpop.permute.xlu0 %2699
    %v2702 = vmul.f32 %v2688, %v2675
    %v2703 = vmul.f32 %v2692, %v2678
    %v2704 = vmul.f32 %v2696, %v2681
    %v2705 = vmul.f32 %v2700, %v2684
    %v2706 = vadd.f32 %v2362, %v2702
    %v2707 = vadd.f32 %v2363, %v2703
    %v2708 = vadd.f32 %v2364, %v2704
    %v2709 = vadd.f32 %v2365, %v2705
    %v2710 = vld [vmem:[#allocation2 + $0x38] sm:$0xff]
    %v2711 = vld [vmem:[#allocation2 + $0x78] sm:$0xff]
    %v2712 = vld [vmem:[#allocation2 + $0xb8] sm:$0xff]
    %v2713 = vld [vmem:[#allocation2 + $0xf8] sm:$0xff]
    %2714 = vadd.xlane.f32.xlu0 %v2710
    %v2715 = vpop.xlane.xlu0 %2714
    %2716 = vadd.xlane.f32.xlu0 %v2711
    %v2717 = vpop.xlane.xlu0 %2716
    %2718 = vadd.xlane.f32.xlu0 %v2712
    %v2719 = vpop.xlane.xlu0 %2718
    %2720 = vadd.xlane.f32.xlu0 %v2713
    %v2721 = vpop.xlane.xlu0 %2720
    %v2722 = vmul.f32 %v2710, %v2710
    %v2723 = vmul.f32 %v2711, %v2711
    %v2724 = vmul.f32 %v2712, %v2712
    %v2725 = vmul.f32 %v2713, %v2713
    %2726 = vadd.xlane.f32.xlu0 %v2722
    %v2727 = vpop.xlane.xlu0 %2726
    %2728 = vadd.xlane.f32.xlu0 %v2723
    %v2729 = vpop.xlane.xlu0 %2728
    %2730 = vadd.xlane.f32.xlu0 %v2724
    %v2731 = vpop.xlane.xlu0 %2730
    %2732 = vadd.xlane.f32.xlu0 %v2725
    %v2733 = vpop.xlane.xlu0 %2732
    %v2734 = vadd.f32 %v258, %v2715
    %v2735 = vadd.f32 %v260, %v2717
    %v2736 = vadd.f32 %v262, %v2719
    %v2737 = vadd.f32 %v264, %v2721
    %v2738 = vmul.f32 %v2734, 0.00390625
    %v2739 = vmul.f32 %v2735, 0.00390625
    %v2740 = vmul.f32 %v2736, 0.00390625
    %v2741 = vmul.f32 %v2737, 0.00390625
    %v2742 = vadd.f32 %v270, %v2727
    %v2743 = vadd.f32 %v272, %v2729
    %v2744 = vadd.f32 %v274, %v2731
    %v2745 = vadd.f32 %v276, %v2733
    %v2746 = vmul.f32 %v2742, 0.00390625
    %v2747 = vmul.f32 %v2743, 0.00390625
    %v2748 = vmul.f32 %v2744, 0.00390625
    %v2749 = vmul.f32 %v2745, 0.00390625
    %v2750 = vmul.f32 %v2738, %v2738
    %v2751 = vmul.f32 %v2739, %v2739
    %v2752 = vmul.f32 %v2740, %v2740
    %v2753 = vmul.f32 %v2741, %v2741
    %v2754 = vsub.f32 %v2746, %v2750
    %v2755 = vsub.f32 %v2747, %v2751
    %v2756 = vsub.f32 %v2748, %v2752
    %v2757 = vsub.f32 %v2749, %v2753
    %v2758 = vmax.f32 %v2754, 0.0
    %v2759 = vmax.f32 %v2755, 0.0
    %v2760 = vmax.f32 %v2756, 0.0
    %v2761 = vmax.f32 %v2757, 0.0
    %v2762 = vadd.f32 %v2758, 1e-05
    %v2763 = vadd.f32 %v2759, 1e-05
    %v2764 = vadd.f32 %v2760, 1e-05
    %v2765 = vadd.f32 %v2761, 1e-05
    %v2766 = vrsqrt.pop %v2762
    %v2767 = vmul.f32 %v2766, %v2762
    %v2768 = vmul.f32 %v2767, %v2766
    %v2769 = vmul.f32 0.5, %v2768
    %v2770 = vsub.f32 1.5, %v2769
    %v2771 = vmul.f32 %v2766, %v2770
    %vm2772 = vweird.f32 %v2762
    %vm2773 = vweird.f32 %v2766
    %vm2774 = vmor %vm2772, %vm2773
    %v2775 = vsel %vm2774, %v2766, %v2771
    %v2776 = vrsqrt.pop %v2763
    %v2777 = vmul.f32 %v2776, %v2763
    %v2778 = vmul.f32 %v2777, %v2776
    %v2779 = vmul.f32 0.5, %v2778
    %v2780 = vsub.f32 1.5, %v2779
    %v2781 = vmul.f32 %v2776, %v2780
    %vm2782 = vweird.f32 %v2763
    %vm2783 = vweird.f32 %v2776
    %vm2784 = vmor %vm2782, %vm2783
    %v2785 = vsel %vm2784, %v2776, %v2781
    %v2786 = vrsqrt.pop %v2764
    %v2787 = vmul.f32 %v2786, %v2764
    %v2788 = vmul.f32 %v2787, %v2786
    %v2789 = vmul.f32 0.5, %v2788
    %v2790 = vsub.f32 1.5, %v2789
    %v2791 = vmul.f32 %v2786, %v2790
    %vm2792 = vweird.f32 %v2764
    %vm2793 = vweird.f32 %v2786
    %vm2794 = vmor %vm2792, %vm2793
    %v2795 = vsel %vm2794, %v2786, %v2791
    %v2796 = vrsqrt.pop %v2765
    %v2797 = vmul.f32 %v2796, %v2765
    %v2798 = vmul.f32 %v2797, %v2796
    %v2799 = vmul.f32 0.5, %v2798
    %v2800 = vsub.f32 1.5, %v2799
    %v2801 = vmul.f32 %v2796, %v2800
    %vm2802 = vweird.f32 %v2765
    %vm2803 = vweird.f32 %v2796
    %vm2804 = vmor %vm2802, %vm2803
    %v2805 = vsel %vm2804, %v2796, %v2801
    %v2806 = vsub.f32 %v178, %v2738
    %v2807 = vsub.f32 %v179, %v2739
    %v2808 = vsub.f32 %v180, %v2740
    %v2809 = vsub.f32 %v181, %v2741
    %v2810 = vmul.f32 %v2806, %v2775
    %v2811 = vmul.f32 %v2807, %v2785
    %v2812 = vmul.f32 %v2808, %v2795
    %v2813 = vmul.f32 %v2809, %v2805
    %v2814 = vmul.f32 %v2810, %v382
    %v2815 = vmul.f32 %v2811, %v382
    %v2816 = vmul.f32 %v2812, %v382
    %v2817 = vmul.f32 %v2813, %v382
    %v2818 = vadd.f32 %v2814, %v389
    %v2819 = vadd.f32 %v2815, %v389
    %v2820 = vadd.f32 %v2816, %v389
    %v2821 = vadd.f32 %v2817, %v389
    %v2822 = vsub.f32 %v2710, %v2738
    %v2823 = vsub.f32 %v2711, %v2739
    %v2824 = vsub.f32 %v2712, %v2740
    %v2825 = vsub.f32 %v2713, %v2741
    %v2826 = vmul.f32 %v2822, %v2775
    %v2827 = vmul.f32 %v2823, %v2785
    %v2828 = vmul.f32 %v2824, %v2795
    %v2829 = vmul.f32 %v2825, %v2805
    %v2830 = vmul.f32 %v2826, %v404
    %v2831 = vmul.f32 %v2827, %v404
    %v2832 = vmul.f32 %v2828, %v404
    %v2833 = vmul.f32 %v2829, %v404
    %v2834 = vadd.f32 %v2830, %v411
    %v2835 = vadd.f32 %v2831, %v411
    %v2836 = vadd.f32 %v2832, %v411
    %v2837 = vadd.f32 %v2833, %v411
    %2838 = vmatpush.msra.mxu0 %v221
    %2839 = vmatpush.msra.mxu0 %v220
    %2840 = vmatpush.msra.mxu0 %v219
    %2841 = vmatpush.msra.mxu0 %v218
    %2842 = vmatpush.msra.mxu0 %v217
    %2843 = vmatpush.msra.mxu0 %v216
    %2844 = vmatpush.msra.mxu0 %v215
    %2845 = vmatpush.msra.mxu0 %v214
    %2846 = vmatpush.msra.mxu0 %v213
    %2847 = vmatpush.msra.mxu0 %v212
    %2848 = vmatpush.msra.mxu0 %v211
    %2849 = vmatpush.msra.mxu0 %v210
    %2850 = vmatpush.msra.mxu0 %v209
    %2851 = vmatpush.msra.mxu0 %v208
    %2852 = vmatpush.msra.mxu0 %v207
    %2853 = vmatpush.msra.mxu0 %v206
    %2854 = vmatmul.f32.gmra.mxu0 %v2834
    %v2855 = vpop.f32.mrf.mxu0
    %v2856 = vadd.f32 0.0, %v2855
    %2857 = vmatmul.f32.gmra.mxu0 %v2835
    %v2858 = vpop.f32.mrf.mxu0
    %v2859 = vadd.f32 0.0, %v2858
    %2860 = vmatmul.f32.gmra.mxu0 %v2836
    %v2861 = vpop.f32.mrf.mxu0
    %v2862 = vadd.f32 0.0, %v2861
    %2863 = vmatmul.f32.gmra.mxu0 %v2837
    %v2864 = vpop.f32.mrf.mxu0
    %v2865 = vadd.f32 0.0, %v2864
    %2866 = vdwg.mxu0
    %2867 = vmatpush.msra.mxu0 %v205
    %2868 = vmatpush.msra.mxu0 %v204
    %2869 = vmatpush.msra.mxu0 %v203
    %2870 = vmatpush.msra.mxu0 %v202
    %2871 = vmatpush.msra.mxu0 %v201
    %2872 = vmatpush.msra.mxu0 %v200
    %2873 = vmatpush.msra.mxu0 %v199
    %2874 = vmatpush.msra.mxu0 %v198
    %2875 = vmatpush.msra.mxu0 %v197
    %2876 = vmatpush.msra.mxu0 %v196
    %2877 = vmatpush.msra.mxu0 %v195
    %2878 = vmatpush.msra.mxu0 %v194
    %2879 = vmatpush.msra.mxu0 %v193
    %2880 = vmatpush.msra.mxu0 %v192
    %2881 = vmatpush.msra.mxu0 %v191
    %2882 = vmatpush.msra.mxu0 %v190
    %2883 = vmatmul.f32.gmra.mxu0 %v2818
    %v2884 = vpop.f32.mrf.mxu0
    %v2885 = vadd.f32 %v2856, %v2884
    %2886 = vmatmul.f32.gmra.mxu0 %v2819
    %v2887 = vpop.f32.mrf.mxu0
    %v2888 = vadd.f32 %v2859, %v2887
    %2889 = vmatmul.f32.gmra.mxu0 %v2820
    %v2890 = vpop.f32.mrf.mxu0
    %v2891 = vadd.f32 %v2862, %v2890
    %2892 = vmatmul.f32.gmra.mxu0 %v2821
    %v2893 = vpop.f32.mrf.mxu0
    %v2894 = vadd.f32 %v2865, %v2893
    %2895 = vdwg.mxu0
    %v2896 = vadd.f32 %v2885, %v476
    %v2897 = vadd.f32 %v2888, %v476
    %v2898 = vadd.f32 %v2891, %v476
    %v2899 = vadd.f32 %v2894, %v476
    %v2900 = vmul.f32 %v2896, 0.5
    %v2901 = vmul.f32 %v2897, 0.5
    %v2902 = vmul.f32 %v2898, 0.5
    %v2903 = vmul.f32 %v2899, 0.5
    %v2904 = vmul.f32 %v2896, %v2896
    %v2905 = vmul.f32 %v2897, %v2897
    %v2906 = vmul.f32 %v2898, %v2898
    %v2907 = vmul.f32 %v2899, %v2899
    %v2908 = vmul.f32 %v2904, %v2896
    %v2909 = vmul.f32 %v2905, %v2897
    %v2910 = vmul.f32 %v2906, %v2898
    %v2911 = vmul.f32 %v2907, %v2899
    %v2912 = vmul.f32 %v2908, 0.044715
    %v2913 = vmul.f32 %v2909, 0.044715
    %v2914 = vmul.f32 %v2910, 0.044715
    %v2915 = vmul.f32 %v2911, 0.044715
    %v2916 = vadd.f32 %v2896, %v2912
    %v2917 = vadd.f32 %v2897, %v2913
    %v2918 = vadd.f32 %v2898, %v2914
    %v2919 = vadd.f32 %v2899, %v2915
    %v2920 = vmul.f32 %v2916, 0.7978846
    %v2921 = vmul.f32 %v2917, 0.7978846
    %v2922 = vmul.f32 %v2918, 0.7978846
    %v2923 = vmul.f32 %v2919, 0.7978846
    %v2924 = vtanh.pop %v2920
    %v2925 = vtanh.pop %v2921
    %v2926 = vtanh.pop %v2922
    %v2927 = vtanh.pop %v2923
    %v2928 = vadd.f32 %v2924, 1.0
    %v2929 = vadd.f32 %v2925, 1.0
    %v2930 = vadd.f32 %v2926, 1.0
    %v2931 = vadd.f32 %v2927, 1.0
    %v2932 = vmul.f32 %v2900, %v2928
    %v2933 = vmul.f32 %v2901, %v2929
    %v2934 = vmul.f32 %v2902, %v2930
    %v2935 = vmul.f32 %v2903, %v2931
    %2936 = vmatpush.msra.mxu0 %v238
    %2937 = vmatpush.msra.mxu0 %v237
    %2938 = vmatpush.msra.mxu0 %v236
    %2939 = vmatpush.msra.mxu0 %v235
    %2940 = vmatpush.msra.mxu0 %v234
    %2941 = vmatpush.msra.mxu0 %v233
    %2942 = vmatpush.msra.mxu0 %v232
    %2943 = vmatpush.msra.mxu0 %v231
    %2944 = vmatpush.msra.mxu0 %v230
    %2945 = vmatpush.msra.mxu0 %v229
    %2946 = vmatpush.msra.mxu0 %v228
    %2947 = vmatpush.msra.mxu0 %v227
    %2948 = vmatpush.msra.mxu0 %v226
    %2949 = vmatpush.msra.mxu0 %v225
    %2950 = vmatpush.msra.mxu0 %v224
    %2951 = vmatpush.msra.mxu0 %v223
    %2952 = vmatmul.f32.gmra.mxu0 %v2932
    %v2953 = vpop.f32.mrf.mxu0
    %v2954 = vadd.f32 %v519, %v2953
    %2955 = vmatmul.f32.gmra.mxu0 %v2933
    %v2956 = vpop.f32.mrf.mxu0
    %v2957 = vadd.f32 %v519, %v2956
    %2958 = vmatmul.f32.gmra.mxu0 %v2934
    %v2959 = vpop.f32.mrf.mxu0
    %v2960 = vadd.f32 %v519, %v2959
    %2961 = vmatmul.f32.gmra.mxu0 %v2935
    %v2962 = vpop.f32.mrf.mxu0
    %v2963 = vadd.f32 %v519, %v2962
    %2964 = vdwg.mxu0
    %v2965 = vmul.f32 %v2954, 0.5
    %v2966 = vmul.f32 %v2957, 0.5
    %v2967 = vmul.f32 %v2960, 0.5
    %v2968 = vmul.f32 %v2963, 0.5
    %v2969 = vmul.f32 %v2954, %v2954
    %v2970 = vmul.f32 %v2957, %v2957
    %v2971 = vmul.f32 %v2960, %v2960
    %v2972 = vmul.f32 %v2963, %v2963
    %v2973 = vmul.f32 %v2969, %v2954
    %v2974 = vmul.f32 %v2970, %v2957
    %v2975 = vmul.f32 %v2971, %v2960
    %v2976 = vmul.f32 %v2972, %v2963
    %v2977 = vmul.f32 %v2973, 0.044715
    %v2978 = vmul.f32 %v2974, 0.044715
    %v2979 = vmul.f32 %v2975, 0.044715
    %v2980 = vmul.f32 %v2976, 0.044715
    %v2981 = vadd.f32 %v2954, %v2977
    %v2982 = vadd.f32 %v2957, %v2978
    %v2983 = vadd.f32 %v2960, %v2979
    %v2984 = vadd.f32 %v2963, %v2980
    %v2985 = vmul.f32 %v2981, 0.7978846
    %v2986 = vmul.f32 %v2982, 0.7978846
    %v2987 = vmul.f32 %v2983, 0.7978846
    %v2988 = vmul.f32 %v2984, 0.7978846
    %v2989 = vtanh.pop %v2985
    %v2990 = vtanh.pop %v2986
    %v2991 = vtanh.pop %v2987
    %v2992 = vtanh.pop %v2988
    %v2993 = vadd.f32 %v2989, 1.0
    %v2994 = vadd.f32 %v2990, 1.0
    %v2995 = vadd.f32 %v2991, 1.0
    %v2996 = vadd.f32 %v2992, 1.0
    %v2997 = vmul.f32 %v2965, %v2993
    %v2998 = vmul.f32 %v2966, %v2994
    %v2999 = vmul.f32 %v2967, %v2995
    %v3000 = vmul.f32 %v2968, %v2996
    %3001 = vmatpush.msra.mxu0 %v255
    %3002 = vmatpush.msra.mxu0 %v254
    %3003 = vmatpush.msra.mxu0 %v253
    %3004 = vmatpush.msra.mxu0 %v252
    %3005 = vmatpush.msra.mxu0 %v251
    %3006 = vmatpush.msra.mxu0 %v250
    %3007 = vmatpush.msra.mxu0 %v249
    %3008 = vmatpush.msra.mxu0 %v248
    %3009 = vmatpush.msra.mxu0 %v247
    %3010 = vmatpush.msra.mxu0 %v246
    %3011 = vmatpush.msra.mxu0 %v245
    %3012 = vmatpush.msra.mxu0 %v244
    %3013 = vmatpush.msra.mxu0 %v243
    %3014 = vmatpush.msra.mxu0 %v242
    %3015 = vmatpush.msra.mxu0 %v241
    %3016 = vmatpush.msra.mxu0 %v240
    %3017 = vmatmul.f32.gmra.mxu0 %v2997
    %v3018 = vpop.f32.mrf.mxu0
    %v3019 = vadd.f32 %v587, %v3018
    %3020 = vmatmul.f32.gmra.mxu0 %v2998
    %v3021 = vpop.f32.mrf.mxu0
    %v3022 = vadd.f32 %v587, %v3021
    %3023 = vmatmul.f32.gmra.mxu0 %v2999
    %v3024 = vpop.f32.mrf.mxu0
    %v3025 = vadd.f32 %v587, %v3024
    %3026 = vmatmul.f32.gmra.mxu0 %v3000
    %v3027 = vpop.f32.mrf.mxu0
    %v3028 = vadd.f32 %v587, %v3027
    %3029 = vdwg.mxu0
    %3030 = vset.pattern.permute.xlu0 7
    %3031 = vperm.xlu0 %3030, %v182
    %v3032 = vpop.permute.xlu0 %3031
    %3034 = vset.pattern.permute.xlu0 7
    %3035 = vperm.xlu0 %3034, %v183
    %v3036 = vpop.permute.xlu0 %3035
    %3038 = vset.pattern.permute.xlu0 7
    %3039 = vperm.xlu0 %3038, %v184
    %v3040 = vpop.permute.xlu0 %3039
    %3042 = vset.pattern.permute.xlu0 7
    %3043 = vperm.xlu0 %3042, %v185
    %v3044 = vpop.permute.xlu0 %3043
    %v3046 = vmul.f32 %v3032, %v3019
    %v3047 = vmul.f32 %v3036, %v3022
    %v3048 = vmul.f32 %v3040, %v3025
    %v3049 = vmul.f32 %v3044, %v3028
    %v3050 = vadd.f32 %v2706, %v3046
    %v3051 = vadd.f32 %v2707, %v3047
    %v3052 = vadd.f32 %v2708, %v3048
    %v3053 = vadd.f32 %v2709, %v3049
    %v3054 = vmul.f32 %v3050, 0.033333335
    %v3055 = vmul.f32 %v3051, 0.033333335
    %v3056 = vmul.f32 %v3052, 0.033333335
    %v3057 = vmul.f32 %v3053, 0.033333335
    %v3058 = vadd.f32 %v178, %v3054
    %v3059 = vadd.f32 %v179, %v3055
    %v3060 = vadd.f32 %v180, %v3056
    %v3061 = vadd.f32 %v181, %v3057
    %3062 = vadd.xlane.f32.xlu0 %v3058
    %v3063 = vpop.xlane.xlu0 %3062
    %3064 = vadd.xlane.f32.xlu0 %v3059
    %v3065 = vpop.xlane.xlu0 %3064
    %3066 = vadd.xlane.f32.xlu0 %v3060
    %v3067 = vpop.xlane.xlu0 %3066
    %3068 = vadd.xlane.f32.xlu0 %v3061
    %v3069 = vpop.xlane.xlu0 %3068
    %v3070 = vrcp.pop 128.0
    %v3071 = vmul.f32 128.0, %v3070
    %v3072 = vsub.f32 1.0, %v3071
    %v3073 = vmul.f32 %v3070, %v3072
    %v3074 = vadd.f32 %v3070, %v3073
    %vm3075 = vweird.f32 %v3070
    %v3076 = vsel %vm3075, %v3070, %v3074
    %v3077 = vmul.f32 %v3063, %v3076
    %v3078 = vmul.f32 %v3065, %v3076
    %v3079 = vmul.f32 %v3067, %v3076
    %v3080 = vmul.f32 %v3069, %v3076
    %v3081 = vsub.f32 %v3058, %v3077
    %v3082 = vsub.f32 %v3059, %v3078
    %v3083 = vsub.f32 %v3060, %v3079
    %v3084 = vsub.f32 %v3061, %v3080
    %v3085 = vmul.f32 %v3081, %v3081
    %v3086 = vmul.f32 %v3082, %v3082
    %v3087 = vmul.f32 %v3083, %v3083
    %v3088 = vmul.f32 %v3084, %v3084
    %3089 = vadd.xlane.f32.xlu0 %v3085
    %v3090 = vpop.xlane.xlu0 %3089
    %3091 = vadd.xlane.f32.xlu0 %v3086
    %v3092 = vpop.xlane.xlu0 %3091
    %3093 = vadd.xlane.f32.xlu0 %v3087
    %v3094 = vpop.xlane.xlu0 %3093
    %3095 = vadd.xlane.f32.xlu0 %v3088
    %v3096 = vpop.xlane.xlu0 %3095
    %v3097 = vmul.f32 %v3090, %v3076
    %v3098 = vmul.f32 %v3092, %v3076
    %v3099 = vmul.f32 %v3094, %v3076
    %v3100 = vmul.f32 %v3096, %v3076
    %v3101 = vadd.f32 %v3097, 1e-05
    %v3102 = vadd.f32 %v3098, 1e-05
    %v3103 = vadd.f32 %v3099, 1e-05
    %v3104 = vadd.f32 %v3100, 1e-05
    %v3105 = vrsqrt.pop %v3101
    %v3106 = vmul.f32 %v3105, %v3101
    %v3107 = vmul.f32 %v3106, %v3105
    %v3108 = vmul.f32 0.5, %v3107
    %v3109 = vsub.f32 1.5, %v3108
    %v3110 = vmul.f32 %v3105, %v3109
    %vm3111 = vweird.f32 %v3101
    %vm3112 = vweird.f32 %v3105
    %vm3113 = vmor %vm3111, %vm3112
    %v3114 = vsel %vm3113, %v3105, %v3110
    %v3115 = vrsqrt.pop %v3102
    %v3116 = vmul.f32 %v3115, %v3102
    %v3117 = vmul.f32 %v3116, %v3115
    %v3118 = vmul.f32 0.5, %v3117
    %v3119 = vsub.f32 1.5, %v3118
    %v3120 = vmul.f32 %v3115, %v3119
    %vm3121 = vweird.f32 %v3102
    %vm3122 = vweird.f32 %v3115
    %vm3123 = vmor %vm3121, %vm3122
    %v3124 = vsel %vm3123, %v3115, %v3120
    %v3125 = vrsqrt.pop %v3103
    %v3126 = vmul.f32 %v3125, %v3103
    %v3127 = vmul.f32 %v3126, %v3125
    %v3128 = vmul.f32 0.5, %v3127
    %v3129 = vsub.f32 1.5, %v3128
    %v3130 = vmul.f32 %v3125, %v3129
    %vm3131 = vweird.f32 %v3103
    %vm3132 = vweird.f32 %v3125
    %vm3133 = vmor %vm3131, %vm3132
    %v3134 = vsel %vm3133, %v3125, %v3130
    %v3135 = vrsqrt.pop %v3104
    %v3136 = vmul.f32 %v3135, %v3104
    %v3137 = vmul.f32 %v3136, %v3135
    %v3138 = vmul.f32 0.5, %v3137
    %v3139 = vsub.f32 1.5, %v3138
    %v3140 = vmul.f32 %v3135, %v3139
    %vm3141 = vweird.f32 %v3104
    %vm3142 = vweird.f32 %v3135
    %vm3143 = vmor %vm3141, %vm3142
    %v3144 = vsel %vm3143, %v3135, %v3140
    %v3145 = vmul.f32 %v3081, %v3114
    %v3146 = vmul.f32 %v3082, %v3124
    %v3147 = vmul.f32 %v3083, %v3134
    %v3148 = vmul.f32 %v3084, %v3144
    %v3149 = vld [vmem:[%s15] sm:$0x1]
    %v3151 = vperm.slane %v3149, 0
    %v3153 = vmul.f32 %v3145, %v3151
    %v3154 = vmul.f32 %v3146, %v3151
    %v3155 = vmul.f32 %v3147, %v3151
    %v3156 = vmul.f32 %v3148, %v3151
    %v3157 = vld [vmem:[%s16] sm:$0x1]
    %v3159 = vperm.slane %v3157, 0
    %v3161 = vadd.f32 %v3153, %v3159
    %v3162 = vadd.f32 %v3154, %v3159
    %v3163 = vadd.f32 %v3155, %v3159
    %v3164 = vadd.f32 %v3156, %v3159
    %v3165 = vld [vmem:[#allocation11] sm:$0xff]
    %v3166 = vld [vmem:[#allocation11 + $0x8] sm:$0xff]
    %v3167 = vld [vmem:[#allocation11 + $0x10] sm:$0xff]
    %v3168 = vld [vmem:[#allocation11 + $0x18] sm:$0xff]
    %v3169 = vld [vmem:[#allocation11 + $0x20] sm:$0xff]
    %v3170 = vld [vmem:[#allocation11 + $0x28] sm:$0xff]
    %v3171 = vld [vmem:[#allocation11 + $0x30] sm:$0xff]
    %v3172 = vld [vmem:[#allocation11 + $0x38] sm:$0xff]
    %v3173 = vld [vmem:[#allocation11 + $0x40] sm:$0xff]
    %v3174 = vld [vmem:[#allocation11 + $0x48] sm:$0xff]
    %v3175 = vld [vmem:[#allocation11 + $0x50] sm:$0xff]
    %v3176 = vld [vmem:[#allocation11 + $0x58] sm:$0xff]
    %v3177 = vld [vmem:[#allocation11 + $0x60] sm:$0xff]
    %v3178 = vld [vmem:[#allocation11 + $0x68] sm:$0xff]
    %v3179 = vld [vmem:[#allocation11 + $0x70] sm:$0xff]
    %v3180 = vld [vmem:[#allocation11 + $0x78] sm:$0xff]
    %v3181 = vld [vmem:[#allocation11 + $0x80] sm:$0xff]
    %v3182 = vld [vmem:[#allocation11 + $0x88] sm:$0xff]
    %v3183 = vld [vmem:[#allocation11 + $0x90] sm:$0xff]
    %v3184 = vld [vmem:[#allocation11 + $0x98] sm:$0xff]
    %v3185 = vld [vmem:[#allocation11 + $0xa0] sm:$0xff]
    %v3186 = vld [vmem:[#allocation11 + $0xa8] sm:$0xff]
    %v3187 = vld [vmem:[#allocation11 + $0xb0] sm:$0xff]
    %v3188 = vld [vmem:[#allocation11 + $0xb8] sm:$0xff]
    %v3189 = vld [vmem:[#allocation11 + $0xc0] sm:$0xff]
    %v3190 = vld [vmem:[#allocation11 + $0xc8] sm:$0xff]
    %v3191 = vld [vmem:[#allocation11 + $0xd0] sm:$0xff]
    %v3192 = vld [vmem:[#allocation11 + $0xd8] sm:$0xff]
    %v3193 = vld [vmem:[#allocation11 + $0xe0] sm:$0xff]
    %v3194 = vld [vmem:[#allocation11 + $0xe8] sm:$0xff]
    %v3195 = vld [vmem:[#allocation11 + $0xf0] sm:$0xff]
    %v3196 = vld [vmem:[#allocation11 + $0xf8] sm:$0xff]
    %v3197 = vld [vmem:[#allocation11 + $0x100] sm:$0xff]
    %v3198 = vld [vmem:[#allocation11 + $0x108] sm:$0xff]
    %v3199 = vld [vmem:[#allocation11 + $0x110] sm:$0xff]
    %v3200 = vld [vmem:[#allocation11 + $0x118] sm:$0xff]
    %v3201 = vld [vmem:[#allocation11 + $0x120] sm:$0xff]
    %v3202 = vld [vmem:[#allocation11 + $0x128] sm:$0xff]
    %v3203 = vld [vmem:[#allocation11 + $0x130] sm:$0xff]
    %v3204 = vld [vmem:[#allocation11 + $0x138] sm:$0xff]
    %v3205 = vld [vmem:[#allocation11 + $0x140] sm:$0xff]
    %v3206 = vld [vmem:[#allocation11 + $0x148] sm:$0xff]
    %v3207 = vld [vmem:[#allocation11 + $0x150] sm:$0xff]
    %v3208 = vld [vmem:[#allocation11 + $0x158] sm:$0xff]
    %v3209 = vld [vmem:[#allocation11 + $0x160] sm:$0xff]
    %v3210 = vld [vmem:[#allocation11 + $0x168] sm:$0xff]
    %v3211 = vld [vmem:[#allocation11 + $0x170] sm:$0xff]
    %v3212 = vld [vmem:[#allocation11 + $0x178] sm:$0xff]
    %v3213 = vld [vmem:[#allocation11 + $0x180] sm:$0xff]
    %v3214 = vld [vmem:[#allocation11 + $0x188] sm:$0xff]
    %v3215 = vld [vmem:[#allocation11 + $0x190] sm:$0xff]
    %v3216 = vld [vmem:[#allocation11 + $0x198] sm:$0xff]
    %v3217 = vld [vmem:[#allocation11 + $0x1a0] sm:$0xff]
    %v3218 = vld [vmem:[#allocation11 + $0x1a8] sm:$0xff]
    %v3219 = vld [vmem:[#allocation11 + $0x1b0] sm:$0xff]
    %v3220 = vld [vmem:[#allocation11 + $0x1b8] sm:$0xff]
    %v3221 = vld [vmem:[#allocation11 + $0x1c0] sm:$0xff]
    %v3222 = vld [vmem:[#allocation11 + $0x1c8] sm:$0xff]
    %v3223 = vld [vmem:[#allocation11 + $0x1d0] sm:$0xff]
    %v3224 = vld [vmem:[#allocation11 + $0x1d8] sm:$0xff]
    %v3225 = vld [vmem:[#allocation11 + $0x1e0] sm:$0xff]
    %v3226 = vld [vmem:[#allocation11 + $0x1e8] sm:$0xff]
    %v3227 = vld [vmem:[#allocation11 + $0x1f0] sm:$0xff]
    %v3228 = vld [vmem:[#allocation11 + $0x1f8] sm:$0xff]
    %v3229 = vld [vmem:[%s18] sm:$0xf]
    %v3231 = vperm.slane %v3229, 0
    %v3232 = vperm.slane %v3229, 1
    %v3233 = vperm.slane %v3229, 2
    %v3234 = vperm.slane %v3229, 3
    %3239 = vmatpush.msra.mxu0 %v3225
    %3240 = vmatpush.msra.mxu0 %v3221
    %3241 = vmatpush.msra.mxu0 %v3217
    %3242 = vmatpush.msra.mxu0 %v3213
    %3243 = vmatpush.msra.mxu0 %v3209
    %3244 = vmatpush.msra.mxu0 %v3205
    %3245 = vmatpush.msra.mxu0 %v3201
    %3246 = vmatpush.msra.mxu0 %v3197
    %3247 = vmatpush.msra.mxu0 %v3193
    %3248 = vmatpush.msra.mxu0 %v3189
    %3249 = vmatpush.msra.mxu0 %v3185
    %3250 = vmatpush.msra.mxu0 %v3181
    %3251 = vmatpush.msra.mxu0 %v3177
    %3252 = vmatpush.msra.mxu0 %v3173
    %3253 = vmatpush.msra.mxu0 %v3169
    %3254 = vmatpush.msra.mxu0 %v3165
    %3255 = vmatmul.f32.gmra.mxu0 %v3161
    %v3256 = vpop.f32.mrf.mxu0
    %v3257 = vadd.f32 %v3231, %v3256
    %3258 = vmatmul.f32.gmra.mxu0 %v3162
    %v3259 = vpop.f32.mrf.mxu0
    %v3260 = vadd.f32 %v3231, %v3259
    %3261 = vmatmul.f32.gmra.mxu0 %v3163
    %v3262 = vpop.f32.mrf.mxu0
    %v3263 = vadd.f32 %v3231, %v3262
    %3264 = vmatmul.f32.gmra.mxu0 %v3164
    %v3265 = vpop.f32.mrf.mxu0
    %v3266 = vadd.f32 %v3231, %v3265
    %3267 = vdwg.mxu0
    %3268 = vmatpush.msra.mxu0 %v3226
    %3269 = vmatpush.msra.mxu0 %v3222
    %3270 = vmatpush.msra.mxu0 %v3218
    %3271 = vmatpush.msra.mxu0 %v3214
    %3272 = vmatpush.msra.mxu0 %v3210
    %3273 = vmatpush.msra.mxu0 %v3206
    %3274 = vmatpush.msra.mxu0 %v3202
    %3275 = vmatpush.msra.mxu0 %v3198
    %3276 = vmatpush.msra.mxu0 %v3194
    %3277 = vmatpush.msra.mxu0 %v3190
    %3278 = vmatpush.msra.mxu0 %v3186
    %3279 = vmatpush.msra.mxu0 %v3182
    %3280 = vmatpush.msra.mxu0 %v3178
    %3281 = vmatpush.msra.mxu0 %v3174
    %3282 = vmatpush.msra.mxu0 %v3170
    %3283 = vmatpush.msra.mxu0 %v3166
    %3284 = vmatmul.f32.gmra.mxu0 %v3161
    %v3285 = vpop.f32.mrf.mxu0
    %v3286 = vadd.f32 %v3232, %v3285
    %3287 = vmatmul.f32.gmra.mxu0 %v3162
    %v3288 = vpop.f32.mrf.mxu0
    %v3289 = vadd.f32 %v3232, %v3288
    %3290 = vmatmul.f32.gmra.mxu0 %v3163
    %v3291 = vpop.f32.mrf.mxu0
    %v3292 = vadd.f32 %v3232, %v3291
    %3293 = vmatmul.f32.gmra.mxu0 %v3164
    %v3294 = vpop.f32.mrf.mxu0
    %v3295 = vadd.f32 %v3232, %v3294
    %3296 = vdwg.mxu0
    %3297 = vmatpush.msra.mxu0 %v3227
    %3298 = vmatpush.msra.mxu0 %v3223
    %3299 = vmatpush.msra.mxu0 %v3219
    %3300 = vmatpush.msra.mxu0 %v3215
    %3301 = vmatpush.msra.mxu0 %v3211
    %3302 = vmatpush.msra.mxu0 %v3207
    %3303 = vmatpush.msra.mxu0 %v3203
    %3304 = vmatpush.msra.mxu0 %v3199
    %3305 = vmatpush.msra.mxu0 %v3195
    %3306 = vmatpush.msra.mxu0 %v3191
    %3307 = vmatpush.msra.mxu0 %v3187
    %3308 = vmatpush.msra.mxu0 %v3183
    %3309 = vmatpush.msra.mxu0 %v3179
    %3310 = vmatpush.msra.mxu0 %v3175
    %3311 = vmatpush.msra.mxu0 %v3171
    %3312 = vmatpush.msra.mxu0 %v3167
    %3313 = vmatmul.f32.gmra.mxu0 %v3161
    %v3314 = vpop.f32.mrf.mxu0
    %v3315 = vadd.f32 %v3233, %v3314
    %3316 = vmatmul.f32.gmra.mxu0 %v3162
    %v3317 = vpop.f32.mrf.mxu0
    %v3318 = vadd.f32 %v3233, %v3317
    %3319 = vmatmul.f32.gmra.mxu0 %v3163
    %v3320 = vpop.f32.mrf.mxu0
    %v3321 = vadd.f32 %v3233, %v3320
    %3322 = vmatmul.f32.gmra.mxu0 %v3164
    %v3323 = vpop.f32.mrf.mxu0
    %v3324 = vadd.f32 %v3233, %v3323
    %3325 = vdwg.mxu0
    %3326 = vmatpush.msra.mxu0 %v3228
    %3327 = vmatpush.msra.mxu0 %v3224
    %3328 = vmatpush.msra.mxu0 %v3220
    %3329 = vmatpush.msra.mxu0 %v3216
    %3330 = vmatpush.msra.mxu0 %v3212
    %3331 = vmatpush.msra.mxu0 %v3208
    %3332 = vmatpush.msra.mxu0 %v3204
    %3333 = vmatpush.msra.mxu0 %v3200
    %3334 = vmatpush.msra.mxu0 %v3196
    %3335 = vmatpush.msra.mxu0 %v3192
    %3336 = vmatpush.msra.mxu0 %v3188
    %3337 = vmatpush.msra.mxu0 %v3184
    %3338 = vmatpush.msra.mxu0 %v3180
    %3339 = vmatpush.msra.mxu0 %v3176
    %3340 = vmatpush.msra.mxu0 %v3172
    %3341 = vmatpush.msra.mxu0 %v3168
    %3342 = vmatmul.f32.gmra.mxu0 %v3161
    %v3343 = vpop.f32.mrf.mxu0
    %v3344 = vadd.f32 %v3234, %v3343
    %3345 = vmatmul.f32.gmra.mxu0 %v3162
    %v3346 = vpop.f32.mrf.mxu0
    %v3347 = vadd.f32 %v3234, %v3346
    %3348 = vmatmul.f32.gmra.mxu0 %v3163
    %v3349 = vpop.f32.mrf.mxu0
    %v3350 = vadd.f32 %v3234, %v3349
    %3351 = vmatmul.f32.gmra.mxu0 %v3164
    %v3352 = vpop.f32.mrf.mxu0
    %v3353 = vadd.f32 %v3234, %v3352
    %3354 = vdwg.mxu0
    %v3355 = vmul.f32 %v3257, 0.5
    %v3356 = vmul.f32 %v3286, 0.5
    %v3357 = vmul.f32 %v3315, 0.5
    %v3358 = vmul.f32 %v3344, 0.5
    %v3359 = vmul.f32 %v3260, 0.5
    %v3360 = vmul.f32 %v3289, 0.5
    %v3361 = vmul.f32 %v3318, 0.5
    %v3362 = vmul.f32 %v3347, 0.5
    %v3363 = vmul.f32 %v3263, 0.5
    %v3364 = vmul.f32 %v3292, 0.5
    %v3365 = vmul.f32 %v3321, 0.5
    %v3366 = vmul.f32 %v3350, 0.5
    %v3367 = vmul.f32 %v3266, 0.5
    %v3368 = vmul.f32 %v3295, 0.5
    %v3369 = vmul.f32 %v3324, 0.5
    %v3370 = vmul.f32 %v3353, 0.5
    %v3371 = vmul.f32 %v3257, %v3257
    %v3372 = vmul.f32 %v3286, %v3286
    %v3373 = vmul.f32 %v3315, %v3315
    %v3374 = vmul.f32 %v3344, %v3344
    %v3375 = vmul.f32 %v3260, %v3260
    %v3376 = vmul.f32 %v3289, %v3289
    %v3377 = vmul.f32 %v3318, %v3318
    %v3378 = vmul.f32 %v3347, %v3347
    %v3379 = vmul.f32 %v3263, %v3263
    %v3380 = vmul.f32 %v3292, %v3292
    %v3381 = vmul.f32 %v3321, %v3321
    %v3382 = vmul.f32 %v3350, %v3350
    %v3383 = vmul.f32 %v3266, %v3266
    %v3384 = vmul.f32 %v3295, %v3295
    %v3385 = vmul.f32 %v3324, %v3324
    %v3386 = vmul.f32 %v3353, %v3353
    %v3387 = vmul.f32 %v3371, %v3257
    %v3388 = vmul.f32 %v3372, %v3286
    %v3389 = vmul.f32 %v3373, %v3315
    %v3390 = vmul.f32 %v3374, %v3344
    %v3391 = vmul.f32 %v3375, %v3260
    %v3392 = vmul.f32 %v3376, %v3289
    %v3393 = vmul.f32 %v3377, %v3318
    %v3394 = vmul.f32 %v3378, %v3347
    %v3395 = vmul.f32 %v3379, %v3263
    %v3396 = vmul.f32 %v3380, %v3292
    %v3397 = vmul.f32 %v3381, %v3321
    %v3398 = vmul.f32 %v3382, %v3350
    %v3399 = vmul.f32 %v3383, %v3266
    %v3400 = vmul.f32 %v3384, %v3295
    %v3401 = vmul.f32 %v3385, %v3324
    %v3402 = vmul.f32 %v3386, %v3353
    %v3403 = vmul.f32 %v3387, 0.044715
    %v3404 = vmul.f32 %v3388, 0.044715
    %v3405 = vmul.f32 %v3389, 0.044715
    %v3406 = vmul.f32 %v3390, 0.044715
    %v3407 = vmul.f32 %v3391, 0.044715
    %v3408 = vmul.f32 %v3392, 0.044715
    %v3409 = vmul.f32 %v3393, 0.044715
    %v3410 = vmul.f32 %v3394, 0.044715
    %v3411 = vmul.f32 %v3395, 0.044715
    %v3412 = vmul.f32 %v3396, 0.044715
    %v3413 = vmul.f32 %v3397, 0.044715
    %v3414 = vmul.f32 %v3398, 0.044715
    %v3415 = vmul.f32 %v3399, 0.044715
    %v3416 = vmul.f32 %v3400, 0.044715
    %v3417 = vmul.f32 %v3401, 0.044715
    %v3418 = vmul.f32 %v3402, 0.044715
    %v3419 = vadd.f32 %v3257, %v3403
    %v3420 = vadd.f32 %v3286, %v3404
    %v3421 = vadd.f32 %v3315, %v3405
    %v3422 = vadd.f32 %v3344, %v3406
    %v3423 = vadd.f32 %v3260, %v3407
    %v3424 = vadd.f32 %v3289, %v3408
    %v3425 = vadd.f32 %v3318, %v3409
    %v3426 = vadd.f32 %v3347, %v3410
    %v3427 = vadd.f32 %v3263, %v3411
    %v3428 = vadd.f32 %v3292, %v3412
    %v3429 = vadd.f32 %v3321, %v3413
    %v3430 = vadd.f32 %v3350, %v3414
    %v3431 = vadd.f32 %v3266, %v3415
    %v3432 = vadd.f32 %v3295, %v3416
    %v3433 = vadd.f32 %v3324, %v3417
    %v3434 = vadd.f32 %v3353, %v3418
    %v3435 = vmul.f32 %v3419, 0.7978846
    %v3436 = vmul.f32 %v3420, 0.7978846
    %v3437 = vmul.f32 %v3421, 0.7978846
    %v3438 = vmul.f32 %v3422, 0.7978846
    %v3439 = vmul.f32 %v3423, 0.7978846
    %v3440 = vmul.f32 %v3424, 0.7978846
    %v3441 = vmul.f32 %v3425, 0.7978846
    %v3442 = vmul.f32 %v3426, 0.7978846
    %v3443 = vmul.f32 %v3427, 0.7978846
    %v3444 = vmul.f32 %v3428, 0.7978846
    %v3445 = vmul.f32 %v3429, 0.7978846
    %v3446 = vmul.f32 %v3430, 0.7978846
    %v3447 = vmul.f32 %v3431, 0.7978846
    %v3448 = vmul.f32 %v3432, 0.7978846
    %v3449 = vmul.f32 %v3433, 0.7978846
    %v3450 = vmul.f32 %v3434, 0.7978846
    %v3451 = vtanh.pop %v3435
    %v3452 = vtanh.pop %v3436
    %v3453 = vtanh.pop %v3437
    %v3454 = vtanh.pop %v3438
    %v3455 = vtanh.pop %v3439
    %v3456 = vtanh.pop %v3440
    %v3457 = vtanh.pop %v3441
    %v3458 = vtanh.pop %v3442
    %v3459 = vtanh.pop %v3443
    %v3460 = vtanh.pop %v3444
    %v3461 = vtanh.pop %v3445
    %v3462 = vtanh.pop %v3446
    %v3463 = vtanh.pop %v3447
    %v3464 = vtanh.pop %v3448
    %v3465 = vtanh.pop %v3449
    %v3466 = vtanh.pop %v3450
    %v3467 = vadd.f32 %v3451, 1.0
    %v3468 = vadd.f32 %v3452, 1.0
    %v3469 = vadd.f32 %v3453, 1.0
    %v3470 = vadd.f32 %v3454, 1.0
    %v3471 = vadd.f32 %v3455, 1.0
    %v3472 = vadd.f32 %v3456, 1.0
    %v3473 = vadd.f32 %v3457, 1.0
    %v3474 = vadd.f32 %v3458, 1.0
    %v3475 = vadd.f32 %v3459, 1.0
    %v3476 = vadd.f32 %v3460, 1.0
    %v3477 = vadd.f32 %v3461, 1.0
    %v3478 = vadd.f32 %v3462, 1.0
    %v3479 = vadd.f32 %v3463, 1.0
    %v3480 = vadd.f32 %v3464, 1.0
    %v3481 = vadd.f32 %v3465, 1.0
    %v3482 = vadd.f32 %v3466, 1.0
    %v3483 = vmul.f32 %v3355, %v3467
    %v3484 = vmul.f32 %v3356, %v3468
    %v3485 = vmul.f32 %v3357, %v3469
    %v3486 = vmul.f32 %v3358, %v3470
    %v3487 = vmul.f32 %v3359, %v3471
    %v3488 = vmul.f32 %v3360, %v3472
    %v3489 = vmul.f32 %v3361, %v3473
    %v3490 = vmul.f32 %v3362, %v3474
    %v3491 = vmul.f32 %v3363, %v3475
    %v3492 = vmul.f32 %v3364, %v3476
    %v3493 = vmul.f32 %v3365, %v3477
    %v3494 = vmul.f32 %v3366, %v3478
    %v3495 = vmul.f32 %v3367, %v3479
    %v3496 = vmul.f32 %v3368, %v3480
    %v3497 = vmul.f32 %v3369, %v3481
    %v3498 = vmul.f32 %v3370, %v3482
    %v3499 = vld [vmem:[#allocation13] sm:$0xff]
    %v3500 = vld [vmem:[#allocation13 + $0x8] sm:$0xff]
    %v3501 = vld [vmem:[#allocation13 + $0x10] sm:$0xff]
    %v3502 = vld [vmem:[#allocation13 + $0x18] sm:$0xff]
    %v3503 = vld [vmem:[#allocation13 + $0x20] sm:$0xff]
    %v3504 = vld [vmem:[#allocation13 + $0x28] sm:$0xff]
    %v3505 = vld [vmem:[#allocation13 + $0x30] sm:$0xff]
    %v3506 = vld [vmem:[#allocation13 + $0x38] sm:$0xff]
    %v3507 = vld [vmem:[#allocation13 + $0x40] sm:$0xff]
    %v3508 = vld [vmem:[#allocation13 + $0x48] sm:$0xff]
    %v3509 = vld [vmem:[#allocation13 + $0x50] sm:$0xff]
    %v3510 = vld [vmem:[#allocation13 + $0x58] sm:$0xff]
    %v3511 = vld [vmem:[#allocation13 + $0x60] sm:$0xff]
    %v3512 = vld [vmem:[#allocation13 + $0x68] sm:$0xff]
    %v3513 = vld [vmem:[#allocation13 + $0x70] sm:$0xff]
    %v3514 = vld [vmem:[#allocation13 + $0x78] sm:$0xff]
    %v3515 = vld [vmem:[#allocation13 + $0x80] sm:$0xff]
    %v3516 = vld [vmem:[#allocation13 + $0x88] sm:$0xff]
    %v3517 = vld [vmem:[#allocation13 + $0x90] sm:$0xff]
    %v3518 = vld [vmem:[#allocation13 + $0x98] sm:$0xff]
    %v3519 = vld [vmem:[#allocation13 + $0xa0] sm:$0xff]
    %v3520 = vld [vmem:[#allocation13 + $0xa8] sm:$0xff]
    %v3521 = vld [vmem:[#allocation13 + $0xb0] sm:$0xff]
    %v3522 = vld [vmem:[#allocation13 + $0xb8] sm:$0xff]
    %v3523 = vld [vmem:[#allocation13 + $0xc0] sm:$0xff]
    %v3524 = vld [vmem:[#allocation13 + $0xc8] sm:$0xff]
    %v3525 = vld [vmem:[#allocation13 + $0xd0] sm:$0xff]
    %v3526 = vld [vmem:[#allocation13 + $0xd8] sm:$0xff]
    %v3527 = vld [vmem:[#allocation13 + $0xe0] sm:$0xff]
    %v3528 = vld [vmem:[#allocation13 + $0xe8] sm:$0xff]
    %v3529 = vld [vmem:[#allocation13 + $0xf0] sm:$0xff]
    %v3530 = vld [vmem:[#allocation13 + $0xf8] sm:$0xff]
    %v3531 = vld [vmem:[#allocation13 + $0x100] sm:$0xff]
    %v3532 = vld [vmem:[#allocation13 + $0x108] sm:$0xff]
    %v3533 = vld [vmem:[#allocation13 + $0x110] sm:$0xff]
    %v3534 = vld [vmem:[#allocation13 + $0x118] sm:$0xff]
    %v3535 = vld [vmem:[#allocation13 + $0x120] sm:$0xff]
    %v3536 = vld [vmem:[#allocation13 + $0x128] sm:$0xff]
    %v3537 = vld [vmem:[#allocation13 + $0x130] sm:$0xff]
    %v3538 = vld [vmem:[#allocation13 + $0x138] sm:$0xff]
    %v3539 = vld [vmem:[#allocation13 + $0x140] sm:$0xff]
    %v3540 = vld [vmem:[#allocation13 + $0x148] sm:$0xff]
    %v3541 = vld [vmem:[#allocation13 + $0x150] sm:$0xff]
    %v3542 = vld [vmem:[#allocation13 + $0x158] sm:$0xff]
    %v3543 = vld [vmem:[#allocation13 + $0x160] sm:$0xff]
    %v3544 = vld [vmem:[#allocation13 + $0x168] sm:$0xff]
    %v3545 = vld [vmem:[#allocation13 + $0x170] sm:$0xff]
    %v3546 = vld [vmem:[#allocation13 + $0x178] sm:$0xff]
    %v3547 = vld [vmem:[#allocation13 + $0x180] sm:$0xff]
    %v3548 = vld [vmem:[#allocation13 + $0x188] sm:$0xff]
    %v3549 = vld [vmem:[#allocation13 + $0x190] sm:$0xff]
    %v3550 = vld [vmem:[#allocation13 + $0x198] sm:$0xff]
    %v3551 = vld [vmem:[#allocation13 + $0x1a0] sm:$0xff]
    %v3552 = vld [vmem:[#allocation13 + $0x1a8] sm:$0xff]
    %v3553 = vld [vmem:[#allocation13 + $0x1b0] sm:$0xff]
    %v3554 = vld [vmem:[#allocation13 + $0x1b8] sm:$0xff]
    %v3555 = vld [vmem:[#allocation13 + $0x1c0] sm:$0xff]
    %v3556 = vld [vmem:[#allocation13 + $0x1c8] sm:$0xff]
    %v3557 = vld [vmem:[#allocation13 + $0x1d0] sm:$0xff]
    %v3558 = vld [vmem:[#allocation13 + $0x1d8] sm:$0xff]
    %v3559 = vld [vmem:[#allocation13 + $0x1e0] sm:$0xff]
    %v3560 = vld [vmem:[#allocation13 + $0x1e8] sm:$0xff]
    %v3561 = vld [vmem:[#allocation13 + $0x1f0] sm:$0xff]
    %v3562 = vld [vmem:[#allocation13 + $0x1f8] sm:$0xff]
    %v3563 = vld [vmem:[%s20] sm:$0x1]
    %v3565 = vperm.slane %v3563, 0
    %3567 = vmatpush.msra.mxu0 %v3514
    %3568 = vmatpush.msra.mxu0 %v3513
    %3569 = vmatpush.msra.mxu0 %v3512
    %3570 = vmatpush.msra.mxu0 %v3511
    %3571 = vmatpush.msra.mxu0 %v3510
    %3572 = vmatpush.msra.mxu0 %v3509
    %3573 = vmatpush.msra.mxu0 %v3508
    %3574 = vmatpush.msra.mxu0 %v3507
    %3575 = vmatpush.msra.mxu0 %v3506
    %3576 = vmatpush.msra.mxu0 %v3505
    %3577 = vmatpush.msra.mxu0 %v3504
    %3578 = vmatpush.msra.mxu0 %v3503
    %3579 = vmatpush.msra.mxu0 %v3502
    %3580 = vmatpush.msra.mxu0 %v3501
    %3581 = vmatpush.msra.mxu0 %v3500
    %3582 = vmatpush.msra.mxu0 %v3499
    %3583 = vmatmul.f32.gmra.mxu0 %v3483
    %v3584 = vpop.f32.mrf.mxu0
    %v3585 = vadd.f32 %v3565, %v3584
    %3586 = vmatmul.f32.gmra.mxu0 %v3487
    %v3587 = vpop.f32.mrf.mxu0
    %v3588 = vadd.f32 %v3565, %v3587
    %3589 = vmatmul.f32.gmra.mxu0 %v3491
    %v3590 = vpop.f32.mrf.mxu0
    %v3591 = vadd.f32 %v3565, %v3590
    %3592 = vmatmul.f32.gmra.mxu0 %v3495
    %v3593 = vpop.f32.mrf.mxu0
    %v3594 = vadd.f32 %v3565, %v3593
    %3595 = vdwg.mxu0
    %3596 = vmatpush.msra.mxu0 %v3530
    %3597 = vmatpush.msra.mxu0 %v3529
    %3598 = vmatpush.msra.mxu0 %v3528
    %3599 = vmatpush.msra.mxu0 %v3527
    %3600 = vmatpush.msra.mxu0 %v3526
    %3601 = vmatpush.msra.mxu0 %v3525
    %3602 = vmatpush.msra.mxu0 %v3524
    %3603 = vmatpush.msra.mxu0 %v3523
    %3604 = vmatpush.msra.mxu0 %v3522
    %3605 = vmatpush.msra.mxu0 %v3521
    %3606 = vmatpush.msra.mxu0 %v3520
    %3607 = vmatpush.msra.mxu0 %v3519
    %3608 = vmatpush.msra.mxu0 %v3518
    %3609 = vmatpush.msra.mxu0 %v3517
    %3610 = vmatpush.msra.mxu0 %v3516
    %3611 = vmatpush.msra.mxu0 %v3515
    %3612 = vmatmul.f32.gmra.mxu0 %v3484
    %v3613 = vpop.f32.mrf.mxu0
    %v3614 = vadd.f32 %v3585, %v3613
    %3615 = vmatmul.f32.gmra.mxu0 %v3488
    %v3616 = vpop.f32.mrf.mxu0
    %v3617 = vadd.f32 %v3588, %v3616
    %3618 = vmatmul.f32.gmra.mxu0 %v3492
    %v3619 = vpop.f32.mrf.mxu0
    %v3620 = vadd.f32 %v3591, %v3619
    %3621 = vmatmul.f32.gmra.mxu0 %v3496
    %v3622 = vpop.f32.mrf.mxu0
    %v3623 = vadd.f32 %v3594, %v3622
    %3624 = vdwg.mxu0
    %3625 = vmatpush.msra.mxu0 %v3546
    %3626 = vmatpush.msra.mxu0 %v3545
    %3627 = vmatpush.msra.mxu0 %v3544
    %3628 = vmatpush.msra.mxu0 %v3543
    %3629 = vmatpush.msra.mxu0 %v3542
    %3630 = vmatpush.msra.mxu0 %v3541
    %3631 = vmatpush.msra.mxu0 %v3540
    %3632 = vmatpush.msra.mxu0 %v3539
    %3633 = vmatpush.msra.mxu0 %v3538
    %3634 = vmatpush.msra.mxu0 %v3537
    %3635 = vmatpush.msra.mxu0 %v3536
    %3636 = vmatpush.msra.mxu0 %v3535
    %3637 = vmatpush.msra.mxu0 %v3534
    %3638 = vmatpush.msra.mxu0 %v3533
    %3639 = vmatpush.msra.mxu0 %v3532
    %3640 = vmatpush.msra.mxu0 %v3531
    %3641 = vmatmul.f32.gmra.mxu0 %v3485
    %v3642 = vpop.f32.mrf.mxu0
    %v3643 = vadd.f32 %v3614, %v3642
    %3644 = vmatmul.f32.gmra.mxu0 %v3489
    %v3645 = vpop.f32.mrf.mxu0
    %v3646 = vadd.f32 %v3617, %v3645
    %3647 = vmatmul.f32.gmra.mxu0 %v3493
    %v3648 = vpop.f32.mrf.mxu0
    %v3649 = vadd.f32 %v3620, %v3648
    %3650 = vmatmul.f32.gmra.mxu0 %v3497
    %v3651 = vpop.f32.mrf.mxu0
    %v3652 = vadd.f32 %v3623, %v3651
    %3653 = vdwg.mxu0
    %3654 = vmatpush.msra.mxu0 %v3562
    %3655 = vmatpush.msra.mxu0 %v3561
    %3656 = vmatpush.msra.mxu0 %v3560
    %3657 = vmatpush.msra.mxu0 %v3559
    %3658 = vmatpush.msra.mxu0 %v3558
    %3659 = vmatpush.msra.mxu0 %v3557
    %3660 = vmatpush.msra.mxu0 %v3556
    %3661 = vmatpush.msra.mxu0 %v3555
    %3662 = vmatpush.msra.mxu0 %v3554
    %3663 = vmatpush.msra.mxu0 %v3553
    %3664 = vmatpush.msra.mxu0 %v3552
    %3665 = vmatpush.msra.mxu0 %v3551
    %3666 = vmatpush.msra.mxu0 %v3550
    %3667 = vmatpush.msra.mxu0 %v3549
    %3668 = vmatpush.msra.mxu0 %v3548
    %3669 = vmatpush.msra.mxu0 %v3547
    %3670 = vmatmul.f32.gmra.mxu0 %v3486
    %v3671 = vpop.f32.mrf.mxu0
    %v3672 = vadd.f32 %v3643, %v3671
    %3673 = vmatmul.f32.gmra.mxu0 %v3490
    %v3674 = vpop.f32.mrf.mxu0
    %v3675 = vadd.f32 %v3646, %v3674
    %3676 = vmatmul.f32.gmra.mxu0 %v3494
    %v3677 = vpop.f32.mrf.mxu0
    %v3678 = vadd.f32 %v3649, %v3677
    %3679 = vmatmul.f32.gmra.mxu0 %v3498
    %v3680 = vpop.f32.mrf.mxu0
    %v3681 = vadd.f32 %v3652, %v3680
    %3682 = vdwg.mxu0
    %v3683 = vadd.f32 %v3058, %v3672
    %v3684 = vadd.f32 %v3059, %v3675
    %v3685 = vadd.f32 %v3060, %v3678
    %v3686 = vadd.f32 %v3061, %v3681
    %v3687 = vld [vmem:[%s3] sm:$0xff]
    %v3688 = vld [vmem:[%s3 + $0x8] sm:$0xff]
    %v3689 = vld [vmem:[%s3 + $0x10] sm:$0xff]
    %v3690 = vld [vmem:[%s3 + $0x18] sm:$0xff]
    %3692 = vset.pattern.permute.xlu0 0
    %3693 = vperm.xlu0 %3692, %v3687
    %v3694 = vpop.permute.xlu0 %3693
    %3697 = vset.pattern.permute.xlu0 0
    %3698 = vperm.xlu0 %3697, %v3688
    %v3699 = vpop.permute.xlu0 %3698
    %3702 = vset.pattern.permute.xlu0 0
    %3703 = vperm.xlu0 %3702, %v3689
    %v3704 = vpop.permute.xlu0 %3703
    %3707 = vset.pattern.permute.xlu0 0
    %3708 = vperm.xlu0 %3707, %v3690
    %v3709 = vpop.permute.xlu0 %3708
    %v3711 = vmul.f32 %v3683, %v3694
    %v3712 = vmul.f32 %v3684, %v3699
    %v3713 = vmul.f32 %v3685, %v3704
    %v3714 = vmul.f32 %v3686, %v3709
    %3715 = vst [vmem:[#allocation14] sm:$0xff] %v3711
    %3716 = vst [vmem:[#allocation14 + $0x8] sm:$0xff] %v3712
    %3717 = vst [vmem:[#allocation14 + $0x10] sm:$0xff] %v3713
    %3718 = vst [vmem:[#allocation14 + $0x18] sm:$0xff] %v3714
    // Predicated region
    $region114: #{tpu_custom_call.1} parent=1 // pred_check
      _
    $region115: #{tpu_custom_call.1} parent=1 // pred_check_branch
      %3720 = sbr.rel (0) target = $region117
    $region116: #{tpu_custom_call.1} parent=1 // pred_region
      %3722 = vsyncadd [#allocation4], 0
      %s3723 = sshll.u32 [#allocation14], 4
      %s3724 = int_to_ptr.vmem [resolvable:$true] %s3723
      %s3725 = sshll.u32 %s21, 4
      %s3726 = int_to_ptr.hbm [resolvable:$true] %s3725
      %3731 = dma.vmem_to_hbm [thread:$0]  %s3724, 512, %s3726, [#allocation4], 128, 128, 8
    $region117: #{tpu_custom_call.1} parent=1 // pred_fallthru
      _
    // Predicated region
    $region118: #{tpu_custom_call.1} parent=1 // pred_check
      _
    $region119: #{tpu_custom_call.1} parent=1 // pred_check_branch
      %3733 = sbr.rel (0) target = $region121
    $region120: #{tpu_custom_call.1} parent=1 // pred_region
      %3735 = dma.done [#allocation4], 512
    $region121: #{tpu_custom_call.1} parent=1 // pred_fallthru
      _
    %3736 = vsyncpa [#allocation3], 1
    %3737 = vsyncpa [#allocation6], 1
    %3738 = vsyncpa [#allocation9], 1
    %3739 = vsyncpa [#allocation12], 1
    %3740 = vsyncpa [#allocation4], 1

</llo_original>
